<compile_context>
chip_gen: v5e
topology: v5e:2x2
jax: 0.10.0
libtpu: 0.0.40
codegen_flags: <defaults>
</compile_context>

<pallas_src>
import jax
import jax.numpy as jnp
from jax.experimental import pallas as pl
from jax.experimental.pallas import tpu as pltpu

_CONV_TILE_M = 512            # pooled-output rows per grid step (multiple of 8)
_FC_TILE_B = 256              # batch rows per grid step (multiple of 8)
_VMEM_LIMIT = 32 * 1024 * 1024


def _compiler_params():
    return pltpu.CompilerParams(
        dimension_semantics=("parallel",),
        vmem_limit_bytes=_VMEM_LIMIT,
    )


# ---------------------------------------------------------------------------
# Pallas kernels
# ---------------------------------------------------------------------------
def _conv_relu_pool_kernel(a_ref, w_ref, b_ref, o_ref):
    """a_ref: [4, TM, K] bf16 (one slab per 2x2 pool corner), w_ref: [K, N] bf16,
    b_ref: [1, N] f32, o_ref: [TM, N].  Computes max over the 4 corners of
    relu(a[c] @ w + b), i.e. conv + bias + ReLU with the 2x2 max-pool fused
    into the epilogue, so the un-pooled feature map never touches HBM."""
    w = w_ref[...]
    b = b_ref[...]

    def corner(c):
        acc = jnp.dot(a_ref[c], w, preferred_element_type=jnp.float32)
        return jnp.maximum(acc + b, 0.0)          # bias + ReLU in f32

    m = jnp.maximum(jnp.maximum(corner(0), corner(1)),
                    jnp.maximum(corner(2), corner(3)))
    o_ref[...] = m.astype(o_ref.dtype)


def _fc_fused_kernel(x_ref, w1_ref, b1_ref, w2_ref, b2_ref, o_ref):
    """relu(x @ w1 + b1) @ w2 + b2; both matmuls in one kernel so the [TB, 128]
    intermediate never round-trips through HBM."""
    h = jnp.dot(x_ref[...], w1_ref[...], preferred_element_type=jnp.float32)
    h = jnp.maximum(h + b1_ref[...], 0.0)
    y = jnp.dot(h.astype(w2_ref.dtype), w2_ref[...],
                preferred_element_type=jnp.float32)
    o_ref[...] = (y + b2_ref[...]).astype(o_ref.dtype)


# ---------------------------------------------------------------------------
# pallas_call wrappers
# ---------------------------------------------------------------------------
def conv3x3_relu_pool(patches, w, b, out_dtype=jnp.bfloat16):
    """patches: [4, Mp, K] (pool-corner slabs), w: [K, N], b: [1, N]
    -> pooled conv output [Mp, N]."""
    _, Mp, K = patches.shape
    N = w.shape[1]
    tm = Mp if Mp <= _CONV_TILE_M else _CONV_TILE_M   # full-dim block or 8-aligned tile
    return pl.pallas_call(
        _conv_relu_pool_kernel,
        out_shape=jax.ShapeDtypeStruct((Mp, N), out_dtype),
        grid=(pl.cdiv(Mp, tm),),
        in_specs=[
            pl.BlockSpec((4, tm, K), lambda i: (0, i, 0)),
            pl.BlockSpec((K, N), lambda i: (0, 0)),
            pl.BlockSpec((1, N), lambda i: (0, 0)),
        ],
        out_specs=pl.BlockSpec((tm, N), lambda i: (i, 0)),
        compiler_params=_compiler_params(),
    )(patches, w, b)


def fc1_relu_fc2(x, w1, b1, w2, b2):
    """x: [B, K], w1: [K, N1], w2: [N1, N2] -> [B, N2] f32."""
    B, K = x.shape
    N1 = w1.shape[1]
    N2 = w2.shape[1]
    tb = B if B <= _FC_TILE_B else _FC_TILE_B
    return pl.pallas_call(
        _fc_fused_kernel,
        out_shape=jax.ShapeDtypeStruct((B, N2), jnp.float32),
        grid=(pl.cdiv(B, tb),),
        in_specs=[
            pl.BlockSpec((tb, K), lambda i: (i, 0)),
            pl.BlockSpec((K, N1), lambda i: (0, 0)),
            pl.BlockSpec((1, N1), lambda i: (0, 0)),
            pl.BlockSpec((N1, N2), lambda i: (0, 0)),
            pl.BlockSpec((1, N2), lambda i: (0, 0)),
        ],
        out_specs=pl.BlockSpec((tb, N2), lambda i: (i, 0)),
        compiler_params=_compiler_params(),
    )(x, w1, b1, w2, b2)


# ---------------------------------------------------------------------------
# XLA-side glue (cheap, no HBM K-pads, no per-step weight transposes)
# ---------------------------------------------------------------------------
def _im2col_pool_corners(x):
    """x: [B, H, W, C] (H, W even) -> [4, B*(H//2)*(W//2), 9*C].
    Slab c = py*2+px holds the 3x3 (pad=1) patches of the conv-output pixels
    that are the (py, px) corner of each 2x2 pool window; feature order inside
    a patch is (kh, kw, cin), matching the packed conv weights."""
    B, H, W, C = x.shape
    assert H % 2 == 0 and W % 2 == 0, "2x2 max-pool needs even spatial dims"
    Ho, Wo = H // 2, W // 2
    xp = jnp.pad(x, ((0, 0), (1, 1), (1, 1), (0, 0)))
    cols = [xp[:, dy:dy + H, dx:dx + W, :] for dy in range(3) for dx in range(3)]
    p = jnp.concatenate(cols, axis=-1)                  # [B, H, W, 9C]
    p = p.reshape(B, Ho, 2, Wo, 2, 9 * C)
    p = jnp.transpose(p, (2, 4, 0, 1, 3, 5))            # [2, 2, B, Ho, Wo, 9C]
    return p.reshape(4, B * Ho * Wo, 9 * C)


# ---------------------------------------------------------------------------
# Parameters (PyTorch layout) + one-time kernel-ready repacking
# ---------------------------------------------------------------------------
def init_params(key):
    ks = jax.random.split(key, 8)
    n = lambda k, s: 0.05 * jax.random.normal(k, s, jnp.float32)
    return {
        "conv1_w": n(ks[0], (32, 1, 3, 3)),   "conv1_b": n(ks[1], (32,)),
        "conv2_w": n(ks[2], (64, 32, 3, 3)),  "conv2_b": n(ks[3], (64,)),
        "fc1_w":   n(ks[4], (128, 64 * 7 * 7)), "fc1_b": n(ks[5], (128,)),
        "fc2_w":   n(ks[6], (10, 128)),        "fc2_b": n(ks[7], (10,)),
    }


def pack_params(p):
    """One-time repack of PyTorch-layout weights into kernel-ready layouts
    (done once, outside the jitted forward: no per-step transposes or pads)."""
    def conv_pack(w):                                   # [Co,Ci,3,3] -> [9*Ci, Co]
        co = w.shape[0]
        return jnp.transpose(w, (2, 3, 1, 0)).reshape(-1, co)   # (kh,kw,cin) rows

    # fc1 columns re-permuted from PyTorch's (c,h,w) flatten order to the
    # (h,w,c) order produced by the NHWC conv pipeline -> no runtime transpose.
    fc1 = p["fc1_w"].reshape(128, 64, 7, 7)             # [n, c, h, w]
    fc1 = jnp.transpose(fc1, (2, 3, 1, 0)).reshape(64 * 7 * 7, 128)

    # fc2 pre-transposed and zero-padded to N=128 for a lane-dense store; the
    # real 10 logits are sliced out in the forward pass.
    fc2 = jnp.pad(p["fc2_w"].T, ((0, 0), (0, 128 - 10)))
    fc2_b = jnp.pad(p["fc2_b"], (0, 128 - 10))

    f32, bf16 = jnp.float32, jnp.bfloat16
    return {
        "conv1_w": conv_pack(p["conv1_w"]).astype(bf16),
        "conv1_b": p["conv1_b"].reshape(1, -1).astype(f32),
        "conv2_w": conv_pack(p["conv2_w"]).astype(bf16),
        "conv2_b": p["conv2_b"].reshape(1, -1).astype(f32),
        "fc1_w": fc1.astype(bf16),
        "fc1_b": p["fc1_b"].reshape(1, -1).astype(f32),
        "fc2_w": fc2.astype(bf16),
        "fc2_b": fc2_b.reshape(1, -1).astype(f32),
    }


# ---------------------------------------------------------------------------
# Forward pass (matches PyTorch SimpleCNN.forward semantics)
# ---------------------------------------------------------------------------
@jax.jit
def simple_cnn_forward(packed, x_nchw):
    """x_nchw: [B, 1, 28, 28] (PyTorch NCHW) -> logits [B, 10] f32."""
    B = x_nchw.shape[0]
    # C=1, so NCHW -> NHWC is a pure reshape (no transpose).
    x = x_nchw.reshape(B, 28, 28, 1).astype(jnp.bfloat16)

    p1 = _im2col_pool_corners(x)                                      # [4, B*196, 9]
    a1 = conv3x3_relu_pool(p1, packed["conv1_w"], packed["conv1_b"])  # [B*196, 32]
    a1 = a1.reshape(B, 14, 14, 32)

    p2 = _im2col_pool_corners(a1)                                     # [4, B*49, 288]
    a2 = conv3x3_relu_pool(p2, packed["conv2_w"], packed["conv2_b"])  # [B*49, 64]

    # [B*49, 64] -> [B, 3136] in (h, w, c) order; fc1_w was packed to match, so
    # PyTorch's x.view(-1, 64*7*7) (NCHW flatten) semantics are preserved
    # without any runtime transpose.
    xf = a2.reshape(B, 64 * 7 * 7)

    logits = fc1_relu_fc2(xf, packed["fc1_w"], packed["fc1_b"],
                          packed["fc2_w"], packed["fc2_b"])           # [B, 128]
    return logits[:, :10]


if __name__ == "__main__":
    key = jax.random.PRNGKey(0)
    pkey, xkey = jax.random.split(key)
    params = init_params(pkey)
    packed = pack_params(params)            # one-time weight repack
    # 28x28 spatial size is implied by fc1's 64*7*7 input dimension.
    x = jax.random.normal(xkey, (2, 1, 28, 28), jnp.float32)
    out = simple_cnn_forward(packed, x)
    out = jax.block_until_ready(out)
    assert out.shape == (2, 10) and out.dtype == jnp.float32
    assert bool(jnp.all(jnp.isfinite(out)))
    print("KERNEL_OK")
</pallas_src>

<mosaic_0001>
module attributes {stable_mosaic.version = 11 : i64} {
  func.func @_conv_relu_pool_kernel(%arg0: i32, %arg1: memref<4x392x9xbf16, #tpu.memory_space<vmem>>, %arg2: memref<9x32xbf16, #tpu.memory_space<vmem>>, %arg3: memref<1x32xf32, #tpu.memory_space<vmem>>, %arg4: memref<392x32xbf16, #tpu.memory_space<vmem>>) attributes {dimension_semantics = [#tpu.dimension_semantics<parallel>], iteration_bounds = array<i64: 1>, scalar_prefetch = 0 : i64, scratch_operands = 0 : i64, tpu.core_type = #tpu.core_type<tc>, window_params = [{transform_indices = @transform_0, window_bounds = array<i64: 4, 392, 9>}, {pipeline_mode = #tpu.pipeline_mode<synchronous>, transform_indices = @transform_1, window_bounds = array<i64: 9, 32>}, {pipeline_mode = #tpu.pipeline_mode<synchronous>, transform_indices = @transform_2, window_bounds = array<i64: 1, 32>}, {transform_indices = @transform_3, window_bounds = array<i64: 392, 32>}]} {
    %c0 = arith.constant 0 : index
    %c0_0 = arith.constant 0 : index
    %0 = vector.load %arg2[%c0, %c0_0] : memref<9x32xbf16, #tpu.memory_space<vmem>>, vector<9x32xbf16>
    %c0_1 = arith.constant 0 : index
    %c0_2 = arith.constant 0 : index
    %1 = vector.load %arg3[%c0_1, %c0_2] : memref<1x32xf32, #tpu.memory_space<vmem>>, vector<1x32xf32>
    %c0_3 = arith.constant 0 : index
    %c0_4 = arith.constant 0 : index
    %c0_5 = arith.constant 0 : index
    %2 = vector.load %arg1[%c0_3, %c0_4, %c0_5] : memref<4x392x9xbf16, #tpu.memory_space<vmem>>, vector<1x392x9xbf16>
    %3 = vector.shape_cast %2 : vector<1x392x9xbf16> to vector<392x9xbf16>
    %cst = arith.constant dense<0.000000e+00> : vector<392x32xf32>
    %4 = tpu.matmul %3, %0, %cst {dimension_numbers = #tpu.dot_dimension_numbers<[1], [0], [0], [1], [0, 0, 1, 1], [], []>} : vector<392x9xbf16>, vector<9x32xbf16>, vector<392x32xf32> -> vector<392x32xf32>
    %5 = vector.broadcast %1 : vector<1x32xf32> to vector<392x32xf32>
    %6 = arith.addf %4, %5 : vector<392x32xf32>
    %cst_6 = arith.constant 0.000000e+00 : f32
    %7 = vector.broadcast %cst_6 : f32 to vector<392x32xf32>
    %8 = arith.maximumf %6, %7 : vector<392x32xf32>
    %c1 = arith.constant 1 : index
    %c0_7 = arith.constant 0 : index
    %c0_8 = arith.constant 0 : index
    %9 = vector.load %arg1[%c1, %c0_7, %c0_8] : memref<4x392x9xbf16, #tpu.memory_space<vmem>>, vector<1x392x9xbf16>
    %10 = vector.shape_cast %9 : vector<1x392x9xbf16> to vector<392x9xbf16>
    %cst_9 = arith.constant dense<0.000000e+00> : vector<392x32xf32>
    %11 = tpu.matmul %10, %0, %cst_9 {dimension_numbers = #tpu.dot_dimension_numbers<[1], [0], [0], [1], [0, 0, 1, 1], [], []>} : vector<392x9xbf16>, vector<9x32xbf16>, vector<392x32xf32> -> vector<392x32xf32>
    %12 = vector.broadcast %1 : vector<1x32xf32> to vector<392x32xf32>
    %13 = arith.addf %11, %12 : vector<392x32xf32>
    %cst_10 = arith.constant 0.000000e+00 : f32
    %14 = vector.broadcast %cst_10 : f32 to vector<392x32xf32>
    %15 = arith.maximumf %13, %14 : vector<392x32xf32>
    %16 = arith.maximumf %8, %15 : vector<392x32xf32>
    %c2 = arith.constant 2 : index
    %c0_11 = arith.constant 0 : index
    %c0_12 = arith.constant 0 : index
    %17 = vector.load %arg1[%c2, %c0_11, %c0_12] : memref<4x392x9xbf16, #tpu.memory_space<vmem>>, vector<1x392x9xbf16>
    %18 = vector.shape_cast %17 : vector<1x392x9xbf16> to vector<392x9xbf16>
    %cst_13 = arith.constant dense<0.000000e+00> : vector<392x32xf32>
    %19 = tpu.matmul %18, %0, %cst_13 {dimension_numbers = #tpu.dot_dimension_numbers<[1], [0], [0], [1], [0, 0, 1, 1], [], []>} : vector<392x9xbf16>, vector<9x32xbf16>, vector<392x32xf32> -> vector<392x32xf32>
    %20 = vector.broadcast %1 : vector<1x32xf32> to vector<392x32xf32>
    %21 = arith.addf %19, %20 : vector<392x32xf32>
    %cst_14 = arith.constant 0.000000e+00 : f32
    %22 = vector.broadcast %cst_14 : f32 to vector<392x32xf32>
    %23 = arith.maximumf %21, %22 : vector<392x32xf32>
    %c3 = arith.constant 3 : index
    %c0_15 = arith.constant 0 : index
    %c0_16 = arith.constant 0 : index
    %24 = vector.load %arg1[%c3, %c0_15, %c0_16] : memref<4x392x9xbf16, #tpu.memory_space<vmem>>, vector<1x392x9xbf16>
    %25 = vector.shape_cast %24 : vector<1x392x9xbf16> to vector<392x9xbf16>
    %cst_17 = arith.constant dense<0.000000e+00> : vector<392x32xf32>
    %26 = tpu.matmul %25, %0, %cst_17 {dimension_numbers = #tpu.dot_dimension_numbers<[1], [0], [0], [1], [0, 0, 1, 1], [], []>} : vector<392x9xbf16>, vector<9x32xbf16>, vector<392x32xf32> -> vector<392x32xf32>
    %27 = vector.broadcast %1 : vector<1x32xf32> to vector<392x32xf32>
    %28 = arith.addf %26, %27 : vector<392x32xf32>
    %cst_18 = arith.constant 0.000000e+00 : f32
    %29 = vector.broadcast %cst_18 : f32 to vector<392x32xf32>
    %30 = arith.maximumf %28, %29 : vector<392x32xf32>
    %31 = arith.maximumf %23, %30 : vector<392x32xf32>
    %32 = arith.maximumf %16, %31 : vector<392x32xf32>
    %33 = arith.truncf %32 : vector<392x32xf32> to vector<392x32xbf16>
    %c0_19 = arith.constant 0 : index
    %c0_20 = arith.constant 0 : index
    %34 = vector.load %arg4[%c0_19, %c0_20] : memref<392x32xbf16, #tpu.memory_space<vmem>>, vector<392x32xbf16>
    tpu.vector_store %arg4[%c0_19, %c0_20], %33 {strides = array<i32>} : memref<392x32xbf16, #tpu.memory_space<vmem>>, vector<392x32xbf16>,
    return
  }
  func.func @transform_0(%arg0: i32) -> (i32, i32, i32) {
    %c0_i32 = arith.constant 0 : i32
    %c0_i32_0 = arith.constant 0 : i32
    %c0_i32_1 = arith.constant 0 : i32
    return %c0_i32, %arg0, %c0_i32_0 : i32, i32, i32
  }
  func.func @transform_1(%arg0: i32) -> (i32, i32) {
    %c0_i32 = arith.constant 0 : i32
    %c0_i32_0 = arith.constant 0 : i32
    %c0_i32_1 = arith.constant 0 : i32
    return %c0_i32, %c0_i32_0 : i32, i32
  }
  func.func @transform_2(%arg0: i32) -> (i32, i32) {
    %c0_i32 = arith.constant 0 : i32
    %c0_i32_0 = arith.constant 0 : i32
    %c0_i32_1 = arith.constant 0 : i32
    return %c0_i32, %c0_i32_0 : i32, i32
  }
  func.func @transform_3(%arg0: i32) -> (i32, i32) {
    %c0_i32 = arith.constant 0 : i32
    %c0_i32_0 = arith.constant 0 : i32
    return %arg0, %c0_i32 : i32, i32
  }
}

module attributes {stable_mosaic.version = 11 : i64} {
  func.func @_conv_relu_pool_kernel(%arg0: i32, %arg1: memref<4x98x288xbf16, #tpu.memory_space<vmem>>, %arg2: memref<288x64xbf16, #tpu.memory_space<vmem>>, %arg3: memref<1x64xf32, #tpu.memory_space<vmem>>, %arg4: memref<98x64xbf16, #tpu.memory_space<vmem>>) attributes {dimension_semantics = [#tpu.dimension_semantics<parallel>], iteration_bounds = array<i64: 1>, scalar_prefetch = 0 : i64, scratch_operands = 0 : i64, tpu.core_type = #tpu.core_type<tc>, window_params = [{transform_indices = @transform_0, window_bounds = array<i64: 4, 98, 288>}, {pipeline_mode = #tpu.pipeline_mode<synchronous>, transform_indices = @transform_1, window_bounds = array<i64: 288, 64>}, {pipeline_mode = #tpu.pipeline_mode<synchronous>, transform_indices = @transform_2, window_bounds = array<i64: 1, 64>}, {transform_indices = @transform_3, window_bounds = array<i64: 98, 64>}]} {
    %c0 = arith.constant 0 : index
    %c0_0 = arith.constant 0 : index
    %0 = vector.load %arg2[%c0, %c0_0] : memref<288x64xbf16, #tpu.memory_space<vmem>>, vector<288x64xbf16>
    %c0_1 = arith.constant 0 : index
    %c0_2 = arith.constant 0 : index
    %1 = vector.load %arg3[%c0_1, %c0_2] : memref<1x64xf32, #tpu.memory_space<vmem>>, vector<1x64xf32>
    %c0_3 = arith.constant 0 : index
    %c0_4 = arith.constant 0 : index
    %c0_5 = arith.constant 0 : index
    %2 = vector.load %arg1[%c0_3, %c0_4, %c0_5] : memref<4x98x288xbf16, #tpu.memory_space<vmem>>, vector<1x98x288xbf16>
    %3 = vector.shape_cast %2 : vector<1x98x288xbf16> to vector<98x288xbf16>
    %cst = arith.constant dense<0.000000e+00> : vector<98x64xf32>
    %4 = tpu.matmul %3, %0, %cst {dimension_numbers = #tpu.dot_dimension_numbers<[1], [0], [0], [1], [0, 0, 1, 1], [], []>} : vector<98x288xbf16>, vector<288x64xbf16>, vector<98x64xf32> -> vector<98x64xf32>
    %5 = vector.broadcast %1 : vector<1x64xf32> to vector<98x64xf32>
    %6 = arith.addf %4, %5 : vector<98x64xf32>
    %cst_6 = arith.constant 0.000000e+00 : f32
    %7 = vector.broadcast %cst_6 : f32 to vector<98x64xf32>
    %8 = arith.maximumf %6, %7 : vector<98x64xf32>
    %c1 = arith.constant 1 : index
    %c0_7 = arith.constant 0 : index
    %c0_8 = arith.constant 0 : index
    %9 = vector.load %arg1[%c1, %c0_7, %c0_8] : memref<4x98x288xbf16, #tpu.memory_space<vmem>>, vector<1x98x288xbf16>
    %10 = vector.shape_cast %9 : vector<1x98x288xbf16> to vector<98x288xbf16>
    %cst_9 = arith.constant dense<0.000000e+00> : vector<98x64xf32>
    %11 = tpu.matmul %10, %0, %cst_9 {dimension_numbers = #tpu.dot_dimension_numbers<[1], [0], [0], [1], [0, 0, 1, 1], [], []>} : vector<98x288xbf16>, vector<288x64xbf16>, vector<98x64xf32> -> vector<98x64xf32>
    %12 = vector.broadcast %1 : vector<1x64xf32> to vector<98x64xf32>
    %13 = arith.addf %11, %12 : vector<98x64xf32>
    %cst_10 = arith.constant 0.000000e+00 : f32
    %14 = vector.broadcast %cst_10 : f32 to vector<98x64xf32>
    %15 = arith.maximumf %13, %14 : vector<98x64xf32>
    %16 = arith.maximumf %8, %15 : vector<98x64xf32>
    %c2 = arith.constant 2 : index
    %c0_11 = arith.constant 0 : index
    %c0_12 = arith.constant 0 : index
    %17 = vector.load %arg1[%c2, %c0_11, %c0_12] : memref<4x98x288xbf16, #tpu.memory_space<vmem>>, vector<1x98x288xbf16>
    %18 = vector.shape_cast %17 : vector<1x98x288xbf16> to vector<98x288xbf16>
    %cst_13 = arith.constant dense<0.000000e+00> : vector<98x64xf32>
    %19 = tpu.matmul %18, %0, %cst_13 {dimension_numbers = #tpu.dot_dimension_numbers<[1], [0], [0], [1], [0, 0, 1, 1], [], []>} : vector<98x288xbf16>, vector<288x64xbf16>, vector<98x64xf32> -> vector<98x64xf32>
    %20 = vector.broadcast %1 : vector<1x64xf32> to vector<98x64xf32>
    %21 = arith.addf %19, %20 : vector<98x64xf32>
    %cst_14 = arith.constant 0.000000e+00 : f32
    %22 = vector.broadcast %cst_14 : f32 to vector<98x64xf32>
    %23 = arith.maximumf %21, %22 : vector<98x64xf32>
    %c3 = arith.constant 3 : index
    %c0_15 = arith.constant 0 : index
    %c0_16 = arith.constant 0 : index
    %24 = vector.load %arg1[%c3, %c0_15, %c0_16] : memref<4x98x288xbf16, #tpu.memory_space<vmem>>, vector<1x98x288xbf16>
    %25 = vector.shape_cast %24 : vector<1x98x288xbf16> to vector<98x288xbf16>
    %cst_17 = arith.constant dense<0.000000e+00> : vector<98x64xf32>
    %26 = tpu.matmul %25, %0, %cst_17 {dimension_numbers = #tpu.dot_dimension_numbers<[1], [0], [0], [1], [0, 0, 1, 1], [], []>} : vector<98x288xbf16>, vector<288x64xbf16>, vector<98x64xf32> -> vector<98x64xf32>
    %27 = vector.broadcast %1 : vector<1x64xf32> to vector<98x64xf32>
    %28 = arith.addf %26, %27 : vector<98x64xf32>
    %cst_18 = arith.constant 0.000000e+00 : f32
    %29 = vector.broadcast %cst_18 : f32 to vector<98x64xf32>
    %30 = arith.maximumf %28, %29 : vector<98x64xf32>
    %31 = arith.maximumf %23, %30 : vector<98x64xf32>
    %32 = arith.maximumf %16, %31 : vector<98x64xf32>
    %33 = arith.truncf %32 : vector<98x64xf32> to vector<98x64xbf16>
    %c0_19 = arith.constant 0 : index
    %c0_20 = arith.constant 0 : index
    %34 = vector.load %arg4[%c0_19, %c0_20] : memref<98x64xbf16, #tpu.memory_space<vmem>>, vector<98x64xbf16>
    tpu.vector_store %arg4[%c0_19, %c0_20], %33 {strides = array<i32>} : memref<98x64xbf16, #tpu.memory_space<vmem>>, vector<98x64xbf16>,
    return
  }
  func.func @transform_0(%arg0: i32) -> (i32, i32, i32) {
    %c0_i32 = arith.constant 0 : i32
    %c0_i32_0 = arith.constant 0 : i32
    %c0_i32_1 = arith.constant 0 : i32
    return %c0_i32, %arg0, %c0_i32_0 : i32, i32, i32
  }
  func.func @transform_1(%arg0: i32) -> (i32, i32) {
    %c0_i32 = arith.constant 0 : i32
    %c0_i32_0 = arith.constant 0 : i32
    %c0_i32_1 = arith.constant 0 : i32
    return %c0_i32, %c0_i32_0 : i32, i32
  }
  func.func @transform_2(%arg0: i32) -> (i32, i32) {
    %c0_i32 = arith.constant 0 : i32
    %c0_i32_0 = arith.constant 0 : i32
    %c0_i32_1 = arith.constant 0 : i32
    return %c0_i32, %c0_i32_0 : i32, i32
  }
  func.func @transform_3(%arg0: i32) -> (i32, i32) {
    %c0_i32 = arith.constant 0 : i32
    %c0_i32_0 = arith.constant 0 : i32
    return %arg0, %c0_i32 : i32, i32
  }
}

module attributes {stable_mosaic.version = 11 : i64} {
  func.func @_fc_fused_kernel(%arg0: i32, %arg1: memref<2x3136xbf16, #tpu.memory_space<vmem>>, %arg2: memref<3136x128xbf16, #tpu.memory_space<vmem>>, %arg3: memref<1x128xf32, #tpu.memory_space<vmem>>, %arg4: memref<128x128xbf16, #tpu.memory_space<vmem>>, %arg5: memref<1x128xf32, #tpu.memory_space<vmem>>, %arg6: memref<2x128xf32, #tpu.memory_space<vmem>>) attributes {dimension_semantics = [#tpu.dimension_semantics<parallel>], iteration_bounds = array<i64: 1>, scalar_prefetch = 0 : i64, scratch_operands = 0 : i64, tpu.core_type = #tpu.core_type<tc>, window_params = [{transform_indices = @transform_0, window_bounds = array<i64: 2, 3136>}, {pipeline_mode = #tpu.pipeline_mode<synchronous>, transform_indices = @transform_1, window_bounds = array<i64: 3136, 128>}, {pipeline_mode = #tpu.pipeline_mode<synchronous>, transform_indices = @transform_2, window_bounds = array<i64: 1, 128>}, {pipeline_mode = #tpu.pipeline_mode<synchronous>, transform_indices = @transform_3, window_bounds = array<i64: 128, 128>}, {pipeline_mode = #tpu.pipeline_mode<synchronous>, transform_indices = @transform_4, window_bounds = array<i64: 1, 128>}, {transform_indices = @transform_5, window_bounds = array<i64: 2, 128>}]} {
    %c0 = arith.constant 0 : index
    %c0_0 = arith.constant 0 : index
    %0 = vector.load %arg1[%c0, %c0_0] : memref<2x3136xbf16, #tpu.memory_space<vmem>>, vector<2x3136xbf16>
    %c0_1 = arith.constant 0 : index
    %c0_2 = arith.constant 0 : index
    %1 = vector.load %arg2[%c0_1, %c0_2] : memref<3136x128xbf16, #tpu.memory_space<vmem>>, vector<3136x128xbf16>
    %cst = arith.constant dense<0.000000e+00> : vector<2x128xf32>
    %2 = tpu.matmul %0, %1, %cst {dimension_numbers = #tpu.dot_dimension_numbers<[1], [0], [0], [1], [0, 0, 1, 1], [], []>} : vector<2x3136xbf16>, vector<3136x128xbf16>, vector<2x128xf32> -> vector<2x128xf32>
    %c0_3 = arith.constant 0 : index
    %c0_4 = arith.constant 0 : index
    %3 = vector.load %arg3[%c0_3, %c0_4] : memref<1x128xf32, #tpu.memory_space<vmem>>, vector<1x128xf32>
    %4 = vector.broadcast %3 : vector<1x128xf32> to vector<2x128xf32>
    %5 = arith.addf %2, %4 : vector<2x128xf32>
    %cst_5 = arith.constant 0.000000e+00 : f32
    %6 = vector.broadcast %cst_5 : f32 to vector<2x128xf32>
    %7 = arith.maximumf %5, %6 : vector<2x128xf32>
    %8 = arith.truncf %7 : vector<2x128xf32> to vector<2x128xbf16>
    %c0_6 = arith.constant 0 : index
    %c0_7 = arith.constant 0 : index
    %9 = vector.load %arg4[%c0_6, %c0_7] : memref<128x128xbf16, #tpu.memory_space<vmem>>, vector<128x128xbf16>
    %cst_8 = arith.constant dense<0.000000e+00> : vector<2x128xf32>
    %10 = tpu.matmul %8, %9, %cst_8 {dimension_numbers = #tpu.dot_dimension_numbers<[1], [0], [0], [1], [0, 0, 1, 1], [], []>} : vector<2x128xbf16>, vector<128x128xbf16>, vector<2x128xf32> -> vector<2x128xf32>
    %c0_9 = arith.constant 0 : index
    %c0_10 = arith.constant 0 : index
    %11 = vector.load %arg5[%c0_9, %c0_10] : memref<1x128xf32, #tpu.memory_space<vmem>>, vector<1x128xf32>
    %12 = vector.broadcast %11 : vector<1x128xf32> to vector<2x128xf32>
    %13 = arith.addf %10, %12 : vector<2x128xf32>
    %c0_11 = arith.constant 0 : index
    %c0_12 = arith.constant 0 : index
    %14 = vector.load %arg6[%c0_11, %c0_12] : memref<2x128xf32, #tpu.memory_space<vmem>>, vector<2x128xf32>
    tpu.vector_store %arg6[%c0_11, %c0_12], %13 {strides = array<i32>} : memref<2x128xf32, #tpu.memory_space<vmem>>, vector<2x128xf32>,
    return
  }
  func.func @transform_0(%arg0: i32) -> (i32, i32) {
    %c0_i32 = arith.constant 0 : i32
    %c0_i32_0 = arith.constant 0 : i32
    return %arg0, %c0_i32 : i32, i32
  }
  func.func @transform_1(%arg0: i32) -> (i32, i32) {
    %c0_i32 = arith.constant 0 : i32
    %c0_i32_0 = arith.constant 0 : i32
    %c0_i32_1 = arith.constant 0 : i32
    return %c0_i32, %c0_i32_0 : i32, i32
  }
  func.func @transform_2(%arg0: i32) -> (i32, i32) {
    %c0_i32 = arith.constant 0 : i32
    %c0_i32_0 = arith.constant 0 : i32
    %c0_i32_1 = arith.constant 0 : i32
    return %c0_i32, %c0_i32_0 : i32, i32
  }
  func.func @transform_3(%arg0: i32) -> (i32, i32) {
    %c0_i32 = arith.constant 0 : i32
    %c0_i32_0 = arith.constant 0 : i32
    %c0_i32_1 = arith.constant 0 : i32
    return %c0_i32, %c0_i32_0 : i32, i32
  }
  func.func @transform_4(%arg0: i32) -> (i32, i32) {
    %c0_i32 = arith.constant 0 : i32
    %c0_i32_0 = arith.constant 0 : i32
    %c0_i32_1 = arith.constant 0 : i32
    return %c0_i32, %c0_i32_0 : i32, i32
  }
  func.func @transform_5(%arg0: i32) -> (i32, i32) {
    %c0_i32 = arith.constant 0 : i32
    %c0_i32_0 = arith.constant 0 : i32
    return %arg0, %c0_i32 : i32, i32
  }
}

</mosaic_0001>

<llo_original>
// kernel: simple_cnn_forward.3
$region0: #{simple_cnn_forward.3}
  #allocation0 [shape = 'u32[]', space=smem, size = 0x4, offset = 0x4, fixed_abs, tag = 'smem constant byte address 0x4 - core index']
  #allocation1 [shape = 'u32[72,128]{1,0:T(1,128)}', space=vmem, size = 0x9000, scoped, tag = 'internal scratch']
  %s0 = inlined_call_operand.vmem [shape: bf16[4,392,9], index: 0, kind: input, shape index: {}]
  %s1 = inlined_call_operand.vmem [shape: bf16[9,32], index: 1, kind: input, shape index: {}]
  %s2 = inlined_call_operand.vmem [shape: f32[1,32], index: 2, kind: input, shape index: {}]
  %s3 = inlined_call_operand.vmem [shape: bf16[392,32], index: 3, kind: output, shape index: {}]
  %s4 = sld [smem:[#allocation0]]
  $region22: #{simple_cnn_forward.3} parent=0
    _
  %s6 = ssub.s32 1, %s4
  %s7 = scalar_select 0, %s6, %s4
  // Predicated region
  $region2: #{simple_cnn_forward.3} parent=0 // pred_check
    _
  $region3: #{simple_cnn_forward.3} parent=0 // pred_check_branch
    %9 = sbr.rel (0) target = $region5
  $region4: #{simple_cnn_forward.3} parent=0 // pred_region
    _
  $region5: #{simple_cnn_forward.3} parent=0 // pred_fallthru
    _
  // Predicated region
  $region6: #{simple_cnn_forward.3} parent=0 // pred_check
    _
  $region7: #{simple_cnn_forward.3} parent=0 // pred_check_branch
    %11 = sbr.rel (0) target = $region9
  $region8: #{simple_cnn_forward.3} parent=0 // pred_region
    _
  $region9: #{simple_cnn_forward.3} parent=0 // pred_fallthru
    _
  // Predicated region
  $region10: #{simple_cnn_forward.3} parent=0 // pred_check
    _
  $region11: #{simple_cnn_forward.3} parent=0 // pred_check_branch
    %13 = sbr.rel (0) target = $region13
  $region12: #{simple_cnn_forward.3} parent=0 // pred_region
    _
  $region13: #{simple_cnn_forward.3} parent=0 // pred_fallthru
    _
  %v15 = vld [vmem:[%s1] sm:$0xf]
  %v16 = vld [vmem:[%s1 + $0x4] sm:$0x1]
  %v17 = vld [vmem:[%s2] sm:$0x1]
  %v18 = vld [vmem:[%s0] sm:$0xf]
  %v19 = vld [vmem:[%s0 + $0x4] sm:$0xf]
  %v20 = vld [vmem:[%s0 + $0x8] sm:$0xf]
  %v21 = vld [vmem:[%s0 + $0xc] sm:$0xf]
  %v22 = vld [vmem:[%s0 + $0x10] sm:$0xf]
  %v23 = vld [vmem:[%s0 + $0x14] sm:$0xf]
  %v24 = vld [vmem:[%s0 + $0x18] sm:$0xf]
  %v25 = vld [vmem:[%s0 + $0x1c] sm:$0xf]
  %v26 = vld [vmem:[%s0 + $0x20] sm:$0xf]
  %v27 = vld [vmem:[%s0 + $0x24] sm:$0xf]
  %v28 = vld [vmem:[%s0 + $0x28] sm:$0xf]
  %v29 = vld [vmem:[%s0 + $0x2c] sm:$0xf]
  %v30 = vld [vmem:[%s0 + $0x30] sm:$0xf]
  %v31 = vld [vmem:[%s0 + $0x34] sm:$0xf]
  %v32 = vld [vmem:[%s0 + $0x38] sm:$0xf]
  %v33 = vld [vmem:[%s0 + $0x3c] sm:$0xf]
  %v34 = vld [vmem:[%s0 + $0x40] sm:$0xf]
  %v35 = vld [vmem:[%s0 + $0x44] sm:$0xf]
  %v36 = vld [vmem:[%s0 + $0x48] sm:$0xf]
  %v37 = vld [vmem:[%s0 + $0x4c] sm:$0xf]
  %v38 = vld [vmem:[%s0 + $0x50] sm:$0xf]
  %v39 = vld [vmem:[%s0 + $0x54] sm:$0xf]
  %v40 = vld [vmem:[%s0 + $0x58] sm:$0xf]
  %v41 = vld [vmem:[%s0 + $0x5c] sm:$0xf]
  %v42 = vld [vmem:[%s0 + $0x60] sm:$0xf]
  %v43 = vld [vmem:[%s0 + $0x64] sm:$0xf]
  %v44 = vld [vmem:[%s0 + $0x68] sm:$0xf]
  %v45 = vld [vmem:[%s0 + $0x6c] sm:$0xf]
  %v46 = vld [vmem:[%s0 + $0x70] sm:$0xf]
  %v47 = vld [vmem:[%s0 + $0x74] sm:$0xf]
  %v48 = vld [vmem:[%s0 + $0x78] sm:$0xf]
  %v49 = vld [vmem:[%s0 + $0x7c] sm:$0xf]
  %v50 = vld [vmem:[%s0 + $0x80] sm:$0xf]
  %v51 = vld [vmem:[%s0 + $0x84] sm:$0xf]
  %v52 = vld [vmem:[%s0 + $0x88] sm:$0xf]
  %v53 = vld [vmem:[%s0 + $0x8c] sm:$0xf]
  %v54 = vld [vmem:[%s0 + $0x90] sm:$0xf]
  %v55 = vld [vmem:[%s0 + $0x94] sm:$0xf]
  %v56 = vld [vmem:[%s0 + $0x98] sm:$0xf]
  %v57 = vld [vmem:[%s0 + $0x9c] sm:$0xf]
  %v58 = vld [vmem:[%s0 + $0xa0] sm:$0xf]
  %v59 = vld [vmem:[%s0 + $0xa4] sm:$0xf]
  %v60 = vld [vmem:[%s0 + $0xa8] sm:$0xf]
  %v61 = vld [vmem:[%s0 + $0xac] sm:$0xf]
  %v62 = vld [vmem:[%s0 + $0xb0] sm:$0xf]
  %v63 = vld [vmem:[%s0 + $0xb4] sm:$0xf]
  %v64 = vld [vmem:[%s0 + $0xb8] sm:$0xf]
  %v65 = vld [vmem:[%s0 + $0xbc] sm:$0xf]
  %v66 = vld [vmem:[%s0 + $0xc0] sm:$0xf]
  %v68 = vperm.slane %v17, 0
  %v119 = vunpack.c.l.b16 %v18
  %v120 = vunpack.c.l.b16 %v19
  %v121 = vunpack.c.l.b16 %v20
  %v122 = vunpack.c.l.b16 %v21
  %v123 = vunpack.c.l.b16 %v22
  %v124 = vunpack.c.l.b16 %v23
  %v125 = vunpack.c.l.b16 %v24
  %v126 = vunpack.c.l.b16 %v25
  %v127 = vunpack.c.l.b16 %v26
  %v128 = vunpack.c.l.b16 %v27
  %v129 = vunpack.c.l.b16 %v28
  %v130 = vunpack.c.l.b16 %v29
  %v131 = vunpack.c.l.b16 %v30
  %v132 = vunpack.c.l.b16 %v31
  %v133 = vunpack.c.l.b16 %v32
  %v134 = vunpack.c.l.b16 %v33
  %v135 = vunpack.c.l.b16 %v34
  %v136 = vunpack.c.l.b16 %v35
  %v137 = vunpack.c.l.b16 %v36
  %v138 = vunpack.c.l.b16 %v37
  %v139 = vunpack.c.l.b16 %v38
  %v140 = vunpack.c.l.b16 %v39
  %v141 = vunpack.c.l.b16 %v40
  %v142 = vunpack.c.l.b16 %v41
  %v143 = vunpack.c.l.b16 %v42
  %v144 = vunpack.c.l.b16 %v43
  %v145 = vunpack.c.l.b16 %v44
  %v146 = vunpack.c.l.b16 %v45
  %v147 = vunpack.c.l.b16 %v46
  %v148 = vunpack.c.l.b16 %v47
  %v149 = vunpack.c.l.b16 %v48
  %v150 = vunpack.c.l.b16 %v49
  %v151 = vunpack.c.l.b16 %v50
  %v152 = vunpack.c.l.b16 %v51
  %v153 = vunpack.c.l.b16 %v52
  %v154 = vunpack.c.l.b16 %v53
  %v155 = vunpack.c.l.b16 %v54
  %v156 = vunpack.c.l.b16 %v55
  %v157 = vunpack.c.l.b16 %v56
  %v158 = vunpack.c.l.b16 %v57
  %v159 = vunpack.c.l.b16 %v58
  %v160 = vunpack.c.l.b16 %v59
  %v161 = vunpack.c.l.b16 %v60
  %v162 = vunpack.c.l.b16 %v61
  %v163 = vunpack.c.l.b16 %v62
  %v164 = vunpack.c.l.b16 %v63
  %v165 = vunpack.c.l.b16 %v64
  %v166 = vunpack.c.l.b16 %v65
  %v167 = vunpack.c.l.b16 %v66
  %v168 = vpack.c.b16 %v120, %v119
  %v169 = vpack.c.b16 %v122, %v121
  %v170 = vpack.c.b16 %v124, %v123
  %v171 = vpack.c.b16 %v126, %v125
  %v172 = vpack.c.b16 %v128, %v127
  %v173 = vpack.c.b16 %v130, %v129
  %v174 = vpack.c.b16 %v132, %v131
  %v175 = vpack.c.b16 %v134, %v133
  %v176 = vpack.c.b16 %v136, %v135
  %v177 = vpack.c.b16 %v138, %v137
  %v178 = vpack.c.b16 %v140, %v139
  %v179 = vpack.c.b16 %v142, %v141
  %v180 = vpack.c.b16 %v144, %v143
  %v181 = vpack.c.b16 %v146, %v145
  %v182 = vpack.c.b16 %v148, %v147
  %v183 = vpack.c.b16 %v150, %v149
  %v184 = vpack.c.b16 %v152, %v151
  %v185 = vpack.c.b16 %v154, %v153
  %v186 = vpack.c.b16 %v156, %v155
  %v187 = vpack.c.b16 %v158, %v157
  %v188 = vpack.c.b16 %v160, %v159
  %v189 = vpack.c.b16 %v162, %v161
  %v190 = vpack.c.b16 %v164, %v163
  %v191 = vpack.c.b16 %v166, %v165
  %v192 = vpack.c.b16 %v167, %v167
  %v195 = vunpack.c.l.b16 %v15
  %v196 = vunpack.c.l.b16 %v16
  %v197 = vpack.c.b16 %v196, %v195
  %vm198 = vcmask 72704
  %v200 = vsel %vm198, %v168, 0
  %v203 = vsel %vm198, %v169, 0
  %v206 = vsel %vm198, %v170, 0
  %v209 = vsel %vm198, %v171, 0
  %v212 = vsel %vm198, %v172, 0
  %v215 = vsel %vm198, %v173, 0
  %v218 = vsel %vm198, %v174, 0
  %v221 = vsel %vm198, %v175, 0
  %v224 = vsel %vm198, %v176, 0
  %v227 = vsel %vm198, %v177, 0
  %v230 = vsel %vm198, %v178, 0
  %v233 = vsel %vm198, %v179, 0
  %v236 = vsel %vm198, %v180, 0
  %v239 = vsel %vm198, %v181, 0
  %v242 = vsel %vm198, %v182, 0
  %v245 = vsel %vm198, %v183, 0
  %v248 = vsel %vm198, %v184, 0
  %v251 = vsel %vm198, %v185, 0
  %v254 = vsel %vm198, %v186, 0
  %v257 = vsel %vm198, %v187, 0
  %v260 = vsel %vm198, %v188, 0
  %v263 = vsel %vm198, %v189, 0
  %v266 = vsel %vm198, %v190, 0
  %v269 = vsel %vm198, %v191, 0
  %v272 = vsel %vm198, %v192, 0
  %vm274 = vcmask 1043456
  %vm275 = vcmask 1044480
  %v276 = vsel %vm274, 4294967295, 65535
  %v277 = vsel %vm275, %v276, 0
  %v279 = vand.u32 %v197, %v277
  %281 = vmatpush.bf16.msra.mxu0 0
  %282 = vmatpush.bf16.msra.mxu0 0
  %283 = vmatpush.bf16.msra.mxu0 0
  %284 = vmatpush.bf16.msra.mxu0 0
  %285 = vmatpush.bf16.msra.mxu0 0
  %286 = vmatpush.bf16.msra.mxu0 0
  %287 = vmatpush.bf16.msra.mxu0 0
  %288 = vmatpush.bf16.msra.mxu0 %v279
  %289 = vmatmul.bf16.gmra.mxu0 %v200
  %v290 = vpop.f32.mrf.mxu0
  %v291 = vadd.f32 %v68, %v290
  %v292 = vpop.f32.mrf.mxu0
  %v293 = vadd.f32 %v68, %v292
  %294 = vmatmul.bf16.gmra.mxu0 %v203
  %v295 = vpop.f32.mrf.mxu0
  %v296 = vadd.f32 %v68, %v295
  %v297 = vpop.f32.mrf.mxu0
  %v298 = vadd.f32 %v68, %v297
  %299 = vmatmul.bf16.gmra.mxu0 %v206
  %v300 = vpop.f32.mrf.mxu0
  %v301 = vadd.f32 %v68, %v300
  %v302 = vpop.f32.mrf.mxu0
  %v303 = vadd.f32 %v68, %v302
  %304 = vmatmul.bf16.gmra.mxu0 %v209
  %v305 = vpop.f32.mrf.mxu0
  %v306 = vadd.f32 %v68, %v305
  %v307 = vpop.f32.mrf.mxu0
  %v308 = vadd.f32 %v68, %v307
  %309 = vmatmul.bf16.gmra.mxu0 %v212
  %v310 = vpop.f32.mrf.mxu0
  %v311 = vadd.f32 %v68, %v310
  %v312 = vpop.f32.mrf.mxu0
  %v313 = vadd.f32 %v68, %v312
  %314 = vmatmul.bf16.gmra.mxu0 %v215
  %v315 = vpop.f32.mrf.mxu0
  %v316 = vadd.f32 %v68, %v315
  %v317 = vpop.f32.mrf.mxu0
  %v318 = vadd.f32 %v68, %v317
  %319 = vmatmul.bf16.gmra.mxu0 %v218
  %v320 = vpop.f32.mrf.mxu0
  %v321 = vadd.f32 %v68, %v320
  %v322 = vpop.f32.mrf.mxu0
  %v323 = vadd.f32 %v68, %v322
  %324 = vmatmul.bf16.gmra.mxu0 %v221
  %v325 = vpop.f32.mrf.mxu0
  %v326 = vadd.f32 %v68, %v325
  %v327 = vpop.f32.mrf.mxu0
  %v328 = vadd.f32 %v68, %v327
  %329 = vmatmul.bf16.gmra.mxu0 %v224
  %v330 = vpop.f32.mrf.mxu0
  %v331 = vadd.f32 %v68, %v330
  %v332 = vpop.f32.mrf.mxu0
  %v333 = vadd.f32 %v68, %v332
  %334 = vmatmul.bf16.gmra.mxu0 %v227
  %v335 = vpop.f32.mrf.mxu0
  %v336 = vadd.f32 %v68, %v335
  %v337 = vpop.f32.mrf.mxu0
  %v338 = vadd.f32 %v68, %v337
  %339 = vmatmul.bf16.gmra.mxu0 %v230
  %v340 = vpop.f32.mrf.mxu0
  %v341 = vadd.f32 %v68, %v340
  %v342 = vpop.f32.mrf.mxu0
  %v343 = vadd.f32 %v68, %v342
  %344 = vmatmul.bf16.gmra.mxu0 %v233
  %v345 = vpop.f32.mrf.mxu0
  %v346 = vadd.f32 %v68, %v345
  %v347 = vpop.f32.mrf.mxu0
  %v348 = vadd.f32 %v68, %v347
  %349 = vmatmul.bf16.gmra.mxu0 %v236
  %v350 = vpop.f32.mrf.mxu0
  %v351 = vadd.f32 %v68, %v350
  %v352 = vpop.f32.mrf.mxu0
  %v353 = vadd.f32 %v68, %v352
  %354 = vmatmul.bf16.gmra.mxu0 %v239
  %v355 = vpop.f32.mrf.mxu0
  %v356 = vadd.f32 %v68, %v355
  %v357 = vpop.f32.mrf.mxu0
  %v358 = vadd.f32 %v68, %v357
  %359 = vmatmul.bf16.gmra.mxu0 %v242
  %v360 = vpop.f32.mrf.mxu0
  %v361 = vadd.f32 %v68, %v360
  %v362 = vpop.f32.mrf.mxu0
  %v363 = vadd.f32 %v68, %v362
  %364 = vmatmul.bf16.gmra.mxu0 %v245
  %v365 = vpop.f32.mrf.mxu0
  %v366 = vadd.f32 %v68, %v365
  %v367 = vpop.f32.mrf.mxu0
  %v368 = vadd.f32 %v68, %v367
  %369 = vmatmul.bf16.gmra.mxu0 %v248
  %v370 = vpop.f32.mrf.mxu0
  %v371 = vadd.f32 %v68, %v370
  %v372 = vpop.f32.mrf.mxu0
  %v373 = vadd.f32 %v68, %v372
  %374 = vmatmul.bf16.gmra.mxu0 %v251
  %v375 = vpop.f32.mrf.mxu0
  %v376 = vadd.f32 %v68, %v375
  %v377 = vpop.f32.mrf.mxu0
  %v378 = vadd.f32 %v68, %v377
  %379 = vmatmul.bf16.gmra.mxu0 %v254
  %v380 = vpop.f32.mrf.mxu0
  %v381 = vadd.f32 %v68, %v380
  %v382 = vpop.f32.mrf.mxu0
  %v383 = vadd.f32 %v68, %v382
  %384 = vmatmul.bf16.gmra.mxu0 %v257
  %v385 = vpop.f32.mrf.mxu0
  %v386 = vadd.f32 %v68, %v385
  %v387 = vpop.f32.mrf.mxu0
  %v388 = vadd.f32 %v68, %v387
  %389 = vmatmul.bf16.gmra.mxu0 %v260
  %v390 = vpop.f32.mrf.mxu0
  %v391 = vadd.f32 %v68, %v390
  %v392 = vpop.f32.mrf.mxu0
  %v393 = vadd.f32 %v68, %v392
  %394 = vmatmul.bf16.gmra.mxu0 %v263
  %v395 = vpop.f32.mrf.mxu0
  %v396 = vadd.f32 %v68, %v395
  %v397 = vpop.f32.mrf.mxu0
  %v398 = vadd.f32 %v68, %v397
  %399 = vmatmul.bf16.gmra.mxu0 %v266
  %v400 = vpop.f32.mrf.mxu0
  %v401 = vadd.f32 %v68, %v400
  %v402 = vpop.f32.mrf.mxu0
  %v403 = vadd.f32 %v68, %v402
  %404 = vmatmul.bf16.gmra.mxu0 %v269
  %v405 = vpop.f32.mrf.mxu0
  %v406 = vadd.f32 %v68, %v405
  %v407 = vpop.f32.mrf.mxu0
  %v408 = vadd.f32 %v68, %v407
  %409 = vmatmul.bf16.gmra.mxu0 %v272
  %v410 = vpop.f32.mrf.mxu0
  %v411 = vadd.f32 %v68, %v410
  %v412 = vpop.f32.mrf.mxu0
  %413 = vdwg.mxu0
  %v414 = vmax.f32 %v291, 0.0
  %v415 = vmax.f32 %v293, 0.0
  %v416 = vmax.f32 %v296, 0.0
  %v417 = vmax.f32 %v298, 0.0
  %v418 = vmax.f32 %v301, 0.0
  %v419 = vmax.f32 %v303, 0.0
  %v420 = vmax.f32 %v306, 0.0
  %v421 = vmax.f32 %v308, 0.0
  %v422 = vmax.f32 %v311, 0.0
  %v423 = vmax.f32 %v313, 0.0
  %v424 = vmax.f32 %v316, 0.0
  %v425 = vmax.f32 %v318, 0.0
  %v426 = vmax.f32 %v321, 0.0
  %v427 = vmax.f32 %v323, 0.0
  %v428 = vmax.f32 %v326, 0.0
  %v429 = vmax.f32 %v328, 0.0
  %v430 = vmax.f32 %v331, 0.0
  %v431 = vmax.f32 %v333, 0.0
  %v432 = vmax.f32 %v336, 0.0
  %v433 = vmax.f32 %v338, 0.0
  %v434 = vmax.f32 %v341, 0.0
  %v435 = vmax.f32 %v343, 0.0
  %v436 = vmax.f32 %v346, 0.0
  %v437 = vmax.f32 %v348, 0.0
  %v438 = vmax.f32 %v351, 0.0
  %v439 = vmax.f32 %v353, 0.0
  %v440 = vmax.f32 %v356, 0.0
  %v441 = vmax.f32 %v358, 0.0
  %v442 = vmax.f32 %v361, 0.0
  %v443 = vmax.f32 %v363, 0.0
  %v444 = vmax.f32 %v366, 0.0
  %v445 = vmax.f32 %v368, 0.0
  %v446 = vmax.f32 %v371, 0.0
  %v447 = vmax.f32 %v373, 0.0
  %v448 = vmax.f32 %v376, 0.0
  %v449 = vmax.f32 %v378, 0.0
  %v450 = vmax.f32 %v381, 0.0
  %v451 = vmax.f32 %v383, 0.0
  %v452 = vmax.f32 %v386, 0.0
  %v453 = vmax.f32 %v388, 0.0
  %v454 = vmax.f32 %v391, 0.0
  %v455 = vmax.f32 %v393, 0.0
  %v456 = vmax.f32 %v396, 0.0
  %v457 = vmax.f32 %v398, 0.0
  %v458 = vmax.f32 %v401, 0.0
  %v459 = vmax.f32 %v403, 0.0
  %v460 = vmax.f32 %v406, 0.0
  %v461 = vmax.f32 %v408, 0.0
  %v462 = vmax.f32 %v411, 0.0
  %s463 = scalar_lea.vmem %s0, 196
  %v464 = vld [vmem:[%s463] sm:$0xf]
  %v465 = vld [vmem:[%s463 + $0x4] sm:$0xf]
  %v466 = vld [vmem:[%s463 + $0x8] sm:$0xf]
  %v467 = vld [vmem:[%s463 + $0xc] sm:$0xf]
  %v468 = vld [vmem:[%s463 + $0x10] sm:$0xf]
  %v469 = vld [vmem:[%s463 + $0x14] sm:$0xf]
  %v470 = vld [vmem:[%s463 + $0x18] sm:$0xf]
  %v471 = vld [vmem:[%s463 + $0x1c] sm:$0xf]
  %v472 = vld [vmem:[%s463 + $0x20] sm:$0xf]
  %v473 = vld [vmem:[%s463 + $0x24] sm:$0xf]
  %v474 = vld [vmem:[%s463 + $0x28] sm:$0xf]
  %v475 = vld [vmem:[%s463 + $0x2c] sm:$0xf]
  %v476 = vld [vmem:[%s463 + $0x30] sm:$0xf]
  %v477 = vld [vmem:[%s463 + $0x34] sm:$0xf]
  %v478 = vld [vmem:[%s463 + $0x38] sm:$0xf]
  %v479 = vld [vmem:[%s463 + $0x3c] sm:$0xf]
  %v480 = vld [vmem:[%s463 + $0x40] sm:$0xf]
  %v481 = vld [vmem:[%s463 + $0x44] sm:$0xf]
  %v482 = vld [vmem:[%s463 + $0x48] sm:$0xf]
  %v483 = vld [vmem:[%s463 + $0x4c] sm:$0xf]
  %v484 = vld [vmem:[%s463 + $0x50] sm:$0xf]
  %v485 = vld [vmem:[%s463 + $0x54] sm:$0xf]
  %v486 = vld [vmem:[%s463 + $0x58] sm:$0xf]
  %v487 = vld [vmem:[%s463 + $0x5c] sm:$0xf]
  %v488 = vld [vmem:[%s463 + $0x60] sm:$0xf]
  %v489 = vld [vmem:[%s463 + $0x64] sm:$0xf]
  %v490 = vld [vmem:[%s463 + $0x68] sm:$0xf]
  %v491 = vld [vmem:[%s463 + $0x6c] sm:$0xf]
  %v492 = vld [vmem:[%s463 + $0x70] sm:$0xf]
  %v493 = vld [vmem:[%s463 + $0x74] sm:$0xf]
  %v494 = vld [vmem:[%s463 + $0x78] sm:$0xf]
  %v495 = vld [vmem:[%s463 + $0x7c] sm:$0xf]
  %v496 = vld [vmem:[%s463 + $0x80] sm:$0xf]
  %v497 = vld [vmem:[%s463 + $0x84] sm:$0xf]
  %v498 = vld [vmem:[%s463 + $0x88] sm:$0xf]
  %v499 = vld [vmem:[%s463 + $0x8c] sm:$0xf]
  %v500 = vld [vmem:[%s463 + $0x90] sm:$0xf]
  %v501 = vld [vmem:[%s463 + $0x94] sm:$0xf]
  %v502 = vld [vmem:[%s463 + $0x98] sm:$0xf]
  %v503 = vld [vmem:[%s463 + $0x9c] sm:$0xf]
  %v504 = vld [vmem:[%s463 + $0xa0] sm:$0xf]
  %v505 = vld [vmem:[%s463 + $0xa4] sm:$0xf]
  %v506 = vld [vmem:[%s463 + $0xa8] sm:$0xf]
  %v507 = vld [vmem:[%s463 + $0xac] sm:$0xf]
  %v508 = vld [vmem:[%s463 + $0xb0] sm:$0xf]
  %v509 = vld [vmem:[%s463 + $0xb4] sm:$0xf]
  %v510 = vld [vmem:[%s463 + $0xb8] sm:$0xf]
  %v511 = vld [vmem:[%s463 + $0xbc] sm:$0xf]
  %v512 = vld [vmem:[%s463 + $0xc0] sm:$0xf]
  %v562 = vunpack.c.l.b16 %v464
  %v563 = vunpack.c.l.b16 %v465
  %v564 = vunpack.c.l.b16 %v466
  %v565 = vunpack.c.l.b16 %v467
  %v566 = vunpack.c.l.b16 %v468
  %v567 = vunpack.c.l.b16 %v469
  %v568 = vunpack.c.l.b16 %v470
  %v569 = vunpack.c.l.b16 %v471
  %v570 = vunpack.c.l.b16 %v472
  %v571 = vunpack.c.l.b16 %v473
  %v572 = vunpack.c.l.b16 %v474
  %v573 = vunpack.c.l.b16 %v475
  %v574 = vunpack.c.l.b16 %v476
  %v575 = vunpack.c.l.b16 %v477
  %v576 = vunpack.c.l.b16 %v478
  %v577 = vunpack.c.l.b16 %v479
  %v578 = vunpack.c.l.b16 %v480
  %v579 = vunpack.c.l.b16 %v481
  %v580 = vunpack.c.l.b16 %v482
  %v581 = vunpack.c.l.b16 %v483
  %v582 = vunpack.c.l.b16 %v484
  %v583 = vunpack.c.l.b16 %v485
  %v584 = vunpack.c.l.b16 %v486
  %v585 = vunpack.c.l.b16 %v487
  %v586 = vunpack.c.l.b16 %v488
  %v587 = vunpack.c.l.b16 %v489
  %v588 = vunpack.c.l.b16 %v490
  %v589 = vunpack.c.l.b16 %v491
  %v590 = vunpack.c.l.b16 %v492
  %v591 = vunpack.c.l.b16 %v493
  %v592 = vunpack.c.l.b16 %v494
  %v593 = vunpack.c.l.b16 %v495
  %v594 = vunpack.c.l.b16 %v496
  %v595 = vunpack.c.l.b16 %v497
  %v596 = vunpack.c.l.b16 %v498
  %v597 = vunpack.c.l.b16 %v499
  %v598 = vunpack.c.l.b16 %v500
  %v599 = vunpack.c.l.b16 %v501
  %v600 = vunpack.c.l.b16 %v502
  %v601 = vunpack.c.l.b16 %v503
  %v602 = vunpack.c.l.b16 %v504
  %v603 = vunpack.c.l.b16 %v505
  %v604 = vunpack.c.l.b16 %v506
  %v605 = vunpack.c.l.b16 %v507
  %v606 = vunpack.c.l.b16 %v508
  %v607 = vunpack.c.l.b16 %v509
  %v608 = vunpack.c.l.b16 %v510
  %v609 = vunpack.c.l.b16 %v511
  %v610 = vunpack.c.l.b16 %v512
  %v611 = vpack.c.b16 %v563, %v562
  %v612 = vpack.c.b16 %v565, %v564
  %v613 = vpack.c.b16 %v567, %v566
  %v614 = vpack.c.b16 %v569, %v568
  %v615 = vpack.c.b16 %v571, %v570
  %v616 = vpack.c.b16 %v573, %v572
  %v617 = vpack.c.b16 %v575, %v574
  %v618 = vpack.c.b16 %v577, %v576
  %v619 = vpack.c.b16 %v579, %v578
  %v620 = vpack.c.b16 %v581, %v580
  %v621 = vpack.c.b16 %v583, %v582
  %v622 = vpack.c.b16 %v585, %v584
  %v623 = vpack.c.b16 %v587, %v586
  %v624 = vpack.c.b16 %v589, %v588
  %v625 = vpack.c.b16 %v591, %v590
  %v626 = vpack.c.b16 %v593, %v592
  %v627 = vpack.c.b16 %v595, %v594
  %v628 = vpack.c.b16 %v597, %v596
  %v629 = vpack.c.b16 %v599, %v598
  %v630 = vpack.c.b16 %v601, %v600
  %v631 = vpack.c.b16 %v603, %v602
  %v632 = vpack.c.b16 %v605, %v604
  %v633 = vpack.c.b16 %v607, %v606
  %v634 = vpack.c.b16 %v609, %v608
  %v635 = vpack.c.b16 %v610, %v610
  %v637 = vsel %vm198, %v611, 0
  %v640 = vsel %vm198, %v612, 0
  %v643 = vsel %vm198, %v613, 0
  %v646 = vsel %vm198, %v614, 0
  %v649 = vsel %vm198, %v615, 0
  %v652 = vsel %vm198, %v616, 0
  %v655 = vsel %vm198, %v617, 0
  %v658 = vsel %vm198, %v618, 0
  %v661 = vsel %vm198, %v619, 0
  %v664 = vsel %vm198, %v620, 0
  %v667 = vsel %vm198, %v621, 0
  %v670 = vsel %vm198, %v622, 0
  %v673 = vsel %vm198, %v623, 0
  %v676 = vsel %vm198, %v624, 0
  %v679 = vsel %vm198, %v625, 0
  %v682 = vsel %vm198, %v626, 0
  %v685 = vsel %vm198, %v627, 0
  %v688 = vsel %vm198, %v628, 0
  %v691 = vsel %vm198, %v629, 0
  %v694 = vsel %vm198, %v630, 0
  %v697 = vsel %vm198, %v631, 0
  %v700 = vsel %vm198, %v632, 0
  %v703 = vsel %vm198, %v633, 0
  %v706 = vsel %vm198, %v634, 0
  %v709 = vsel %vm198, %v635, 0
  %711 = vmatpush.bf16.msra.mxu0 0
  %712 = vmatpush.bf16.msra.mxu0 0
  %713 = vmatpush.bf16.msra.mxu0 0
  %714 = vmatpush.bf16.msra.mxu0 0
  %715 = vmatpush.bf16.msra.mxu0 0
  %716 = vmatpush.bf16.msra.mxu0 0
  %717 = vmatpush.bf16.msra.mxu0 0
  %718 = vmatpush.bf16.msra.mxu0 %v279
  %719 = vmatmul.bf16.gmra.mxu0 %v637
  %v720 = vpop.f32.mrf.mxu0
  %v721 = vadd.f32 %v68, %v720
  %v722 = vpop.f32.mrf.mxu0
  %v723 = vadd.f32 %v68, %v722
  %724 = vmatmul.bf16.gmra.mxu0 %v640
  %v725 = vpop.f32.mrf.mxu0
  %v726 = vadd.f32 %v68, %v725
  %v727 = vpop.f32.mrf.mxu0
  %v728 = vadd.f32 %v68, %v727
  %729 = vmatmul.bf16.gmra.mxu0 %v643
  %v730 = vpop.f32.mrf.mxu0
  %v731 = vadd.f32 %v68, %v730
  %v732 = vpop.f32.mrf.mxu0
  %v733 = vadd.f32 %v68, %v732
  %734 = vmatmul.bf16.gmra.mxu0 %v646
  %v735 = vpop.f32.mrf.mxu0
  %v736 = vadd.f32 %v68, %v735
  %v737 = vpop.f32.mrf.mxu0
  %v738 = vadd.f32 %v68, %v737
  %739 = vmatmul.bf16.gmra.mxu0 %v649
  %v740 = vpop.f32.mrf.mxu0
  %v741 = vadd.f32 %v68, %v740
  %v742 = vpop.f32.mrf.mxu0
  %v743 = vadd.f32 %v68, %v742
  %744 = vmatmul.bf16.gmra.mxu0 %v652
  %v745 = vpop.f32.mrf.mxu0
  %v746 = vadd.f32 %v68, %v745
  %v747 = vpop.f32.mrf.mxu0
  %v748 = vadd.f32 %v68, %v747
  %749 = vmatmul.bf16.gmra.mxu0 %v655
  %v750 = vpop.f32.mrf.mxu0
  %v751 = vadd.f32 %v68, %v750
  %v752 = vpop.f32.mrf.mxu0
  %v753 = vadd.f32 %v68, %v752
  %754 = vmatmul.bf16.gmra.mxu0 %v658
  %v755 = vpop.f32.mrf.mxu0
  %v756 = vadd.f32 %v68, %v755
  %v757 = vpop.f32.mrf.mxu0
  %v758 = vadd.f32 %v68, %v757
  %759 = vmatmul.bf16.gmra.mxu0 %v661
  %v760 = vpop.f32.mrf.mxu0
  %v761 = vadd.f32 %v68, %v760
  %v762 = vpop.f32.mrf.mxu0
  %v763 = vadd.f32 %v68, %v762
  %764 = vmatmul.bf16.gmra.mxu0 %v664
  %v765 = vpop.f32.mrf.mxu0
  %v766 = vadd.f32 %v68, %v765
  %v767 = vpop.f32.mrf.mxu0
  %v768 = vadd.f32 %v68, %v767
  %769 = vmatmul.bf16.gmra.mxu0 %v667
  %v770 = vpop.f32.mrf.mxu0
  %v771 = vadd.f32 %v68, %v770
  %v772 = vpop.f32.mrf.mxu0
  %v773 = vadd.f32 %v68, %v772
  %774 = vmatmul.bf16.gmra.mxu0 %v670
  %v775 = vpop.f32.mrf.mxu0
  %v776 = vadd.f32 %v68, %v775
  %v777 = vpop.f32.mrf.mxu0
  %v778 = vadd.f32 %v68, %v777
  %779 = vmatmul.bf16.gmra.mxu0 %v673
  %v780 = vpop.f32.mrf.mxu0
  %v781 = vadd.f32 %v68, %v780
  %v782 = vpop.f32.mrf.mxu0
  %v783 = vadd.f32 %v68, %v782
  %784 = vmatmul.bf16.gmra.mxu0 %v676
  %v785 = vpop.f32.mrf.mxu0
  %v786 = vadd.f32 %v68, %v785
  %v787 = vpop.f32.mrf.mxu0
  %v788 = vadd.f32 %v68, %v787
  %789 = vmatmul.bf16.gmra.mxu0 %v679
  %v790 = vpop.f32.mrf.mxu0
  %v791 = vadd.f32 %v68, %v790
  %v792 = vpop.f32.mrf.mxu0
  %v793 = vadd.f32 %v68, %v792
  %794 = vmatmul.bf16.gmra.mxu0 %v682
  %v795 = vpop.f32.mrf.mxu0
  %v796 = vadd.f32 %v68, %v795
  %v797 = vpop.f32.mrf.mxu0
  %v798 = vadd.f32 %v68, %v797
  %799 = vmatmul.bf16.gmra.mxu0 %v685
  %v800 = vpop.f32.mrf.mxu0
  %v801 = vadd.f32 %v68, %v800
  %v802 = vpop.f32.mrf.mxu0
  %v803 = vadd.f32 %v68, %v802
  %804 = vmatmul.bf16.gmra.mxu0 %v688
  %v805 = vpop.f32.mrf.mxu0
  %v806 = vadd.f32 %v68, %v805
  %v807 = vpop.f32.mrf.mxu0
  %v808 = vadd.f32 %v68, %v807
  %809 = vmatmul.bf16.gmra.mxu0 %v691
  %v810 = vpop.f32.mrf.mxu0
  %v811 = vadd.f32 %v68, %v810
  %v812 = vpop.f32.mrf.mxu0
  %v813 = vadd.f32 %v68, %v812
  %814 = vmatmul.bf16.gmra.mxu0 %v694
  %v815 = vpop.f32.mrf.mxu0
  %v816 = vadd.f32 %v68, %v815
  %v817 = vpop.f32.mrf.mxu0
  %v818 = vadd.f32 %v68, %v817
  %819 = vmatmul.bf16.gmra.mxu0 %v697
  %v820 = vpop.f32.mrf.mxu0
  %v821 = vadd.f32 %v68, %v820
  %v822 = vpop.f32.mrf.mxu0
  %v823 = vadd.f32 %v68, %v822
  %824 = vmatmul.bf16.gmra.mxu0 %v700
  %v825 = vpop.f32.mrf.mxu0
  %v826 = vadd.f32 %v68, %v825
  %v827 = vpop.f32.mrf.mxu0
  %v828 = vadd.f32 %v68, %v827
  %829 = vmatmul.bf16.gmra.mxu0 %v703
  %v830 = vpop.f32.mrf.mxu0
  %v831 = vadd.f32 %v68, %v830
  %v832 = vpop.f32.mrf.mxu0
  %v833 = vadd.f32 %v68, %v832
  %834 = vmatmul.bf16.gmra.mxu0 %v706
  %v835 = vpop.f32.mrf.mxu0
  %v836 = vadd.f32 %v68, %v835
  %v837 = vpop.f32.mrf.mxu0
  %v838 = vadd.f32 %v68, %v837
  %839 = vmatmul.bf16.gmra.mxu0 %v709
  %v840 = vpop.f32.mrf.mxu0
  %v841 = vadd.f32 %v68, %v840
  %v842 = vpop.f32.mrf.mxu0
  %843 = vdwg.mxu0
  %v844 = vmax.f32 %v721, 0.0
  %v845 = vmax.f32 %v723, 0.0
  %v846 = vmax.f32 %v726, 0.0
  %v847 = vmax.f32 %v728, 0.0
  %v848 = vmax.f32 %v731, 0.0
  %v849 = vmax.f32 %v733, 0.0
  %v850 = vmax.f32 %v736, 0.0
  %v851 = vmax.f32 %v738, 0.0
  %v852 = vmax.f32 %v741, 0.0
  %v853 = vmax.f32 %v743, 0.0
  %v854 = vmax.f32 %v746, 0.0
  %v855 = vmax.f32 %v748, 0.0
  %v856 = vmax.f32 %v751, 0.0
  %v857 = vmax.f32 %v753, 0.0
  %v858 = vmax.f32 %v756, 0.0
  %v859 = vmax.f32 %v758, 0.0
  %v860 = vmax.f32 %v761, 0.0
  %v861 = vmax.f32 %v763, 0.0
  %v862 = vmax.f32 %v766, 0.0
  %v863 = vmax.f32 %v768, 0.0
  %v864 = vmax.f32 %v771, 0.0
  %v865 = vmax.f32 %v773, 0.0
  %v866 = vmax.f32 %v776, 0.0
  %v867 = vmax.f32 %v778, 0.0
  %v868 = vmax.f32 %v781, 0.0
  %v869 = vmax.f32 %v783, 0.0
  %v870 = vmax.f32 %v786, 0.0
  %v871 = vmax.f32 %v788, 0.0
  %v872 = vmax.f32 %v791, 0.0
  %v873 = vmax.f32 %v793, 0.0
  %v874 = vmax.f32 %v796, 0.0
  %v875 = vmax.f32 %v798, 0.0
  %v876 = vmax.f32 %v801, 0.0
  %v877 = vmax.f32 %v803, 0.0
  %v878 = vmax.f32 %v806, 0.0
  %v879 = vmax.f32 %v808, 0.0
  %v880 = vmax.f32 %v811, 0.0
  %v881 = vmax.f32 %v813, 0.0
  %v882 = vmax.f32 %v816, 0.0
  %v883 = vmax.f32 %v818, 0.0
  %v884 = vmax.f32 %v821, 0.0
  %v885 = vmax.f32 %v823, 0.0
  %v886 = vmax.f32 %v826, 0.0
  %v887 = vmax.f32 %v828, 0.0
  %v888 = vmax.f32 %v831, 0.0
  %v889 = vmax.f32 %v833, 0.0
  %v890 = vmax.f32 %v836, 0.0
  %v891 = vmax.f32 %v838, 0.0
  %v892 = vmax.f32 %v841, 0.0
  %v893 = vmax.f32 %v414, %v844
  %v894 = vmax.f32 %v415, %v845
  %v895 = vmax.f32 %v416, %v846
  %v896 = vmax.f32 %v417, %v847
  %v897 = vmax.f32 %v418, %v848
  %v898 = vmax.f32 %v419, %v849
  %v899 = vmax.f32 %v420, %v850
  %v900 = vmax.f32 %v421, %v851
  %v901 = vmax.f32 %v422, %v852
  %v902 = vmax.f32 %v423, %v853
  %v903 = vmax.f32 %v424, %v854
  %v904 = vmax.f32 %v425, %v855
  %v905 = vmax.f32 %v426, %v856
  %v906 = vmax.f32 %v427, %v857
  %v907 = vmax.f32 %v428, %v858
  %v908 = vmax.f32 %v429, %v859
  %v909 = vmax.f32 %v430, %v860
  %v910 = vmax.f32 %v431, %v861
  %v911 = vmax.f32 %v432, %v862
  %v912 = vmax.f32 %v433, %v863
  %v913 = vmax.f32 %v434, %v864
  %v914 = vmax.f32 %v435, %v865
  %v915 = vmax.f32 %v436, %v866
  %v916 = vmax.f32 %v437, %v867
  %v917 = vmax.f32 %v438, %v868
  %v918 = vmax.f32 %v439, %v869
  %v919 = vmax.f32 %v440, %v870
  %v920 = vmax.f32 %v441, %v871
  %v921 = vmax.f32 %v442, %v872
  %v922 = vmax.f32 %v443, %v873
  %v923 = vmax.f32 %v444, %v874
  %v924 = vmax.f32 %v445, %v875
  %v925 = vmax.f32 %v446, %v876
  %v926 = vmax.f32 %v447, %v877
  %v927 = vmax.f32 %v448, %v878
  %v928 = vmax.f32 %v449, %v879
  %v929 = vmax.f32 %v450, %v880
  %v930 = vmax.f32 %v451, %v881
  %v931 = vmax.f32 %v452, %v882
  %v932 = vmax.f32 %v453, %v883
  %v933 = vmax.f32 %v454, %v884
  %v934 = vmax.f32 %v455, %v885
  %v935 = vmax.f32 %v456, %v886
  %v936 = vmax.f32 %v457, %v887
  %v937 = vmax.f32 %v458, %v888
  %v938 = vmax.f32 %v459, %v889
  %v939 = vmax.f32 %v460, %v890
  %v940 = vmax.f32 %v461, %v891
  %v941 = vmax.f32 %v462, %v892
  %s942 = scalar_lea.vmem %s0, 392
  %v943 = vld [vmem:[%s942] sm:$0xf]
  %v944 = vld [vmem:[%s942 + $0x4] sm:$0xf]
  %v945 = vld [vmem:[%s942 + $0x8] sm:$0xf]
  %v946 = vld [vmem:[%s942 + $0xc] sm:$0xf]
  %v947 = vld [vmem:[%s942 + $0x10] sm:$0xf]
  %v948 = vld [vmem:[%s942 + $0x14] sm:$0xf]
  %v949 = vld [vmem:[%s942 + $0x18] sm:$0xf]
  %v950 = vld [vmem:[%s942 + $0x1c] sm:$0xf]
  %v951 = vld [vmem:[%s942 + $0x20] sm:$0xf]
  %v952 = vld [vmem:[%s942 + $0x24] sm:$0xf]
  %v953 = vld [vmem:[%s942 + $0x28] sm:$0xf]
  %v954 = vld [vmem:[%s942 + $0x2c] sm:$0xf]
  %v955 = vld [vmem:[%s942 + $0x30] sm:$0xf]
  %v956 = vld [vmem:[%s942 + $0x34] sm:$0xf]
  %v957 = vld [vmem:[%s942 + $0x38] sm:$0xf]
  %v958 = vld [vmem:[%s942 + $0x3c] sm:$0xf]
  %v959 = vld [vmem:[%s942 + $0x40] sm:$0xf]
  %v960 = vld [vmem:[%s942 + $0x44] sm:$0xf]
  %v961 = vld [vmem:[%s942 + $0x48] sm:$0xf]
  %v962 = vld [vmem:[%s942 + $0x4c] sm:$0xf]
  %v963 = vld [vmem:[%s942 + $0x50] sm:$0xf]
  %v964 = vld [vmem:[%s942 + $0x54] sm:$0xf]
  %v965 = vld [vmem:[%s942 + $0x58] sm:$0xf]
  %v966 = vld [vmem:[%s942 + $0x5c] sm:$0xf]
  %v967 = vld [vmem:[%s942 + $0x60] sm:$0xf]
  %v968 = vld [vmem:[%s942 + $0x64] sm:$0xf]
  %v969 = vld [vmem:[%s942 + $0x68] sm:$0xf]
  %v970 = vld [vmem:[%s942 + $0x6c] sm:$0xf]
  %v971 = vld [vmem:[%s942 + $0x70] sm:$0xf]
  %v972 = vld [vmem:[%s942 + $0x74] sm:$0xf]
  %v973 = vld [vmem:[%s942 + $0x78] sm:$0xf]
  %v974 = vld [vmem:[%s942 + $0x7c] sm:$0xf]
  %v975 = vld [vmem:[%s942 + $0x80] sm:$0xf]
  %v976 = vld [vmem:[%s942 + $0x84] sm:$0xf]
  %v977 = vld [vmem:[%s942 + $0x88] sm:$0xf]
  %v978 = vld [vmem:[%s942 + $0x8c] sm:$0xf]
  %v979 = vld [vmem:[%s942 + $0x90] sm:$0xf]
  %v980 = vld [vmem:[%s942 + $0x94] sm:$0xf]
  %v981 = vld [vmem:[%s942 + $0x98] sm:$0xf]
  %v982 = vld [vmem:[%s942 + $0x9c] sm:$0xf]
  %v983 = vld [vmem:[%s942 + $0xa0] sm:$0xf]
  %v984 = vld [vmem:[%s942 + $0xa4] sm:$0xf]
  %v985 = vld [vmem:[%s942 + $0xa8] sm:$0xf]
  %v986 = vld [vmem:[%s942 + $0xac] sm:$0xf]
  %v987 = vld [vmem:[%s942 + $0xb0] sm:$0xf]
  %v988 = vld [vmem:[%s942 + $0xb4] sm:$0xf]
  %v989 = vld [vmem:[%s942 + $0xb8] sm:$0xf]
  %v990 = vld [vmem:[%s942 + $0xbc] sm:$0xf]
  %v991 = vld [vmem:[%s942 + $0xc0] sm:$0xf]
  %v1041 = vunpack.c.l.b16 %v943
  %v1042 = vunpack.c.l.b16 %v944
  %v1043 = vunpack.c.l.b16 %v945
  %v1044 = vunpack.c.l.b16 %v946
  %v1045 = vunpack.c.l.b16 %v947
  %v1046 = vunpack.c.l.b16 %v948
  %v1047 = vunpack.c.l.b16 %v949
  %v1048 = vunpack.c.l.b16 %v950
  %v1049 = vunpack.c.l.b16 %v951
  %v1050 = vunpack.c.l.b16 %v952
  %v1051 = vunpack.c.l.b16 %v953
  %v1052 = vunpack.c.l.b16 %v954
  %v1053 = vunpack.c.l.b16 %v955
  %v1054 = vunpack.c.l.b16 %v956
  %v1055 = vunpack.c.l.b16 %v957
  %v1056 = vunpack.c.l.b16 %v958
  %v1057 = vunpack.c.l.b16 %v959
  %v1058 = vunpack.c.l.b16 %v960
  %v1059 = vunpack.c.l.b16 %v961
  %v1060 = vunpack.c.l.b16 %v962
  %v1061 = vunpack.c.l.b16 %v963
  %v1062 = vunpack.c.l.b16 %v964
  %v1063 = vunpack.c.l.b16 %v965
  %v1064 = vunpack.c.l.b16 %v966
  %v1065 = vunpack.c.l.b16 %v967
  %v1066 = vunpack.c.l.b16 %v968
  %v1067 = vunpack.c.l.b16 %v969
  %v1068 = vunpack.c.l.b16 %v970
  %v1069 = vunpack.c.l.b16 %v971
  %v1070 = vunpack.c.l.b16 %v972
  %v1071 = vunpack.c.l.b16 %v973
  %v1072 = vunpack.c.l.b16 %v974
  %v1073 = vunpack.c.l.b16 %v975
  %v1074 = vunpack.c.l.b16 %v976
  %v1075 = vunpack.c.l.b16 %v977
  %v1076 = vunpack.c.l.b16 %v978
  %v1077 = vunpack.c.l.b16 %v979
  %v1078 = vunpack.c.l.b16 %v980
  %v1079 = vunpack.c.l.b16 %v981
  %v1080 = vunpack.c.l.b16 %v982
  %v1081 = vunpack.c.l.b16 %v983
  %v1082 = vunpack.c.l.b16 %v984
  %v1083 = vunpack.c.l.b16 %v985
  %v1084 = vunpack.c.l.b16 %v986
  %v1085 = vunpack.c.l.b16 %v987
  %v1086 = vunpack.c.l.b16 %v988
  %v1087 = vunpack.c.l.b16 %v989
  %v1088 = vunpack.c.l.b16 %v990
  %v1089 = vunpack.c.l.b16 %v991
  %v1090 = vpack.c.b16 %v1042, %v1041
  %v1091 = vpack.c.b16 %v1044, %v1043
  %v1092 = vpack.c.b16 %v1046, %v1045
  %v1093 = vpack.c.b16 %v1048, %v1047
  %v1094 = vpack.c.b16 %v1050, %v1049
  %v1095 = vpack.c.b16 %v1052, %v1051
  %v1096 = vpack.c.b16 %v1054, %v1053
  %v1097 = vpack.c.b16 %v1056, %v1055
  %v1098 = vpack.c.b16 %v1058, %v1057
  %v1099 = vpack.c.b16 %v1060, %v1059
  %v1100 = vpack.c.b16 %v1062, %v1061
  %v1101 = vpack.c.b16 %v1064, %v1063
  %v1102 = vpack.c.b16 %v1066, %v1065
  %v1103 = vpack.c.b16 %v1068, %v1067
  %v1104 = vpack.c.b16 %v1070, %v1069
  %v1105 = vpack.c.b16 %v1072, %v1071
  %v1106 = vpack.c.b16 %v1074, %v1073
  %v1107 = vpack.c.b16 %v1076, %v1075
  %v1108 = vpack.c.b16 %v1078, %v1077
  %v1109 = vpack.c.b16 %v1080, %v1079
  %v1110 = vpack.c.b16 %v1082, %v1081
  %v1111 = vpack.c.b16 %v1084, %v1083
  %v1112 = vpack.c.b16 %v1086, %v1085
  %v1113 = vpack.c.b16 %v1088, %v1087
  %v1114 = vpack.c.b16 %v1089, %v1089
  %v1116 = vsel %vm198, %v1090, 0
  %v1119 = vsel %vm198, %v1091, 0
  %v1122 = vsel %vm198, %v1092, 0
  %v1125 = vsel %vm198, %v1093, 0
  %v1128 = vsel %vm198, %v1094, 0
  %v1131 = vsel %vm198, %v1095, 0
  %v1134 = vsel %vm198, %v1096, 0
  %v1137 = vsel %vm198, %v1097, 0
  %v1140 = vsel %vm198, %v1098, 0
  %v1143 = vsel %vm198, %v1099, 0
  %v1146 = vsel %vm198, %v1100, 0
  %v1149 = vsel %vm198, %v1101, 0
  %v1152 = vsel %vm198, %v1102, 0
  %v1155 = vsel %vm198, %v1103, 0
  %v1158 = vsel %vm198, %v1104, 0
  %v1161 = vsel %vm198, %v1105, 0
  %v1164 = vsel %vm198, %v1106, 0
  %v1167 = vsel %vm198, %v1107, 0
  %v1170 = vsel %vm198, %v1108, 0
  %v1173 = vsel %vm198, %v1109, 0
  %v1176 = vsel %vm198, %v1110, 0
  %v1179 = vsel %vm198, %v1111, 0
  %v1182 = vsel %vm198, %v1112, 0
  %v1185 = vsel %vm198, %v1113, 0
  %v1188 = vsel %vm198, %v1114, 0
  %1190 = vmatpush.bf16.msra.mxu0 0
  %1191 = vmatpush.bf16.msra.mxu0 0
  %1192 = vmatpush.bf16.msra.mxu0 0
  %1193 = vmatpush.bf16.msra.mxu0 0
  %1194 = vmatpush.bf16.msra.mxu0 0
  %1195 = vmatpush.bf16.msra.mxu0 0
  %1196 = vmatpush.bf16.msra.mxu0 0
  %1197 = vmatpush.bf16.msra.mxu0 %v279
  %1198 = vmatmul.bf16.gmra.mxu0 %v1116
  %v1199 = vpop.f32.mrf.mxu0
  %v1200 = vadd.f32 %v68, %v1199
  %v1201 = vpop.f32.mrf.mxu0
  %v1202 = vadd.f32 %v68, %v1201
  %1203 = vmatmul.bf16.gmra.mxu0 %v1119
  %v1204 = vpop.f32.mrf.mxu0
  %v1205 = vadd.f32 %v68, %v1204
  %v1206 = vpop.f32.mrf.mxu0
  %v1207 = vadd.f32 %v68, %v1206
  %1208 = vmatmul.bf16.gmra.mxu0 %v1122
  %v1209 = vpop.f32.mrf.mxu0
  %v1210 = vadd.f32 %v68, %v1209
  %v1211 = vpop.f32.mrf.mxu0
  %v1212 = vadd.f32 %v68, %v1211
  %1213 = vmatmul.bf16.gmra.mxu0 %v1125
  %v1214 = vpop.f32.mrf.mxu0
  %v1215 = vadd.f32 %v68, %v1214
  %v1216 = vpop.f32.mrf.mxu0
  %v1217 = vadd.f32 %v68, %v1216
  %1218 = vmatmul.bf16.gmra.mxu0 %v1128
  %v1219 = vpop.f32.mrf.mxu0
  %v1220 = vadd.f32 %v68, %v1219
  %v1221 = vpop.f32.mrf.mxu0
  %v1222 = vadd.f32 %v68, %v1221
  %1223 = vmatmul.bf16.gmra.mxu0 %v1131
  %v1224 = vpop.f32.mrf.mxu0
  %v1225 = vadd.f32 %v68, %v1224
  %v1226 = vpop.f32.mrf.mxu0
  %v1227 = vadd.f32 %v68, %v1226
  %1228 = vmatmul.bf16.gmra.mxu0 %v1134
  %v1229 = vpop.f32.mrf.mxu0
  %v1230 = vadd.f32 %v68, %v1229
  %v1231 = vpop.f32.mrf.mxu0
  %v1232 = vadd.f32 %v68, %v1231
  %1233 = vmatmul.bf16.gmra.mxu0 %v1137
  %v1234 = vpop.f32.mrf.mxu0
  %v1235 = vadd.f32 %v68, %v1234
  %v1236 = vpop.f32.mrf.mxu0
  %v1237 = vadd.f32 %v68, %v1236
  %1238 = vmatmul.bf16.gmra.mxu0 %v1140
  %v1239 = vpop.f32.mrf.mxu0
  %v1240 = vadd.f32 %v68, %v1239
  %v1241 = vpop.f32.mrf.mxu0
  %v1242 = vadd.f32 %v68, %v1241
  %1243 = vmatmul.bf16.gmra.mxu0 %v1143
  %v1244 = vpop.f32.mrf.mxu0
  %v1245 = vadd.f32 %v68, %v1244
  %v1246 = vpop.f32.mrf.mxu0
  %v1247 = vadd.f32 %v68, %v1246
  %1248 = vmatmul.bf16.gmra.mxu0 %v1146
  %v1249 = vpop.f32.mrf.mxu0
  %v1250 = vadd.f32 %v68, %v1249
  %v1251 = vpop.f32.mrf.mxu0
  %v1252 = vadd.f32 %v68, %v1251
  %1253 = vmatmul.bf16.gmra.mxu0 %v1149
  %v1254 = vpop.f32.mrf.mxu0
  %v1255 = vadd.f32 %v68, %v1254
  %v1256 = vpop.f32.mrf.mxu0
  %v1257 = vadd.f32 %v68, %v1256
  %1258 = vmatmul.bf16.gmra.mxu0 %v1152
  %v1259 = vpop.f32.mrf.mxu0
  %v1260 = vadd.f32 %v68, %v1259
  %v1261 = vpop.f32.mrf.mxu0
  %v1262 = vadd.f32 %v68, %v1261
  %1263 = vmatmul.bf16.gmra.mxu0 %v1155
  %v1264 = vpop.f32.mrf.mxu0
  %v1265 = vadd.f32 %v68, %v1264
  %v1266 = vpop.f32.mrf.mxu0
  %v1267 = vadd.f32 %v68, %v1266
  %1268 = vmatmul.bf16.gmra.mxu0 %v1158
  %v1269 = vpop.f32.mrf.mxu0
  %v1270 = vadd.f32 %v68, %v1269
  %v1271 = vpop.f32.mrf.mxu0
  %v1272 = vadd.f32 %v68, %v1271
  %1273 = vmatmul.bf16.gmra.mxu0 %v1161
  %v1274 = vpop.f32.mrf.mxu0
  %v1275 = vadd.f32 %v68, %v1274
  %v1276 = vpop.f32.mrf.mxu0
  %v1277 = vadd.f32 %v68, %v1276
  %1278 = vmatmul.bf16.gmra.mxu0 %v1164
  %v1279 = vpop.f32.mrf.mxu0
  %v1280 = vadd.f32 %v68, %v1279
  %v1281 = vpop.f32.mrf.mxu0
  %v1282 = vadd.f32 %v68, %v1281
  %1283 = vmatmul.bf16.gmra.mxu0 %v1167
  %v1284 = vpop.f32.mrf.mxu0
  %v1285 = vadd.f32 %v68, %v1284
  %v1286 = vpop.f32.mrf.mxu0
  %v1287 = vadd.f32 %v68, %v1286
  %1288 = vmatmul.bf16.gmra.mxu0 %v1170
  %v1289 = vpop.f32.mrf.mxu0
  %v1290 = vadd.f32 %v68, %v1289
  %v1291 = vpop.f32.mrf.mxu0
  %v1292 = vadd.f32 %v68, %v1291
  %1293 = vmatmul.bf16.gmra.mxu0 %v1173
  %v1294 = vpop.f32.mrf.mxu0
  %v1295 = vadd.f32 %v68, %v1294
  %v1296 = vpop.f32.mrf.mxu0
  %v1297 = vadd.f32 %v68, %v1296
  %1298 = vmatmul.bf16.gmra.mxu0 %v1176
  %v1299 = vpop.f32.mrf.mxu0
  %v1300 = vadd.f32 %v68, %v1299
  %v1301 = vpop.f32.mrf.mxu0
  %v1302 = vadd.f32 %v68, %v1301
  %1303 = vmatmul.bf16.gmra.mxu0 %v1179
  %v1304 = vpop.f32.mrf.mxu0
  %v1305 = vadd.f32 %v68, %v1304
  %v1306 = vpop.f32.mrf.mxu0
  %v1307 = vadd.f32 %v68, %v1306
  %1308 = vmatmul.bf16.gmra.mxu0 %v1182
  %v1309 = vpop.f32.mrf.mxu0
  %v1310 = vadd.f32 %v68, %v1309
  %v1311 = vpop.f32.mrf.mxu0
  %v1312 = vadd.f32 %v68, %v1311
  %1313 = vmatmul.bf16.gmra.mxu0 %v1185
  %v1314 = vpop.f32.mrf.mxu0
  %v1315 = vadd.f32 %v68, %v1314
  %v1316 = vpop.f32.mrf.mxu0
  %v1317 = vadd.f32 %v68, %v1316
  %1318 = vmatmul.bf16.gmra.mxu0 %v1188
  %v1319 = vpop.f32.mrf.mxu0
  %v1320 = vadd.f32 %v68, %v1319
  %v1321 = vpop.f32.mrf.mxu0
  %1322 = vdwg.mxu0
  %v1323 = vmax.f32 %v1200, 0.0
  %v1324 = vmax.f32 %v1202, 0.0
  %v1325 = vmax.f32 %v1205, 0.0
  %v1326 = vmax.f32 %v1207, 0.0
  %v1327 = vmax.f32 %v1210, 0.0
  %v1328 = vmax.f32 %v1212, 0.0
  %v1329 = vmax.f32 %v1215, 0.0
  %v1330 = vmax.f32 %v1217, 0.0
  %v1331 = vmax.f32 %v1220, 0.0
  %v1332 = vmax.f32 %v1222, 0.0
  %v1333 = vmax.f32 %v1225, 0.0
  %v1334 = vmax.f32 %v1227, 0.0
  %v1335 = vmax.f32 %v1230, 0.0
  %v1336 = vmax.f32 %v1232, 0.0
  %v1337 = vmax.f32 %v1235, 0.0
  %v1338 = vmax.f32 %v1237, 0.0
  %v1339 = vmax.f32 %v1240, 0.0
  %v1340 = vmax.f32 %v1242, 0.0
  %v1341 = vmax.f32 %v1245, 0.0
  %v1342 = vmax.f32 %v1247, 0.0
  %v1343 = vmax.f32 %v1250, 0.0
  %v1344 = vmax.f32 %v1252, 0.0
  %v1345 = vmax.f32 %v1255, 0.0
  %v1346 = vmax.f32 %v1257, 0.0
  %v1347 = vmax.f32 %v1260, 0.0
  %v1348 = vmax.f32 %v1262, 0.0
  %v1349 = vmax.f32 %v1265, 0.0
  %v1350 = vmax.f32 %v1267, 0.0
  %v1351 = vmax.f32 %v1270, 0.0
  %v1352 = vmax.f32 %v1272, 0.0
  %v1353 = vmax.f32 %v1275, 0.0
  %v1354 = vmax.f32 %v1277, 0.0
  %v1355 = vmax.f32 %v1280, 0.0
  %v1356 = vmax.f32 %v1282, 0.0
  %v1357 = vmax.f32 %v1285, 0.0
  %v1358 = vmax.f32 %v1287, 0.0
  %v1359 = vmax.f32 %v1290, 0.0
  %v1360 = vmax.f32 %v1292, 0.0
  %v1361 = vmax.f32 %v1295, 0.0
  %v1362 = vmax.f32 %v1297, 0.0
  %v1363 = vmax.f32 %v1300, 0.0
  %v1364 = vmax.f32 %v1302, 0.0
  %v1365 = vmax.f32 %v1305, 0.0
  %v1366 = vmax.f32 %v1307, 0.0
  %v1367 = vmax.f32 %v1310, 0.0
  %v1368 = vmax.f32 %v1312, 0.0
  %v1369 = vmax.f32 %v1315, 0.0
  %v1370 = vmax.f32 %v1317, 0.0
  %v1371 = vmax.f32 %v1320, 0.0
  %s1372 = scalar_lea.vmem %s0, 588
  %v1373 = vld [vmem:[%s1372] sm:$0xf]
  %v1374 = vld [vmem:[%s1372 + $0x4] sm:$0xf]
  %v1375 = vld [vmem:[%s1372 + $0x8] sm:$0xf]
  %v1376 = vld [vmem:[%s1372 + $0xc] sm:$0xf]
  %v1377 = vld [vmem:[%s1372 + $0x10] sm:$0xf]
  %v1378 = vld [vmem:[%s1372 + $0x14] sm:$0xf]
  %v1379 = vld [vmem:[%s1372 + $0x18] sm:$0xf]
  %v1380 = vld [vmem:[%s1372 + $0x1c] sm:$0xf]
  %v1381 = vld [vmem:[%s1372 + $0x20] sm:$0xf]
  %v1382 = vld [vmem:[%s1372 + $0x24] sm:$0xf]
  %v1383 = vld [vmem:[%s1372 + $0x28] sm:$0xf]
  %v1384 = vld [vmem:[%s1372 + $0x2c] sm:$0xf]
  %v1385 = vld [vmem:[%s1372 + $0x30] sm:$0xf]
  %v1386 = vld [vmem:[%s1372 + $0x34] sm:$0xf]
  %v1387 = vld [vmem:[%s1372 + $0x38] sm:$0xf]
  %v1388 = vld [vmem:[%s1372 + $0x3c] sm:$0xf]
  %v1389 = vld [vmem:[%s1372 + $0x40] sm:$0xf]
  %v1390 = vld [vmem:[%s1372 + $0x44] sm:$0xf]
  %v1391 = vld [vmem:[%s1372 + $0x48] sm:$0xf]
  %v1392 = vld [vmem:[%s1372 + $0x4c] sm:$0xf]
  %v1393 = vld [vmem:[%s1372 + $0x50] sm:$0xf]
  %v1394 = vld [vmem:[%s1372 + $0x54] sm:$0xf]
  %v1395 = vld [vmem:[%s1372 + $0x58] sm:$0xf]
  %v1396 = vld [vmem:[%s1372 + $0x5c] sm:$0xf]
  %v1397 = vld [vmem:[%s1372 + $0x60] sm:$0xf]
  %v1398 = vld [vmem:[%s1372 + $0x64] sm:$0xf]
  %v1399 = vld [vmem:[%s1372 + $0x68] sm:$0xf]
  %v1400 = vld [vmem:[%s1372 + $0x6c] sm:$0xf]
  %v1401 = vld [vmem:[%s1372 + $0x70] sm:$0xf]
  %v1402 = vld [vmem:[%s1372 + $0x74] sm:$0xf]
  %v1403 = vld [vmem:[%s1372 + $0x78] sm:$0xf]
  %v1404 = vld [vmem:[%s1372 + $0x7c] sm:$0xf]
  %v1405 = vld [vmem:[%s1372 + $0x80] sm:$0xf]
  %v1406 = vld [vmem:[%s1372 + $0x84] sm:$0xf]
  %v1407 = vld [vmem:[%s1372 + $0x88] sm:$0xf]
  %v1408 = vld [vmem:[%s1372 + $0x8c] sm:$0xf]
  %v1409 = vld [vmem:[%s1372 + $0x90] sm:$0xf]
  %v1410 = vld [vmem:[%s1372 + $0x94] sm:$0xf]
  %v1411 = vld [vmem:[%s1372 + $0x98] sm:$0xf]
  %v1412 = vld [vmem:[%s1372 + $0x9c] sm:$0xf]
  %v1413 = vld [vmem:[%s1372 + $0xa0] sm:$0xf]
  %v1414 = vld [vmem:[%s1372 + $0xa4] sm:$0xf]
  %v1415 = vld [vmem:[%s1372 + $0xa8] sm:$0xf]
  %v1416 = vld [vmem:[%s1372 + $0xac] sm:$0xf]
  %v1417 = vld [vmem:[%s1372 + $0xb0] sm:$0xf]
  %v1418 = vld [vmem:[%s1372 + $0xb4] sm:$0xf]
  %v1419 = vld [vmem:[%s1372 + $0xb8] sm:$0xf]
  %v1420 = vld [vmem:[%s1372 + $0xbc] sm:$0xf]
  %v1421 = vld [vmem:[%s1372 + $0xc0] sm:$0xf]
  %v1471 = vunpack.c.l.b16 %v1373
  %v1472 = vunpack.c.l.b16 %v1374
  %v1473 = vunpack.c.l.b16 %v1375
  %v1474 = vunpack.c.l.b16 %v1376
  %v1475 = vunpack.c.l.b16 %v1377
  %v1476 = vunpack.c.l.b16 %v1378
  %v1477 = vunpack.c.l.b16 %v1379
  %v1478 = vunpack.c.l.b16 %v1380
  %v1479 = vunpack.c.l.b16 %v1381
  %v1480 = vunpack.c.l.b16 %v1382
  %v1481 = vunpack.c.l.b16 %v1383
  %v1482 = vunpack.c.l.b16 %v1384
  %v1483 = vunpack.c.l.b16 %v1385
  %v1484 = vunpack.c.l.b16 %v1386
  %v1485 = vunpack.c.l.b16 %v1387
  %v1486 = vunpack.c.l.b16 %v1388
  %v1487 = vunpack.c.l.b16 %v1389
  %v1488 = vunpack.c.l.b16 %v1390
  %v1489 = vunpack.c.l.b16 %v1391
  %v1490 = vunpack.c.l.b16 %v1392
  %v1491 = vunpack.c.l.b16 %v1393
  %v1492 = vunpack.c.l.b16 %v1394
  %v1493 = vunpack.c.l.b16 %v1395
  %v1494 = vunpack.c.l.b16 %v1396
  %v1495 = vunpack.c.l.b16 %v1397
  %v1496 = vunpack.c.l.b16 %v1398
  %v1497 = vunpack.c.l.b16 %v1399
  %v1498 = vunpack.c.l.b16 %v1400
  %v1499 = vunpack.c.l.b16 %v1401
  %v1500 = vunpack.c.l.b16 %v1402
  %v1501 = vunpack.c.l.b16 %v1403
  %v1502 = vunpack.c.l.b16 %v1404
  %v1503 = vunpack.c.l.b16 %v1405
  %v1504 = vunpack.c.l.b16 %v1406
  %v1505 = vunpack.c.l.b16 %v1407
  %v1506 = vunpack.c.l.b16 %v1408
  %v1507 = vunpack.c.l.b16 %v1409
  %v1508 = vunpack.c.l.b16 %v1410
  %v1509 = vunpack.c.l.b16 %v1411
  %v1510 = vunpack.c.l.b16 %v1412
  %v1511 = vunpack.c.l.b16 %v1413
  %v1512 = vunpack.c.l.b16 %v1414
  %v1513 = vunpack.c.l.b16 %v1415
  %v1514 = vunpack.c.l.b16 %v1416
  %v1515 = vunpack.c.l.b16 %v1417
  %v1516 = vunpack.c.l.b16 %v1418
  %v1517 = vunpack.c.l.b16 %v1419
  %v1518 = vunpack.c.l.b16 %v1420
  %v1519 = vunpack.c.l.b16 %v1421
  %v1520 = vpack.c.b16 %v1472, %v1471
  %v1521 = vpack.c.b16 %v1474, %v1473
  %v1522 = vpack.c.b16 %v1476, %v1475
  %v1523 = vpack.c.b16 %v1478, %v1477
  %v1524 = vpack.c.b16 %v1480, %v1479
  %v1525 = vpack.c.b16 %v1482, %v1481
  %v1526 = vpack.c.b16 %v1484, %v1483
  %v1527 = vpack.c.b16 %v1486, %v1485
  %v1528 = vpack.c.b16 %v1488, %v1487
  %v1529 = vpack.c.b16 %v1490, %v1489
  %v1530 = vpack.c.b16 %v1492, %v1491
  %v1531 = vpack.c.b16 %v1494, %v1493
  %v1532 = vpack.c.b16 %v1496, %v1495
  %v1533 = vpack.c.b16 %v1498, %v1497
  %v1534 = vpack.c.b16 %v1500, %v1499
  %v1535 = vpack.c.b16 %v1502, %v1501
  %v1536 = vpack.c.b16 %v1504, %v1503
  %v1537 = vpack.c.b16 %v1506, %v1505
  %v1538 = vpack.c.b16 %v1508, %v1507
  %v1539 = vpack.c.b16 %v1510, %v1509
  %v1540 = vpack.c.b16 %v1512, %v1511
  %v1541 = vpack.c.b16 %v1514, %v1513
  %v1542 = vpack.c.b16 %v1516, %v1515
  %v1543 = vpack.c.b16 %v1518, %v1517
  %v1544 = vpack.c.b16 %v1519, %v1519
  %v1546 = vsel %vm198, %v1520, 0
  %v1549 = vsel %vm198, %v1521, 0
  %v1552 = vsel %vm198, %v1522, 0
  %v1555 = vsel %vm198, %v1523, 0
  %v1558 = vsel %vm198, %v1524, 0
  %v1561 = vsel %vm198, %v1525, 0
  %v1564 = vsel %vm198, %v1526, 0
  %v1567 = vsel %vm198, %v1527, 0
  %v1570 = vsel %vm198, %v1528, 0
  %v1573 = vsel %vm198, %v1529, 0
  %v1576 = vsel %vm198, %v1530, 0
  %v1579 = vsel %vm198, %v1531, 0
  %v1582 = vsel %vm198, %v1532, 0
  %v1585 = vsel %vm198, %v1533, 0
  %v1588 = vsel %vm198, %v1534, 0
  %v1591 = vsel %vm198, %v1535, 0
  %v1594 = vsel %vm198, %v1536, 0
  %v1597 = vsel %vm198, %v1537, 0
  %v1600 = vsel %vm198, %v1538, 0
  %v1603 = vsel %vm198, %v1539, 0
  %v1606 = vsel %vm198, %v1540, 0
  %v1609 = vsel %vm198, %v1541, 0
  %v1612 = vsel %vm198, %v1542, 0
  %v1615 = vsel %vm198, %v1543, 0
  %v1618 = vsel %vm198, %v1544, 0
  %1620 = vmatpush.bf16.msra.mxu0 0
  %1621 = vmatpush.bf16.msra.mxu0 0
  %1622 = vmatpush.bf16.msra.mxu0 0
  %1623 = vmatpush.bf16.msra.mxu0 0
  %1624 = vmatpush.bf16.msra.mxu0 0
  %1625 = vmatpush.bf16.msra.mxu0 0
  %1626 = vmatpush.bf16.msra.mxu0 0
  %1627 = vmatpush.bf16.msra.mxu0 %v279
  %1628 = vmatmul.bf16.gmra.mxu0 %v1546
  %v1629 = vpop.f32.mrf.mxu0
  %v1630 = vadd.f32 %v68, %v1629
  %v1631 = vpop.f32.mrf.mxu0
  %v1632 = vadd.f32 %v68, %v1631
  %1633 = vmatmul.bf16.gmra.mxu0 %v1549
  %v1634 = vpop.f32.mrf.mxu0
  %v1635 = vadd.f32 %v68, %v1634
  %v1636 = vpop.f32.mrf.mxu0
  %v1637 = vadd.f32 %v68, %v1636
  %1638 = vmatmul.bf16.gmra.mxu0 %v1552
  %v1639 = vpop.f32.mrf.mxu0
  %v1640 = vadd.f32 %v68, %v1639
  %v1641 = vpop.f32.mrf.mxu0
  %v1642 = vadd.f32 %v68, %v1641
  %1643 = vmatmul.bf16.gmra.mxu0 %v1555
  %v1644 = vpop.f32.mrf.mxu0
  %v1645 = vadd.f32 %v68, %v1644
  %v1646 = vpop.f32.mrf.mxu0
  %v1647 = vadd.f32 %v68, %v1646
  %1648 = vmatmul.bf16.gmra.mxu0 %v1558
  %v1649 = vpop.f32.mrf.mxu0
  %v1650 = vadd.f32 %v68, %v1649
  %v1651 = vpop.f32.mrf.mxu0
  %v1652 = vadd.f32 %v68, %v1651
  %1653 = vmatmul.bf16.gmra.mxu0 %v1561
  %v1654 = vpop.f32.mrf.mxu0
  %v1655 = vadd.f32 %v68, %v1654
  %v1656 = vpop.f32.mrf.mxu0
  %v1657 = vadd.f32 %v68, %v1656
  %1658 = vmatmul.bf16.gmra.mxu0 %v1564
  %v1659 = vpop.f32.mrf.mxu0
  %v1660 = vadd.f32 %v68, %v1659
  %v1661 = vpop.f32.mrf.mxu0
  %v1662 = vadd.f32 %v68, %v1661
  %1663 = vmatmul.bf16.gmra.mxu0 %v1567
  %v1664 = vpop.f32.mrf.mxu0
  %v1665 = vadd.f32 %v68, %v1664
  %v1666 = vpop.f32.mrf.mxu0
  %v1667 = vadd.f32 %v68, %v1666
  %1668 = vmatmul.bf16.gmra.mxu0 %v1570
  %v1669 = vpop.f32.mrf.mxu0
  %v1670 = vadd.f32 %v68, %v1669
  %v1671 = vpop.f32.mrf.mxu0
  %v1672 = vadd.f32 %v68, %v1671
  %1673 = vmatmul.bf16.gmra.mxu0 %v1573
  %v1674 = vpop.f32.mrf.mxu0
  %v1675 = vadd.f32 %v68, %v1674
  %v1676 = vpop.f32.mrf.mxu0
  %v1677 = vadd.f32 %v68, %v1676
  %1678 = vmatmul.bf16.gmra.mxu0 %v1576
  %v1679 = vpop.f32.mrf.mxu0
  %v1680 = vadd.f32 %v68, %v1679
  %v1681 = vpop.f32.mrf.mxu0
  %v1682 = vadd.f32 %v68, %v1681
  %1683 = vmatmul.bf16.gmra.mxu0 %v1579
  %v1684 = vpop.f32.mrf.mxu0
  %v1685 = vadd.f32 %v68, %v1684
  %v1686 = vpop.f32.mrf.mxu0
  %v1687 = vadd.f32 %v68, %v1686
  %1688 = vmatmul.bf16.gmra.mxu0 %v1582
  %v1689 = vpop.f32.mrf.mxu0
  %v1690 = vadd.f32 %v68, %v1689
  %v1691 = vpop.f32.mrf.mxu0
  %v1692 = vadd.f32 %v68, %v1691
  %1693 = vmatmul.bf16.gmra.mxu0 %v1585
  %v1694 = vpop.f32.mrf.mxu0
  %v1695 = vadd.f32 %v68, %v1694
  %v1696 = vpop.f32.mrf.mxu0
  %v1697 = vadd.f32 %v68, %v1696
  %1698 = vmatmul.bf16.gmra.mxu0 %v1588
  %v1699 = vpop.f32.mrf.mxu0
  %v1700 = vadd.f32 %v68, %v1699
  %v1701 = vpop.f32.mrf.mxu0
  %v1702 = vadd.f32 %v68, %v1701
  %1703 = vmatmul.bf16.gmra.mxu0 %v1591
  %v1704 = vpop.f32.mrf.mxu0
  %v1705 = vadd.f32 %v68, %v1704
  %v1706 = vpop.f32.mrf.mxu0
  %v1707 = vadd.f32 %v68, %v1706
  %1708 = vmatmul.bf16.gmra.mxu0 %v1594
  %v1709 = vpop.f32.mrf.mxu0
  %v1710 = vadd.f32 %v68, %v1709
  %v1711 = vpop.f32.mrf.mxu0
  %v1712 = vadd.f32 %v68, %v1711
  %1713 = vmatmul.bf16.gmra.mxu0 %v1597
  %v1714 = vpop.f32.mrf.mxu0
  %v1715 = vadd.f32 %v68, %v1714
  %v1716 = vpop.f32.mrf.mxu0
  %v1717 = vadd.f32 %v68, %v1716
  %1718 = vmatmul.bf16.gmra.mxu0 %v1600
  %v1719 = vpop.f32.mrf.mxu0
  %v1720 = vadd.f32 %v68, %v1719
  %v1721 = vpop.f32.mrf.mxu0
  %v1722 = vadd.f32 %v68, %v1721
  %1723 = vmatmul.bf16.gmra.mxu0 %v1603
  %v1724 = vpop.f32.mrf.mxu0
  %v1725 = vadd.f32 %v68, %v1724
  %v1726 = vpop.f32.mrf.mxu0
  %v1727 = vadd.f32 %v68, %v1726
  %1728 = vmatmul.bf16.gmra.mxu0 %v1606
  %v1729 = vpop.f32.mrf.mxu0
  %v1730 = vadd.f32 %v68, %v1729
  %v1731 = vpop.f32.mrf.mxu0
  %v1732 = vadd.f32 %v68, %v1731
  %1733 = vmatmul.bf16.gmra.mxu0 %v1609
  %v1734 = vpop.f32.mrf.mxu0
  %v1735 = vadd.f32 %v68, %v1734
  %v1736 = vpop.f32.mrf.mxu0
  %v1737 = vadd.f32 %v68, %v1736
  %1738 = vmatmul.bf16.gmra.mxu0 %v1612
  %v1739 = vpop.f32.mrf.mxu0
  %v1740 = vadd.f32 %v68, %v1739
  %v1741 = vpop.f32.mrf.mxu0
  %v1742 = vadd.f32 %v68, %v1741
  %1743 = vmatmul.bf16.gmra.mxu0 %v1615
  %v1744 = vpop.f32.mrf.mxu0
  %v1745 = vadd.f32 %v68, %v1744
  %v1746 = vpop.f32.mrf.mxu0
  %v1747 = vadd.f32 %v68, %v1746
  %1748 = vmatmul.bf16.gmra.mxu0 %v1618
  %v1749 = vpop.f32.mrf.mxu0
  %v1750 = vadd.f32 %v68, %v1749
  %v1751 = vpop.f32.mrf.mxu0
  %1752 = vdwg.mxu0
  %v1753 = vmax.f32 %v1630, 0.0
  %v1754 = vmax.f32 %v1632, 0.0
  %v1755 = vmax.f32 %v1635, 0.0
  %v1756 = vmax.f32 %v1637, 0.0
  %v1757 = vmax.f32 %v1640, 0.0
  %v1758 = vmax.f32 %v1642, 0.0
  %v1759 = vmax.f32 %v1645, 0.0
  %v1760 = vmax.f32 %v1647, 0.0
  %v1761 = vmax.f32 %v1650, 0.0
  %v1762 = vmax.f32 %v1652, 0.0
  %v1763 = vmax.f32 %v1655, 0.0
  %v1764 = vmax.f32 %v1657, 0.0
  %v1765 = vmax.f32 %v1660, 0.0
  %v1766 = vmax.f32 %v1662, 0.0
  %v1767 = vmax.f32 %v1665, 0.0
  %v1768 = vmax.f32 %v1667, 0.0
  %v1769 = vmax.f32 %v1670, 0.0
  %v1770 = vmax.f32 %v1672, 0.0
  %v1771 = vmax.f32 %v1675, 0.0
  %v1772 = vmax.f32 %v1677, 0.0
  %v1773 = vmax.f32 %v1680, 0.0
  %v1774 = vmax.f32 %v1682, 0.0
  %v1775 = vmax.f32 %v1685, 0.0
  %v1776 = vmax.f32 %v1687, 0.0
  %v1777 = vmax.f32 %v1690, 0.0
  %v1778 = vmax.f32 %v1692, 0.0
  %v1779 = vmax.f32 %v1695, 0.0
  %v1780 = vmax.f32 %v1697, 0.0
  %v1781 = vmax.f32 %v1700, 0.0
  %v1782 = vmax.f32 %v1702, 0.0
  %v1783 = vmax.f32 %v1705, 0.0
  %v1784 = vmax.f32 %v1707, 0.0
  %v1785 = vmax.f32 %v1710, 0.0
  %v1786 = vmax.f32 %v1712, 0.0
  %v1787 = vmax.f32 %v1715, 0.0
  %v1788 = vmax.f32 %v1717, 0.0
  %v1789 = vmax.f32 %v1720, 0.0
  %v1790 = vmax.f32 %v1722, 0.0
  %v1791 = vmax.f32 %v1725, 0.0
  %v1792 = vmax.f32 %v1727, 0.0
  %v1793 = vmax.f32 %v1730, 0.0
  %v1794 = vmax.f32 %v1732, 0.0
  %v1795 = vmax.f32 %v1735, 0.0
  %v1796 = vmax.f32 %v1737, 0.0
  %v1797 = vmax.f32 %v1740, 0.0
  %v1798 = vmax.f32 %v1742, 0.0
  %v1799 = vmax.f32 %v1745, 0.0
  %v1800 = vmax.f32 %v1747, 0.0
  %v1801 = vmax.f32 %v1750, 0.0
  %v1802 = vmax.f32 %v1323, %v1753
  %v1803 = vmax.f32 %v1324, %v1754
  %v1804 = vmax.f32 %v1325, %v1755
  %v1805 = vmax.f32 %v1326, %v1756
  %v1806 = vmax.f32 %v1327, %v1757
  %v1807 = vmax.f32 %v1328, %v1758
  %v1808 = vmax.f32 %v1329, %v1759
  %v1809 = vmax.f32 %v1330, %v1760
  %v1810 = vmax.f32 %v1331, %v1761
  %v1811 = vmax.f32 %v1332, %v1762
  %v1812 = vmax.f32 %v1333, %v1763
  %v1813 = vmax.f32 %v1334, %v1764
  %v1814 = vmax.f32 %v1335, %v1765
  %v1815 = vmax.f32 %v1336, %v1766
  %v1816 = vmax.f32 %v1337, %v1767
  %v1817 = vmax.f32 %v1338, %v1768
  %v1818 = vmax.f32 %v1339, %v1769
  %v1819 = vmax.f32 %v1340, %v1770
  %v1820 = vmax.f32 %v1341, %v1771
  %v1821 = vmax.f32 %v1342, %v1772
  %v1822 = vmax.f32 %v1343, %v1773
  %v1823 = vmax.f32 %v1344, %v1774
  %v1824 = vmax.f32 %v1345, %v1775
  %v1825 = vmax.f32 %v1346, %v1776
  %v1826 = vmax.f32 %v1347, %v1777
  %v1827 = vmax.f32 %v1348, %v1778
  %v1828 = vmax.f32 %v1349, %v1779
  %v1829 = vmax.f32 %v1350, %v1780
  %v1830 = vmax.f32 %v1351, %v1781
  %v1831 = vmax.f32 %v1352, %v1782
  %v1832 = vmax.f32 %v1353, %v1783
  %v1833 = vmax.f32 %v1354, %v1784
  %v1834 = vmax.f32 %v1355, %v1785
  %v1835 = vmax.f32 %v1356, %v1786
  %v1836 = vmax.f32 %v1357, %v1787
  %v1837 = vmax.f32 %v1358, %v1788
  %v1838 = vmax.f32 %v1359, %v1789
  %v1839 = vmax.f32 %v1360, %v1790
  %v1840 = vmax.f32 %v1361, %v1791
  %v1841 = vmax.f32 %v1362, %v1792
  %v1842 = vmax.f32 %v1363, %v1793
  %v1843 = vmax.f32 %v1364, %v1794
  %v1844 = vmax.f32 %v1365, %v1795
  %v1845 = vmax.f32 %v1366, %v1796
  %v1846 = vmax.f32 %v1367, %v1797
  %v1847 = vmax.f32 %v1368, %v1798
  %v1848 = vmax.f32 %v1369, %v1799
  %v1849 = vmax.f32 %v1370, %v1800
  %v1850 = vmax.f32 %v1371, %v1801
  %v1851 = vmax.f32 %v893, %v1802
  %v1852 = vmax.f32 %v894, %v1803
  %v1853 = vmax.f32 %v895, %v1804
  %v1854 = vmax.f32 %v896, %v1805
  %v1855 = vmax.f32 %v897, %v1806
  %v1856 = vmax.f32 %v898, %v1807
  %v1857 = vmax.f32 %v899, %v1808
  %v1858 = vmax.f32 %v900, %v1809
  %v1859 = vmax.f32 %v901, %v1810
  %v1860 = vmax.f32 %v902, %v1811
  %v1861 = vmax.f32 %v903, %v1812
  %v1862 = vmax.f32 %v904, %v1813
  %v1863 = vmax.f32 %v905, %v1814
  %v1864 = vmax.f32 %v906, %v1815
  %v1865 = vmax.f32 %v907, %v1816
  %v1866 = vmax.f32 %v908, %v1817
  %v1867 = vmax.f32 %v909, %v1818
  %v1868 = vmax.f32 %v910, %v1819
  %v1869 = vmax.f32 %v911, %v1820
  %v1870 = vmax.f32 %v912, %v1821
  %v1871 = vmax.f32 %v913, %v1822
  %v1872 = vmax.f32 %v914, %v1823
  %v1873 = vmax.f32 %v915, %v1824
  %v1874 = vmax.f32 %v916, %v1825
  %v1875 = vmax.f32 %v917, %v1826
  %v1876 = vmax.f32 %v918, %v1827
  %v1877 = vmax.f32 %v919, %v1828
  %v1878 = vmax.f32 %v920, %v1829
  %v1879 = vmax.f32 %v921, %v1830
  %v1880 = vmax.f32 %v922, %v1831
  %v1881 = vmax.f32 %v923, %v1832
  %v1882 = vmax.f32 %v924, %v1833
  %v1883 = vmax.f32 %v925, %v1834
  %v1884 = vmax.f32 %v926, %v1835
  %v1885 = vmax.f32 %v927, %v1836
  %v1886 = vmax.f32 %v928, %v1837
  %v1887 = vmax.f32 %v929, %v1838
  %v1888 = vmax.f32 %v930, %v1839
  %v1889 = vmax.f32 %v931, %v1840
  %v1890 = vmax.f32 %v932, %v1841
  %v1891 = vmax.f32 %v933, %v1842
  %v1892 = vmax.f32 %v934, %v1843
  %v1893 = vmax.f32 %v935, %v1844
  %v1894 = vmax.f32 %v936, %v1845
  %v1895 = vmax.f32 %v937, %v1846
  %v1896 = vmax.f32 %v938, %v1847
  %v1897 = vmax.f32 %v939, %v1848
  %v1898 = vmax.f32 %v940, %v1849
  %v1899 = vmax.f32 %v941, %v1850
  %v1900 = vpack.c.bf16 %v1851, %v1851
  %v1901 = vpack.c.bf16 %v1852, %v1852
  %v1902 = vpack.c.bf16 %v1853, %v1853
  %v1903 = vpack.c.bf16 %v1854, %v1854
  %v1904 = vpack.c.bf16 %v1855, %v1855
  %v1905 = vpack.c.bf16 %v1856, %v1856
  %v1906 = vpack.c.bf16 %v1857, %v1857
  %v1907 = vpack.c.bf16 %v1858, %v1858
  %v1908 = vpack.c.bf16 %v1859, %v1859
  %v1909 = vpack.c.bf16 %v1860, %v1860
  %v1910 = vpack.c.bf16 %v1861, %v1861
  %v1911 = vpack.c.bf16 %v1862, %v1862
  %v1912 = vpack.c.bf16 %v1863, %v1863
  %v1913 = vpack.c.bf16 %v1864, %v1864
  %v1914 = vpack.c.bf16 %v1865, %v1865
  %v1915 = vpack.c.bf16 %v1866, %v1866
  %v1916 = vpack.c.bf16 %v1867, %v1867
  %v1917 = vpack.c.bf16 %v1868, %v1868
  %v1918 = vpack.c.bf16 %v1869, %v1869
  %v1919 = vpack.c.bf16 %v1870, %v1870
  %v1920 = vpack.c.bf16 %v1871, %v1871
  %v1921 = vpack.c.bf16 %v1872, %v1872
  %v1922 = vpack.c.bf16 %v1873, %v1873
  %v1923 = vpack.c.bf16 %v1874, %v1874
  %v1924 = vpack.c.bf16 %v1875, %v1875
  %v1925 = vpack.c.bf16 %v1876, %v1876
  %v1926 = vpack.c.bf16 %v1877, %v1877
  %v1927 = vpack.c.bf16 %v1878, %v1878
  %v1928 = vpack.c.bf16 %v1879, %v1879
  %v1929 = vpack.c.bf16 %v1880, %v1880
  %v1930 = vpack.c.bf16 %v1881, %v1881
  %v1931 = vpack.c.bf16 %v1882, %v1882
  %v1932 = vpack.c.bf16 %v1883, %v1883
  %v1933 = vpack.c.bf16 %v1884, %v1884
  %v1934 = vpack.c.bf16 %v1885, %v1885
  %v1935 = vpack.c.bf16 %v1886, %v1886
  %v1936 = vpack.c.bf16 %v1887, %v1887
  %v1937 = vpack.c.bf16 %v1888, %v1888
  %v1938 = vpack.c.bf16 %v1889, %v1889
  %v1939 = vpack.c.bf16 %v1890, %v1890
  %v1940 = vpack.c.bf16 %v1891, %v1891
  %v1941 = vpack.c.bf16 %v1892, %v1892
  %v1942 = vpack.c.bf16 %v1893, %v1893
  %v1943 = vpack.c.bf16 %v1894, %v1894
  %v1944 = vpack.c.bf16 %v1895, %v1895
  %v1945 = vpack.c.bf16 %v1896, %v1896
  %v1946 = vpack.c.bf16 %v1897, %v1897
  %v1947 = vpack.c.bf16 %v1898, %v1898
  %v1948 = vpack.c.bf16 %v1899, %v1899
  %vm1949 = vcmask 257024
  %1950 = vst.msk [vmem:[%s3] sm:$0xf] %vm1949, %v1900
  %1951 = vst.msk [vmem:[%s3 + $0x4] sm:$0xf] %vm1949, %v1901
  %1952 = vst.msk [vmem:[%s3 + $0x8] sm:$0xf] %vm1949, %v1902
  %1953 = vst.msk [vmem:[%s3 + $0xc] sm:$0xf] %vm1949, %v1903
  %1954 = vst.msk [vmem:[%s3 + $0x10] sm:$0xf] %vm1949, %v1904
  %1955 = vst.msk [vmem:[%s3 + $0x14] sm:$0xf] %vm1949, %v1905
  %1956 = vst.msk [vmem:[%s3 + $0x18] sm:$0xf] %vm1949, %v1906
  %1957 = vst.msk [vmem:[%s3 + $0x1c] sm:$0xf] %vm1949, %v1907
  %1958 = vst.msk [vmem:[%s3 + $0x20] sm:$0xf] %vm1949, %v1908
  %1959 = vst.msk [vmem:[%s3 + $0x24] sm:$0xf] %vm1949, %v1909
  %1960 = vst.msk [vmem:[%s3 + $0x28] sm:$0xf] %vm1949, %v1910
  %1961 = vst.msk [vmem:[%s3 + $0x2c] sm:$0xf] %vm1949, %v1911
  %1962 = vst.msk [vmem:[%s3 + $0x30] sm:$0xf] %vm1949, %v1912
  %1963 = vst.msk [vmem:[%s3 + $0x34] sm:$0xf] %vm1949, %v1913
  %1964 = vst.msk [vmem:[%s3 + $0x38] sm:$0xf] %vm1949, %v1914
  %1965 = vst.msk [vmem:[%s3 + $0x3c] sm:$0xf] %vm1949, %v1915
  %1966 = vst.msk [vmem:[%s3 + $0x40] sm:$0xf] %vm1949, %v1916
  %1967 = vst.msk [vmem:[%s3 + $0x44] sm:$0xf] %vm1949, %v1917
  %1968 = vst.msk [vmem:[%s3 + $0x48] sm:$0xf] %vm1949, %v1918
  %1969 = vst.msk [vmem:[%s3 + $0x4c] sm:$0xf] %vm1949, %v1919
  %1970 = vst.msk [vmem:[%s3 + $0x50] sm:$0xf] %vm1949, %v1920
  %1971 = vst.msk [vmem:[%s3 + $0x54] sm:$0xf] %vm1949, %v1921
  %1972 = vst.msk [vmem:[%s3 + $0x58] sm:$0xf] %vm1949, %v1922
  %1973 = vst.msk [vmem:[%s3 + $0x5c] sm:$0xf] %vm1949, %v1923
  %1974 = vst.msk [vmem:[%s3 + $0x60] sm:$0xf] %vm1949, %v1924
  %1975 = vst.msk [vmem:[%s3 + $0x64] sm:$0xf] %vm1949, %v1925
  %1976 = vst.msk [vmem:[%s3 + $0x68] sm:$0xf] %vm1949, %v1926
  %1977 = vst.msk [vmem:[%s3 + $0x6c] sm:$0xf] %vm1949, %v1927
  %1978 = vst.msk [vmem:[%s3 + $0x70] sm:$0xf] %vm1949, %v1928
  %1979 = vst.msk [vmem:[%s3 + $0x74] sm:$0xf] %vm1949, %v1929
  %1980 = vst.msk [vmem:[%s3 + $0x78] sm:$0xf] %vm1949, %v1930
  %1981 = vst.msk [vmem:[%s3 + $0x7c] sm:$0xf] %vm1949, %v1931
  %1982 = vst.msk [vmem:[%s3 + $0x80] sm:$0xf] %vm1949, %v1932
  %1983 = vst.msk [vmem:[%s3 + $0x84] sm:$0xf] %vm1949, %v1933
  %1984 = vst.msk [vmem:[%s3 + $0x88] sm:$0xf] %vm1949, %v1934
  %1985 = vst.msk [vmem:[%s3 + $0x8c] sm:$0xf] %vm1949, %v1935
  %1986 = vst.msk [vmem:[%s3 + $0x90] sm:$0xf] %vm1949, %v1936
  %1987 = vst.msk [vmem:[%s3 + $0x94] sm:$0xf] %vm1949, %v1937
  %1988 = vst.msk [vmem:[%s3 + $0x98] sm:$0xf] %vm1949, %v1938
  %1989 = vst.msk [vmem:[%s3 + $0x9c] sm:$0xf] %vm1949, %v1939
  %1990 = vst.msk [vmem:[%s3 + $0xa0] sm:$0xf] %vm1949, %v1940
  %1991 = vst.msk [vmem:[%s3 + $0xa4] sm:$0xf] %vm1949, %v1941
  %1992 = vst.msk [vmem:[%s3 + $0xa8] sm:$0xf] %vm1949, %v1942
  %1993 = vst.msk [vmem:[%s3 + $0xac] sm:$0xf] %vm1949, %v1943
  %1994 = vst.msk [vmem:[%s3 + $0xb0] sm:$0xf] %vm1949, %v1944
  %1995 = vst.msk [vmem:[%s3 + $0xb4] sm:$0xf] %vm1949, %v1945
  %1996 = vst.msk [vmem:[%s3 + $0xb8] sm:$0xf] %vm1949, %v1946
  %1997 = vst.msk [vmem:[%s3 + $0xbc] sm:$0xf] %vm1949, %v1947
  %1998 = vst.msk [vmem:[%s3 + $0xc0] sm:$0xf] %vm1949, %v1948
  // Predicated region
  $region14: #{simple_cnn_forward.3} parent=0 // pred_check
    _
  $region15: #{simple_cnn_forward.3} parent=0 // pred_check_branch
    %2000 = sbr.rel (0) target = $region17
  $region16: #{simple_cnn_forward.3} parent=0 // pred_region
    _
  $region17: #{simple_cnn_forward.3} parent=0 // pred_fallthru
    _
  // Predicated region
  $region18: #{simple_cnn_forward.3} parent=0 // pred_check
    _
  $region19: #{simple_cnn_forward.3} parent=0 // pred_check_branch
    %2002 = sbr.rel (0) target = $region21
  $region20: #{simple_cnn_forward.3} parent=0 // pred_region
    _
  $region21: #{simple_cnn_forward.3} parent=0 // pred_fallthru
    _

// kernel: simple_cnn_forward.4
$region0: #{simple_cnn_forward.4}
  #allocation0 [shape = 'u32[]', space=smem, size = 0x4, offset = 0x4, fixed_abs, tag = 'smem constant byte address 0x4 - core index']
  #allocation1 [shape = 'u32[72,128]{1,0:T(1,128)}', space=vmem, size = 0x9000, scoped, tag = 'internal scratch']
  %s0 = inlined_call_operand.vmem [shape: bf16[4,98,288], index: 0, kind: input, shape index: {}]
  %s1 = inlined_call_operand.vmem [shape: bf16[288,64], index: 1, kind: input, shape index: {}]
  %s2 = inlined_call_operand.vmem [shape: f32[1,64], index: 2, kind: input, shape index: {}]
  %s3 = inlined_call_operand.vmem [shape: bf16[98,64], index: 3, kind: output, shape index: {}]
  %s4 = sld [smem:[#allocation0]]
  $region22: #{simple_cnn_forward.4} parent=0
    _
  %s6 = ssub.s32 1, %s4
  %s7 = scalar_select 0, %s6, %s4
  // Predicated region
  $region2: #{simple_cnn_forward.4} parent=0 // pred_check
    _
  $region3: #{simple_cnn_forward.4} parent=0 // pred_check_branch
    %9 = sbr.rel (0) target = $region5
  $region4: #{simple_cnn_forward.4} parent=0 // pred_region
    _
  $region5: #{simple_cnn_forward.4} parent=0 // pred_fallthru
    _
  // Predicated region
  $region6: #{simple_cnn_forward.4} parent=0 // pred_check
    _
  $region7: #{simple_cnn_forward.4} parent=0 // pred_check_branch
    %11 = sbr.rel (0) target = $region9
  $region8: #{simple_cnn_forward.4} parent=0 // pred_region
    _
  $region9: #{simple_cnn_forward.4} parent=0 // pred_fallthru
    _
  // Predicated region
  $region10: #{simple_cnn_forward.4} parent=0 // pred_check
    _
  $region11: #{simple_cnn_forward.4} parent=0 // pred_check_branch
    %13 = sbr.rel (0) target = $region13
  $region12: #{simple_cnn_forward.4} parent=0 // pred_region
    _
  $region13: #{simple_cnn_forward.4} parent=0 // pred_fallthru
    _
  %v15 = vld [vmem:[%s1] sm:$0xf]
  %v16 = vld [vmem:[%s1 + $0x4] sm:$0xf]
  %v17 = vld [vmem:[%s1 + $0x8] sm:$0xf]
  %v18 = vld [vmem:[%s1 + $0xc] sm:$0xf]
  %v19 = vld [vmem:[%s1 + $0x10] sm:$0xf]
  %v20 = vld [vmem:[%s1 + $0x14] sm:$0xf]
  %v21 = vld [vmem:[%s1 + $0x18] sm:$0xf]
  %v22 = vld [vmem:[%s1 + $0x1c] sm:$0xf]
  %v23 = vld [vmem:[%s1 + $0x20] sm:$0xf]
  %v24 = vld [vmem:[%s1 + $0x24] sm:$0xf]
  %v25 = vld [vmem:[%s1 + $0x28] sm:$0xf]
  %v26 = vld [vmem:[%s1 + $0x2c] sm:$0xf]
  %v27 = vld [vmem:[%s1 + $0x30] sm:$0xf]
  %v28 = vld [vmem:[%s1 + $0x34] sm:$0xf]
  %v29 = vld [vmem:[%s1 + $0x38] sm:$0xf]
  %v30 = vld [vmem:[%s1 + $0x3c] sm:$0xf]
  %v31 = vld [vmem:[%s1 + $0x40] sm:$0xf]
  %v32 = vld [vmem:[%s1 + $0x44] sm:$0xf]
  %v33 = vld [vmem:[%s1 + $0x48] sm:$0xf]
  %v34 = vld [vmem:[%s1 + $0x4c] sm:$0xf]
  %v35 = vld [vmem:[%s1 + $0x50] sm:$0xf]
  %v36 = vld [vmem:[%s1 + $0x54] sm:$0xf]
  %v37 = vld [vmem:[%s1 + $0x58] sm:$0xf]
  %v38 = vld [vmem:[%s1 + $0x5c] sm:$0xf]
  %v39 = vld [vmem:[%s1 + $0x60] sm:$0xf]
  %v40 = vld [vmem:[%s1 + $0x64] sm:$0xf]
  %v41 = vld [vmem:[%s1 + $0x68] sm:$0xf]
  %v42 = vld [vmem:[%s1 + $0x6c] sm:$0xf]
  %v43 = vld [vmem:[%s1 + $0x70] sm:$0xf]
  %v44 = vld [vmem:[%s1 + $0x74] sm:$0xf]
  %v45 = vld [vmem:[%s1 + $0x78] sm:$0xf]
  %v46 = vld [vmem:[%s1 + $0x7c] sm:$0xf]
  %v47 = vld [vmem:[%s1 + $0x80] sm:$0xf]
  %v48 = vld [vmem:[%s1 + $0x84] sm:$0xf]
  %v49 = vld [vmem:[%s1 + $0x88] sm:$0xf]
  %v50 = vld [vmem:[%s1 + $0x8c] sm:$0xf]
  %v51 = vld [vmem:[%s2] sm:$0x1]
  %v52 = vld [vmem:[%s0] sm:$0xff]
  %v53 = vld [vmem:[%s0 + $0x8] sm:$0xf]
  %v54 = vld [vmem:[%s0 + $0xc] sm:$0xff]
  %v55 = vld [vmem:[%s0 + $0x14] sm:$0xf]
  %v56 = vld [vmem:[%s0 + $0x18] sm:$0xff]
  %v57 = vld [vmem:[%s0 + $0x20] sm:$0xf]
  %v58 = vld [vmem:[%s0 + $0x24] sm:$0xff]
  %v59 = vld [vmem:[%s0 + $0x2c] sm:$0xf]
  %v60 = vld [vmem:[%s0 + $0x30] sm:$0xff]
  %v61 = vld [vmem:[%s0 + $0x38] sm:$0xf]
  %v62 = vld [vmem:[%s0 + $0x3c] sm:$0xff]
  %v63 = vld [vmem:[%s0 + $0x44] sm:$0xf]
  %v64 = vld [vmem:[%s0 + $0x48] sm:$0xff]
  %v65 = vld [vmem:[%s0 + $0x50] sm:$0xf]
  %v66 = vld [vmem:[%s0 + $0x54] sm:$0xff]
  %v67 = vld [vmem:[%s0 + $0x5c] sm:$0xf]
  %v68 = vld [vmem:[%s0 + $0x60] sm:$0xff]
  %v69 = vld [vmem:[%s0 + $0x68] sm:$0xf]
  %v70 = vld [vmem:[%s0 + $0x6c] sm:$0xff]
  %v71 = vld [vmem:[%s0 + $0x74] sm:$0xf]
  %v72 = vld [vmem:[%s0 + $0x78] sm:$0xff]
  %v73 = vld [vmem:[%s0 + $0x80] sm:$0xf]
  %v74 = vld [vmem:[%s0 + $0x84] sm:$0xff]
  %v75 = vld [vmem:[%s0 + $0x8c] sm:$0xf]
  %v76 = vld [vmem:[%s0 + $0x90] sm:$0x11]
  %v77 = vld [vmem:[%s0 + $0x98] sm:$0x1]
  %v79 = vperm.slane %v51, 0
  %v107 = vunpack.c.l.b16 %v52
  %v108 = vunpack.c.h.b16 %v52
  %v109 = vunpack.c.l.b16 %v53
  %v110 = vunpack.c.l.b16 %v54
  %v111 = vunpack.c.h.b16 %v54
  %v112 = vunpack.c.l.b16 %v55
  %v113 = vunpack.c.l.b16 %v56
  %v114 = vunpack.c.h.b16 %v56
  %v115 = vunpack.c.l.b16 %v57
  %v116 = vunpack.c.l.b16 %v58
  %v117 = vunpack.c.h.b16 %v58
  %v118 = vunpack.c.l.b16 %v59
  %v119 = vunpack.c.l.b16 %v60
  %v120 = vunpack.c.h.b16 %v60
  %v121 = vunpack.c.l.b16 %v61
  %v122 = vunpack.c.l.b16 %v62
  %v123 = vunpack.c.h.b16 %v62
  %v124 = vunpack.c.l.b16 %v63
  %v125 = vunpack.c.l.b16 %v64
  %v126 = vunpack.c.h.b16 %v64
  %v127 = vunpack.c.l.b16 %v65
  %v128 = vunpack.c.l.b16 %v66
  %v129 = vunpack.c.h.b16 %v66
  %v130 = vunpack.c.l.b16 %v67
  %v131 = vunpack.c.l.b16 %v68
  %v132 = vunpack.c.h.b16 %v68
  %v133 = vunpack.c.l.b16 %v69
  %v134 = vunpack.c.l.b16 %v70
  %v135 = vunpack.c.h.b16 %v70
  %v136 = vunpack.c.l.b16 %v71
  %v137 = vunpack.c.l.b16 %v72
  %v138 = vunpack.c.h.b16 %v72
  %v139 = vunpack.c.l.b16 %v73
  %v140 = vunpack.c.l.b16 %v74
  %v141 = vunpack.c.h.b16 %v74
  %v142 = vunpack.c.l.b16 %v75
  %v143 = vunpack.c.l.b16 %v76
  %v144 = vunpack.c.h.b16 %v76
  %v145 = vunpack.c.l.b16 %v77
  %v146 = vpack.c.b16 %v110, %v107
  %v147 = vpack.c.b16 %v111, %v108
  %v148 = vpack.c.b16 %v112, %v109
  %v149 = vpack.c.b16 %v116, %v113
  %v150 = vpack.c.b16 %v117, %v114
  %v151 = vpack.c.b16 %v118, %v115
  %v152 = vpack.c.b16 %v122, %v119
  %v153 = vpack.c.b16 %v123, %v120
  %v154 = vpack.c.b16 %v124, %v121
  %v155 = vpack.c.b16 %v128, %v125
  %v156 = vpack.c.b16 %v129, %v126
  %v157 = vpack.c.b16 %v130, %v127
  %v158 = vpack.c.b16 %v134, %v131
  %v159 = vpack.c.b16 %v135, %v132
  %v160 = vpack.c.b16 %v136, %v133
  %v161 = vpack.c.b16 %v140, %v137
  %v162 = vpack.c.b16 %v141, %v138
  %v163 = vpack.c.b16 %v142, %v139
  %v164 = vpack.c.b16 %v143, %v143
  %v165 = vpack.c.b16 %v144, %v144
  %v166 = vpack.c.b16 %v145, %v145
  %v217 = vunpack.c.l.b16 %v15
  %v218 = vunpack.c.l.b16 %v16
  %v219 = vunpack.c.l.b16 %v17
  %v220 = vunpack.c.l.b16 %v18
  %v221 = vunpack.c.l.b16 %v19
  %v222 = vunpack.c.l.b16 %v20
  %v223 = vunpack.c.l.b16 %v21
  %v224 = vunpack.c.l.b16 %v22
  %v225 = vunpack.c.l.b16 %v23
  %v226 = vunpack.c.l.b16 %v24
  %v227 = vunpack.c.l.b16 %v25
  %v228 = vunpack.c.l.b16 %v26
  %v229 = vunpack.c.l.b16 %v27
  %v230 = vunpack.c.l.b16 %v28
  %v231 = vunpack.c.l.b16 %v29
  %v232 = vunpack.c.l.b16 %v30
  %v233 = vunpack.c.l.b16 %v31
  %v234 = vunpack.c.l.b16 %v32
  %v235 = vunpack.c.l.b16 %v33
  %v236 = vunpack.c.l.b16 %v34
  %v237 = vunpack.c.l.b16 %v35
  %v238 = vunpack.c.l.b16 %v36
  %v239 = vunpack.c.l.b16 %v37
  %v240 = vunpack.c.l.b16 %v38
  %v241 = vunpack.c.l.b16 %v39
  %v242 = vunpack.c.l.b16 %v40
  %v243 = vunpack.c.l.b16 %v41
  %v244 = vunpack.c.l.b16 %v42
  %v245 = vunpack.c.l.b16 %v43
  %v246 = vunpack.c.l.b16 %v44
  %v247 = vunpack.c.l.b16 %v45
  %v248 = vunpack.c.l.b16 %v46
  %v249 = vunpack.c.l.b16 %v47
  %v250 = vunpack.c.l.b16 %v48
  %v251 = vunpack.c.l.b16 %v49
  %v252 = vunpack.c.l.b16 %v50
  %v253 = vpack.c.b16 %v218, %v217
  %v254 = vpack.c.b16 %v220, %v219
  %v255 = vpack.c.b16 %v222, %v221
  %v256 = vpack.c.b16 %v224, %v223
  %v257 = vpack.c.b16 %v226, %v225
  %v258 = vpack.c.b16 %v228, %v227
  %v259 = vpack.c.b16 %v230, %v229
  %v260 = vpack.c.b16 %v232, %v231
  %v261 = vpack.c.b16 %v234, %v233
  %v262 = vpack.c.b16 %v236, %v235
  %v263 = vpack.c.b16 %v238, %v237
  %v264 = vpack.c.b16 %v240, %v239
  %v265 = vpack.c.b16 %v242, %v241
  %v266 = vpack.c.b16 %v244, %v243
  %v267 = vpack.c.b16 %v246, %v245
  %v268 = vpack.c.b16 %v248, %v247
  %v269 = vpack.c.b16 %v250, %v249
  %v270 = vpack.c.b16 %v252, %v251
  %vm289 = vcmask 261120
  %v291 = vsel %vm289, %v148, 0
  %v294 = vsel %vm289, %v151, 0
  %v297 = vsel %vm289, %v154, 0
  %v300 = vsel %vm289, %v157, 0
  %v303 = vsel %vm289, %v160, 0
  %v306 = vsel %vm289, %v163, 0
  %v309 = vsel %vm289, %v166, 0
  %311 = vmatpush.bf16.msra.mxu0 %v260
  %312 = vmatpush.bf16.msra.mxu0 %v259
  %313 = vmatpush.bf16.msra.mxu0 %v258
  %314 = vmatpush.bf16.msra.mxu0 %v257
  %315 = vmatpush.bf16.msra.mxu0 %v256
  %316 = vmatpush.bf16.msra.mxu0 %v255
  %317 = vmatpush.bf16.msra.mxu0 %v254
  %318 = vmatpush.bf16.msra.mxu0 %v253
  %319 = vmatmul.bf16.gmra.mxu0 %v146
  %v320 = vpop.f32.mrf.mxu0
  %v321 = vadd.f32 %v79, %v320
  %v322 = vpop.f32.mrf.mxu0
  %v323 = vadd.f32 %v79, %v322
  %324 = vmatmul.bf16.gmra.mxu0 %v149
  %v325 = vpop.f32.mrf.mxu0
  %v326 = vadd.f32 %v79, %v325
  %v327 = vpop.f32.mrf.mxu0
  %v328 = vadd.f32 %v79, %v327
  %329 = vmatmul.bf16.gmra.mxu0 %v152
  %v330 = vpop.f32.mrf.mxu0
  %v331 = vadd.f32 %v79, %v330
  %v332 = vpop.f32.mrf.mxu0
  %v333 = vadd.f32 %v79, %v332
  %334 = vmatmul.bf16.gmra.mxu0 %v155
  %v335 = vpop.f32.mrf.mxu0
  %v336 = vadd.f32 %v79, %v335
  %v337 = vpop.f32.mrf.mxu0
  %v338 = vadd.f32 %v79, %v337
  %339 = vmatmul.bf16.gmra.mxu0 %v158
  %v340 = vpop.f32.mrf.mxu0
  %v341 = vadd.f32 %v79, %v340
  %v342 = vpop.f32.mrf.mxu0
  %v343 = vadd.f32 %v79, %v342
  %344 = vmatmul.bf16.gmra.mxu0 %v161
  %v345 = vpop.f32.mrf.mxu0
  %v346 = vadd.f32 %v79, %v345
  %v347 = vpop.f32.mrf.mxu0
  %v348 = vadd.f32 %v79, %v347
  %349 = vmatmul.bf16.gmra.mxu0 %v164
  %v350 = vpop.f32.mrf.mxu0
  %v351 = vadd.f32 %v79, %v350
  %v352 = vpop.f32.mrf.mxu0
  %353 = vdwg.mxu0
  %354 = vmatpush.bf16.msra.mxu0 %v268
  %355 = vmatpush.bf16.msra.mxu0 %v267
  %356 = vmatpush.bf16.msra.mxu0 %v266
  %357 = vmatpush.bf16.msra.mxu0 %v265
  %358 = vmatpush.bf16.msra.mxu0 %v264
  %359 = vmatpush.bf16.msra.mxu0 %v263
  %360 = vmatpush.bf16.msra.mxu0 %v262
  %361 = vmatpush.bf16.msra.mxu0 %v261
  %362 = vmatmul.bf16.gmra.mxu0 %v147
  %v363 = vpop.f32.mrf.mxu0
  %v364 = vadd.f32 %v321, %v363
  %v365 = vpop.f32.mrf.mxu0
  %v366 = vadd.f32 %v323, %v365
  %367 = vmatmul.bf16.gmra.mxu0 %v150
  %v368 = vpop.f32.mrf.mxu0
  %v369 = vadd.f32 %v326, %v368
  %v370 = vpop.f32.mrf.mxu0
  %v371 = vadd.f32 %v328, %v370
  %372 = vmatmul.bf16.gmra.mxu0 %v153
  %v373 = vpop.f32.mrf.mxu0
  %v374 = vadd.f32 %v331, %v373
  %v375 = vpop.f32.mrf.mxu0
  %v376 = vadd.f32 %v333, %v375
  %377 = vmatmul.bf16.gmra.mxu0 %v156
  %v378 = vpop.f32.mrf.mxu0
  %v379 = vadd.f32 %v336, %v378
  %v380 = vpop.f32.mrf.mxu0
  %v381 = vadd.f32 %v338, %v380
  %382 = vmatmul.bf16.gmra.mxu0 %v159
  %v383 = vpop.f32.mrf.mxu0
  %v384 = vadd.f32 %v341, %v383
  %v385 = vpop.f32.mrf.mxu0
  %v386 = vadd.f32 %v343, %v385
  %387 = vmatmul.bf16.gmra.mxu0 %v162
  %v388 = vpop.f32.mrf.mxu0
  %v389 = vadd.f32 %v346, %v388
  %v390 = vpop.f32.mrf.mxu0
  %v391 = vadd.f32 %v348, %v390
  %392 = vmatmul.bf16.gmra.mxu0 %v165
  %v393 = vpop.f32.mrf.mxu0
  %v394 = vadd.f32 %v351, %v393
  %v395 = vpop.f32.mrf.mxu0
  %396 = vdwg.mxu0
  %397 = vmatpush.bf16.msra.mxu0 0
  %398 = vmatpush.bf16.msra.mxu0 0
  %399 = vmatpush.bf16.msra.mxu0 0
  %400 = vmatpush.bf16.msra.mxu0 0
  %401 = vmatpush.bf16.msra.mxu0 0
  %402 = vmatpush.bf16.msra.mxu0 0
  %403 = vmatpush.bf16.msra.mxu0 %v270
  %404 = vmatpush.bf16.msra.mxu0 %v269
  %405 = vmatmul.bf16.gmra.mxu0 %v291
  %v406 = vpop.f32.mrf.mxu0
  %v407 = vadd.f32 %v364, %v406
  %v408 = vpop.f32.mrf.mxu0
  %v409 = vadd.f32 %v366, %v408
  %410 = vmatmul.bf16.gmra.mxu0 %v294
  %v411 = vpop.f32.mrf.mxu0
  %v412 = vadd.f32 %v369, %v411
  %v413 = vpop.f32.mrf.mxu0
  %v414 = vadd.f32 %v371, %v413
  %415 = vmatmul.bf16.gmra.mxu0 %v297
  %v416 = vpop.f32.mrf.mxu0
  %v417 = vadd.f32 %v374, %v416
  %v418 = vpop.f32.mrf.mxu0
  %v419 = vadd.f32 %v376, %v418
  %420 = vmatmul.bf16.gmra.mxu0 %v300
  %v421 = vpop.f32.mrf.mxu0
  %v422 = vadd.f32 %v379, %v421
  %v423 = vpop.f32.mrf.mxu0
  %v424 = vadd.f32 %v381, %v423
  %425 = vmatmul.bf16.gmra.mxu0 %v303
  %v426 = vpop.f32.mrf.mxu0
  %v427 = vadd.f32 %v384, %v426
  %v428 = vpop.f32.mrf.mxu0
  %v429 = vadd.f32 %v386, %v428
  %430 = vmatmul.bf16.gmra.mxu0 %v306
  %v431 = vpop.f32.mrf.mxu0
  %v432 = vadd.f32 %v389, %v431
  %v433 = vpop.f32.mrf.mxu0
  %v434 = vadd.f32 %v391, %v433
  %435 = vmatmul.bf16.gmra.mxu0 %v309
  %v436 = vpop.f32.mrf.mxu0
  %v437 = vadd.f32 %v394, %v436
  %v438 = vpop.f32.mrf.mxu0
  %439 = vdwg.mxu0
  %v440 = vmax.f32 %v407, 0.0
  %v441 = vmax.f32 %v409, 0.0
  %v442 = vmax.f32 %v412, 0.0
  %v443 = vmax.f32 %v414, 0.0
  %v444 = vmax.f32 %v417, 0.0
  %v445 = vmax.f32 %v419, 0.0
  %v446 = vmax.f32 %v422, 0.0
  %v447 = vmax.f32 %v424, 0.0
  %v448 = vmax.f32 %v427, 0.0
  %v449 = vmax.f32 %v429, 0.0
  %v450 = vmax.f32 %v432, 0.0
  %v451 = vmax.f32 %v434, 0.0
  %v452 = vmax.f32 %v437, 0.0
  %s453 = scalar_lea.vmem %s0, 156
  %v454 = vld [vmem:[%s453] sm:$0xff]
  %v455 = vld [vmem:[%s453 + $0x8] sm:$0xf]
  %v456 = vld [vmem:[%s453 + $0xc] sm:$0xff]
  %v457 = vld [vmem:[%s453 + $0x14] sm:$0xf]
  %v458 = vld [vmem:[%s453 + $0x18] sm:$0xff]
  %v459 = vld [vmem:[%s453 + $0x20] sm:$0xf]
  %v460 = vld [vmem:[%s453 + $0x24] sm:$0xff]
  %v461 = vld [vmem:[%s453 + $0x2c] sm:$0xf]
  %v462 = vld [vmem:[%s453 + $0x30] sm:$0xff]
  %v463 = vld [vmem:[%s453 + $0x38] sm:$0xf]
  %v464 = vld [vmem:[%s453 + $0x3c] sm:$0xff]
  %v465 = vld [vmem:[%s453 + $0x44] sm:$0xf]
  %v466 = vld [vmem:[%s453 + $0x48] sm:$0xff]
  %v467 = vld [vmem:[%s453 + $0x50] sm:$0xf]
  %v468 = vld [vmem:[%s453 + $0x54] sm:$0xff]
  %v469 = vld [vmem:[%s453 + $0x5c] sm:$0xf]
  %v470 = vld [vmem:[%s453 + $0x60] sm:$0xff]
  %v471 = vld [vmem:[%s453 + $0x68] sm:$0xf]
  %v472 = vld [vmem:[%s453 + $0x6c] sm:$0xff]
  %v473 = vld [vmem:[%s453 + $0x74] sm:$0xf]
  %v474 = vld [vmem:[%s453 + $0x78] sm:$0xff]
  %v475 = vld [vmem:[%s453 + $0x80] sm:$0xf]
  %v476 = vld [vmem:[%s453 + $0x84] sm:$0xff]
  %v477 = vld [vmem:[%s453 + $0x8c] sm:$0xf]
  %v478 = vld [vmem:[%s453 + $0x90] sm:$0x11]
  %v479 = vld [vmem:[%s453 + $0x98] sm:$0x1]
  %v506 = vunpack.c.l.b16 %v454
  %v507 = vunpack.c.h.b16 %v454
  %v508 = vunpack.c.l.b16 %v455
  %v509 = vunpack.c.l.b16 %v456
  %v510 = vunpack.c.h.b16 %v456
  %v511 = vunpack.c.l.b16 %v457
  %v512 = vunpack.c.l.b16 %v458
  %v513 = vunpack.c.h.b16 %v458
  %v514 = vunpack.c.l.b16 %v459
  %v515 = vunpack.c.l.b16 %v460
  %v516 = vunpack.c.h.b16 %v460
  %v517 = vunpack.c.l.b16 %v461
  %v518 = vunpack.c.l.b16 %v462
  %v519 = vunpack.c.h.b16 %v462
  %v520 = vunpack.c.l.b16 %v463
  %v521 = vunpack.c.l.b16 %v464
  %v522 = vunpack.c.h.b16 %v464
  %v523 = vunpack.c.l.b16 %v465
  %v524 = vunpack.c.l.b16 %v466
  %v525 = vunpack.c.h.b16 %v466
  %v526 = vunpack.c.l.b16 %v467
  %v527 = vunpack.c.l.b16 %v468
  %v528 = vunpack.c.h.b16 %v468
  %v529 = vunpack.c.l.b16 %v469
  %v530 = vunpack.c.l.b16 %v470
  %v531 = vunpack.c.h.b16 %v470
  %v532 = vunpack.c.l.b16 %v471
  %v533 = vunpack.c.l.b16 %v472
  %v534 = vunpack.c.h.b16 %v472
  %v535 = vunpack.c.l.b16 %v473
  %v536 = vunpack.c.l.b16 %v474
  %v537 = vunpack.c.h.b16 %v474
  %v538 = vunpack.c.l.b16 %v475
  %v539 = vunpack.c.l.b16 %v476
  %v540 = vunpack.c.h.b16 %v476
  %v541 = vunpack.c.l.b16 %v477
  %v542 = vunpack.c.l.b16 %v478
  %v543 = vunpack.c.h.b16 %v478
  %v544 = vunpack.c.l.b16 %v479
  %v545 = vpack.c.b16 %v509, %v506
  %v546 = vpack.c.b16 %v510, %v507
  %v547 = vpack.c.b16 %v511, %v508
  %v548 = vpack.c.b16 %v515, %v512
  %v549 = vpack.c.b16 %v516, %v513
  %v550 = vpack.c.b16 %v517, %v514
  %v551 = vpack.c.b16 %v521, %v518
  %v552 = vpack.c.b16 %v522, %v519
  %v553 = vpack.c.b16 %v523, %v520
  %v554 = vpack.c.b16 %v527, %v524
  %v555 = vpack.c.b16 %v528, %v525
  %v556 = vpack.c.b16 %v529, %v526
  %v557 = vpack.c.b16 %v533, %v530
  %v558 = vpack.c.b16 %v534, %v531
  %v559 = vpack.c.b16 %v535, %v532
  %v560 = vpack.c.b16 %v539, %v536
  %v561 = vpack.c.b16 %v540, %v537
  %v562 = vpack.c.b16 %v541, %v538
  %v563 = vpack.c.b16 %v542, %v542
  %v564 = vpack.c.b16 %v543, %v543
  %v565 = vpack.c.b16 %v544, %v544
  %v581 = vsel %vm289, %v547, 0
  %v584 = vsel %vm289, %v550, 0
  %v587 = vsel %vm289, %v553, 0
  %v590 = vsel %vm289, %v556, 0
  %v593 = vsel %vm289, %v559, 0
  %v596 = vsel %vm289, %v562, 0
  %v599 = vsel %vm289, %v565, 0
  %601 = vmatpush.bf16.msra.mxu0 %v260
  %602 = vmatpush.bf16.msra.mxu0 %v259
  %603 = vmatpush.bf16.msra.mxu0 %v258
  %604 = vmatpush.bf16.msra.mxu0 %v257
  %605 = vmatpush.bf16.msra.mxu0 %v256
  %606 = vmatpush.bf16.msra.mxu0 %v255
  %607 = vmatpush.bf16.msra.mxu0 %v254
  %608 = vmatpush.bf16.msra.mxu0 %v253
  %609 = vmatmul.bf16.gmra.mxu0 %v545
  %v610 = vpop.f32.mrf.mxu0
  %v611 = vadd.f32 %v79, %v610
  %v612 = vpop.f32.mrf.mxu0
  %v613 = vadd.f32 %v79, %v612
  %614 = vmatmul.bf16.gmra.mxu0 %v548
  %v615 = vpop.f32.mrf.mxu0
  %v616 = vadd.f32 %v79, %v615
  %v617 = vpop.f32.mrf.mxu0
  %v618 = vadd.f32 %v79, %v617
  %619 = vmatmul.bf16.gmra.mxu0 %v551
  %v620 = vpop.f32.mrf.mxu0
  %v621 = vadd.f32 %v79, %v620
  %v622 = vpop.f32.mrf.mxu0
  %v623 = vadd.f32 %v79, %v622
  %624 = vmatmul.bf16.gmra.mxu0 %v554
  %v625 = vpop.f32.mrf.mxu0
  %v626 = vadd.f32 %v79, %v625
  %v627 = vpop.f32.mrf.mxu0
  %v628 = vadd.f32 %v79, %v627
  %629 = vmatmul.bf16.gmra.mxu0 %v557
  %v630 = vpop.f32.mrf.mxu0
  %v631 = vadd.f32 %v79, %v630
  %v632 = vpop.f32.mrf.mxu0
  %v633 = vadd.f32 %v79, %v632
  %634 = vmatmul.bf16.gmra.mxu0 %v560
  %v635 = vpop.f32.mrf.mxu0
  %v636 = vadd.f32 %v79, %v635
  %v637 = vpop.f32.mrf.mxu0
  %v638 = vadd.f32 %v79, %v637
  %639 = vmatmul.bf16.gmra.mxu0 %v563
  %v640 = vpop.f32.mrf.mxu0
  %v641 = vadd.f32 %v79, %v640
  %v642 = vpop.f32.mrf.mxu0
  %643 = vdwg.mxu0
  %644 = vmatpush.bf16.msra.mxu0 %v268
  %645 = vmatpush.bf16.msra.mxu0 %v267
  %646 = vmatpush.bf16.msra.mxu0 %v266
  %647 = vmatpush.bf16.msra.mxu0 %v265
  %648 = vmatpush.bf16.msra.mxu0 %v264
  %649 = vmatpush.bf16.msra.mxu0 %v263
  %650 = vmatpush.bf16.msra.mxu0 %v262
  %651 = vmatpush.bf16.msra.mxu0 %v261
  %652 = vmatmul.bf16.gmra.mxu0 %v546
  %v653 = vpop.f32.mrf.mxu0
  %v654 = vadd.f32 %v611, %v653
  %v655 = vpop.f32.mrf.mxu0
  %v656 = vadd.f32 %v613, %v655
  %657 = vmatmul.bf16.gmra.mxu0 %v549
  %v658 = vpop.f32.mrf.mxu0
  %v659 = vadd.f32 %v616, %v658
  %v660 = vpop.f32.mrf.mxu0
  %v661 = vadd.f32 %v618, %v660
  %662 = vmatmul.bf16.gmra.mxu0 %v552
  %v663 = vpop.f32.mrf.mxu0
  %v664 = vadd.f32 %v621, %v663
  %v665 = vpop.f32.mrf.mxu0
  %v666 = vadd.f32 %v623, %v665
  %667 = vmatmul.bf16.gmra.mxu0 %v555
  %v668 = vpop.f32.mrf.mxu0
  %v669 = vadd.f32 %v626, %v668
  %v670 = vpop.f32.mrf.mxu0
  %v671 = vadd.f32 %v628, %v670
  %672 = vmatmul.bf16.gmra.mxu0 %v558
  %v673 = vpop.f32.mrf.mxu0
  %v674 = vadd.f32 %v631, %v673
  %v675 = vpop.f32.mrf.mxu0
  %v676 = vadd.f32 %v633, %v675
  %677 = vmatmul.bf16.gmra.mxu0 %v561
  %v678 = vpop.f32.mrf.mxu0
  %v679 = vadd.f32 %v636, %v678
  %v680 = vpop.f32.mrf.mxu0
  %v681 = vadd.f32 %v638, %v680
  %682 = vmatmul.bf16.gmra.mxu0 %v564
  %v683 = vpop.f32.mrf.mxu0
  %v684 = vadd.f32 %v641, %v683
  %v685 = vpop.f32.mrf.mxu0
  %686 = vdwg.mxu0
  %687 = vmatpush.bf16.msra.mxu0 0
  %688 = vmatpush.bf16.msra.mxu0 0
  %689 = vmatpush.bf16.msra.mxu0 0
  %690 = vmatpush.bf16.msra.mxu0 0
  %691 = vmatpush.bf16.msra.mxu0 0
  %692 = vmatpush.bf16.msra.mxu0 0
  %693 = vmatpush.bf16.msra.mxu0 %v270
  %694 = vmatpush.bf16.msra.mxu0 %v269
  %695 = vmatmul.bf16.gmra.mxu0 %v581
  %v696 = vpop.f32.mrf.mxu0
  %v697 = vadd.f32 %v654, %v696
  %v698 = vpop.f32.mrf.mxu0
  %v699 = vadd.f32 %v656, %v698
  %700 = vmatmul.bf16.gmra.mxu0 %v584
  %v701 = vpop.f32.mrf.mxu0
  %v702 = vadd.f32 %v659, %v701
  %v703 = vpop.f32.mrf.mxu0
  %v704 = vadd.f32 %v661, %v703
  %705 = vmatmul.bf16.gmra.mxu0 %v587
  %v706 = vpop.f32.mrf.mxu0
  %v707 = vadd.f32 %v664, %v706
  %v708 = vpop.f32.mrf.mxu0
  %v709 = vadd.f32 %v666, %v708
  %710 = vmatmul.bf16.gmra.mxu0 %v590
  %v711 = vpop.f32.mrf.mxu0
  %v712 = vadd.f32 %v669, %v711
  %v713 = vpop.f32.mrf.mxu0
  %v714 = vadd.f32 %v671, %v713
  %715 = vmatmul.bf16.gmra.mxu0 %v593
  %v716 = vpop.f32.mrf.mxu0
  %v717 = vadd.f32 %v674, %v716
  %v718 = vpop.f32.mrf.mxu0
  %v719 = vadd.f32 %v676, %v718
  %720 = vmatmul.bf16.gmra.mxu0 %v596
  %v721 = vpop.f32.mrf.mxu0
  %v722 = vadd.f32 %v679, %v721
  %v723 = vpop.f32.mrf.mxu0
  %v724 = vadd.f32 %v681, %v723
  %725 = vmatmul.bf16.gmra.mxu0 %v599
  %v726 = vpop.f32.mrf.mxu0
  %v727 = vadd.f32 %v684, %v726
  %v728 = vpop.f32.mrf.mxu0
  %729 = vdwg.mxu0
  %v730 = vmax.f32 %v697, 0.0
  %v731 = vmax.f32 %v699, 0.0
  %v732 = vmax.f32 %v702, 0.0
  %v733 = vmax.f32 %v704, 0.0
  %v734 = vmax.f32 %v707, 0.0
  %v735 = vmax.f32 %v709, 0.0
  %v736 = vmax.f32 %v712, 0.0
  %v737 = vmax.f32 %v714, 0.0
  %v738 = vmax.f32 %v717, 0.0
  %v739 = vmax.f32 %v719, 0.0
  %v740 = vmax.f32 %v722, 0.0
  %v741 = vmax.f32 %v724, 0.0
  %v742 = vmax.f32 %v727, 0.0
  %v743 = vmax.f32 %v440, %v730
  %v744 = vmax.f32 %v441, %v731
  %v745 = vmax.f32 %v442, %v732
  %v746 = vmax.f32 %v443, %v733
  %v747 = vmax.f32 %v444, %v734
  %v748 = vmax.f32 %v445, %v735
  %v749 = vmax.f32 %v446, %v736
  %v750 = vmax.f32 %v447, %v737
  %v751 = vmax.f32 %v448, %v738
  %v752 = vmax.f32 %v449, %v739
  %v753 = vmax.f32 %v450, %v740
  %v754 = vmax.f32 %v451, %v741
  %v755 = vmax.f32 %v452, %v742
  %s756 = scalar_lea.vmem %s0, 312
  %v757 = vld [vmem:[%s756] sm:$0xff]
  %v758 = vld [vmem:[%s756 + $0x8] sm:$0xf]
  %v759 = vld [vmem:[%s756 + $0xc] sm:$0xff]
  %v760 = vld [vmem:[%s756 + $0x14] sm:$0xf]
  %v761 = vld [vmem:[%s756 + $0x18] sm:$0xff]
  %v762 = vld [vmem:[%s756 + $0x20] sm:$0xf]
  %v763 = vld [vmem:[%s756 + $0x24] sm:$0xff]
  %v764 = vld [vmem:[%s756 + $0x2c] sm:$0xf]
  %v765 = vld [vmem:[%s756 + $0x30] sm:$0xff]
  %v766 = vld [vmem:[%s756 + $0x38] sm:$0xf]
  %v767 = vld [vmem:[%s756 + $0x3c] sm:$0xff]
  %v768 = vld [vmem:[%s756 + $0x44] sm:$0xf]
  %v769 = vld [vmem:[%s756 + $0x48] sm:$0xff]
  %v770 = vld [vmem:[%s756 + $0x50] sm:$0xf]
  %v771 = vld [vmem:[%s756 + $0x54] sm:$0xff]
  %v772 = vld [vmem:[%s756 + $0x5c] sm:$0xf]
  %v773 = vld [vmem:[%s756 + $0x60] sm:$0xff]
  %v774 = vld [vmem:[%s756 + $0x68] sm:$0xf]
  %v775 = vld [vmem:[%s756 + $0x6c] sm:$0xff]
  %v776 = vld [vmem:[%s756 + $0x74] sm:$0xf]
  %v777 = vld [vmem:[%s756 + $0x78] sm:$0xff]
  %v778 = vld [vmem:[%s756 + $0x80] sm:$0xf]
  %v779 = vld [vmem:[%s756 + $0x84] sm:$0xff]
  %v780 = vld [vmem:[%s756 + $0x8c] sm:$0xf]
  %v781 = vld [vmem:[%s756 + $0x90] sm:$0x11]
  %v782 = vld [vmem:[%s756 + $0x98] sm:$0x1]
  %v809 = vunpack.c.l.b16 %v757
  %v810 = vunpack.c.h.b16 %v757
  %v811 = vunpack.c.l.b16 %v758
  %v812 = vunpack.c.l.b16 %v759
  %v813 = vunpack.c.h.b16 %v759
  %v814 = vunpack.c.l.b16 %v760
  %v815 = vunpack.c.l.b16 %v761
  %v816 = vunpack.c.h.b16 %v761
  %v817 = vunpack.c.l.b16 %v762
  %v818 = vunpack.c.l.b16 %v763
  %v819 = vunpack.c.h.b16 %v763
  %v820 = vunpack.c.l.b16 %v764
  %v821 = vunpack.c.l.b16 %v765
  %v822 = vunpack.c.h.b16 %v765
  %v823 = vunpack.c.l.b16 %v766
  %v824 = vunpack.c.l.b16 %v767
  %v825 = vunpack.c.h.b16 %v767
  %v826 = vunpack.c.l.b16 %v768
  %v827 = vunpack.c.l.b16 %v769
  %v828 = vunpack.c.h.b16 %v769
  %v829 = vunpack.c.l.b16 %v770
  %v830 = vunpack.c.l.b16 %v771
  %v831 = vunpack.c.h.b16 %v771
  %v832 = vunpack.c.l.b16 %v772
  %v833 = vunpack.c.l.b16 %v773
  %v834 = vunpack.c.h.b16 %v773
  %v835 = vunpack.c.l.b16 %v774
  %v836 = vunpack.c.l.b16 %v775
  %v837 = vunpack.c.h.b16 %v775
  %v838 = vunpack.c.l.b16 %v776
  %v839 = vunpack.c.l.b16 %v777
  %v840 = vunpack.c.h.b16 %v777
  %v841 = vunpack.c.l.b16 %v778
  %v842 = vunpack.c.l.b16 %v779
  %v843 = vunpack.c.h.b16 %v779
  %v844 = vunpack.c.l.b16 %v780
  %v845 = vunpack.c.l.b16 %v781
  %v846 = vunpack.c.h.b16 %v781
  %v847 = vunpack.c.l.b16 %v782
  %v848 = vpack.c.b16 %v812, %v809
  %v849 = vpack.c.b16 %v813, %v810
  %v850 = vpack.c.b16 %v814, %v811
  %v851 = vpack.c.b16 %v818, %v815
  %v852 = vpack.c.b16 %v819, %v816
  %v853 = vpack.c.b16 %v820, %v817
  %v854 = vpack.c.b16 %v824, %v821
  %v855 = vpack.c.b16 %v825, %v822
  %v856 = vpack.c.b16 %v826, %v823
  %v857 = vpack.c.b16 %v830, %v827
  %v858 = vpack.c.b16 %v831, %v828
  %v859 = vpack.c.b16 %v832, %v829
  %v860 = vpack.c.b16 %v836, %v833
  %v861 = vpack.c.b16 %v837, %v834
  %v862 = vpack.c.b16 %v838, %v835
  %v863 = vpack.c.b16 %v842, %v839
  %v864 = vpack.c.b16 %v843, %v840
  %v865 = vpack.c.b16 %v844, %v841
  %v866 = vpack.c.b16 %v845, %v845
  %v867 = vpack.c.b16 %v846, %v846
  %v868 = vpack.c.b16 %v847, %v847
  %v884 = vsel %vm289, %v850, 0
  %v887 = vsel %vm289, %v853, 0
  %v890 = vsel %vm289, %v856, 0
  %v893 = vsel %vm289, %v859, 0
  %v896 = vsel %vm289, %v862, 0
  %v899 = vsel %vm289, %v865, 0
  %v902 = vsel %vm289, %v868, 0
  %904 = vmatpush.bf16.msra.mxu0 %v260
  %905 = vmatpush.bf16.msra.mxu0 %v259
  %906 = vmatpush.bf16.msra.mxu0 %v258
  %907 = vmatpush.bf16.msra.mxu0 %v257
  %908 = vmatpush.bf16.msra.mxu0 %v256
  %909 = vmatpush.bf16.msra.mxu0 %v255
  %910 = vmatpush.bf16.msra.mxu0 %v254
  %911 = vmatpush.bf16.msra.mxu0 %v253
  %912 = vmatmul.bf16.gmra.mxu0 %v848
  %v913 = vpop.f32.mrf.mxu0
  %v914 = vadd.f32 %v79, %v913
  %v915 = vpop.f32.mrf.mxu0
  %v916 = vadd.f32 %v79, %v915
  %917 = vmatmul.bf16.gmra.mxu0 %v851
  %v918 = vpop.f32.mrf.mxu0
  %v919 = vadd.f32 %v79, %v918
  %v920 = vpop.f32.mrf.mxu0
  %v921 = vadd.f32 %v79, %v920
  %922 = vmatmul.bf16.gmra.mxu0 %v854
  %v923 = vpop.f32.mrf.mxu0
  %v924 = vadd.f32 %v79, %v923
  %v925 = vpop.f32.mrf.mxu0
  %v926 = vadd.f32 %v79, %v925
  %927 = vmatmul.bf16.gmra.mxu0 %v857
  %v928 = vpop.f32.mrf.mxu0
  %v929 = vadd.f32 %v79, %v928
  %v930 = vpop.f32.mrf.mxu0
  %v931 = vadd.f32 %v79, %v930
  %932 = vmatmul.bf16.gmra.mxu0 %v860
  %v933 = vpop.f32.mrf.mxu0
  %v934 = vadd.f32 %v79, %v933
  %v935 = vpop.f32.mrf.mxu0
  %v936 = vadd.f32 %v79, %v935
  %937 = vmatmul.bf16.gmra.mxu0 %v863
  %v938 = vpop.f32.mrf.mxu0
  %v939 = vadd.f32 %v79, %v938
  %v940 = vpop.f32.mrf.mxu0
  %v941 = vadd.f32 %v79, %v940
  %942 = vmatmul.bf16.gmra.mxu0 %v866
  %v943 = vpop.f32.mrf.mxu0
  %v944 = vadd.f32 %v79, %v943
  %v945 = vpop.f32.mrf.mxu0
  %946 = vdwg.mxu0
  %947 = vmatpush.bf16.msra.mxu0 %v268
  %948 = vmatpush.bf16.msra.mxu0 %v267
  %949 = vmatpush.bf16.msra.mxu0 %v266
  %950 = vmatpush.bf16.msra.mxu0 %v265
  %951 = vmatpush.bf16.msra.mxu0 %v264
  %952 = vmatpush.bf16.msra.mxu0 %v263
  %953 = vmatpush.bf16.msra.mxu0 %v262
  %954 = vmatpush.bf16.msra.mxu0 %v261
  %955 = vmatmul.bf16.gmra.mxu0 %v849
  %v956 = vpop.f32.mrf.mxu0
  %v957 = vadd.f32 %v914, %v956
  %v958 = vpop.f32.mrf.mxu0
  %v959 = vadd.f32 %v916, %v958
  %960 = vmatmul.bf16.gmra.mxu0 %v852
  %v961 = vpop.f32.mrf.mxu0
  %v962 = vadd.f32 %v919, %v961
  %v963 = vpop.f32.mrf.mxu0
  %v964 = vadd.f32 %v921, %v963
  %965 = vmatmul.bf16.gmra.mxu0 %v855
  %v966 = vpop.f32.mrf.mxu0
  %v967 = vadd.f32 %v924, %v966
  %v968 = vpop.f32.mrf.mxu0
  %v969 = vadd.f32 %v926, %v968
  %970 = vmatmul.bf16.gmra.mxu0 %v858
  %v971 = vpop.f32.mrf.mxu0
  %v972 = vadd.f32 %v929, %v971
  %v973 = vpop.f32.mrf.mxu0
  %v974 = vadd.f32 %v931, %v973
  %975 = vmatmul.bf16.gmra.mxu0 %v861
  %v976 = vpop.f32.mrf.mxu0
  %v977 = vadd.f32 %v934, %v976
  %v978 = vpop.f32.mrf.mxu0
  %v979 = vadd.f32 %v936, %v978
  %980 = vmatmul.bf16.gmra.mxu0 %v864
  %v981 = vpop.f32.mrf.mxu0
  %v982 = vadd.f32 %v939, %v981
  %v983 = vpop.f32.mrf.mxu0
  %v984 = vadd.f32 %v941, %v983
  %985 = vmatmul.bf16.gmra.mxu0 %v867
  %v986 = vpop.f32.mrf.mxu0
  %v987 = vadd.f32 %v944, %v986
  %v988 = vpop.f32.mrf.mxu0
  %989 = vdwg.mxu0
  %990 = vmatpush.bf16.msra.mxu0 0
  %991 = vmatpush.bf16.msra.mxu0 0
  %992 = vmatpush.bf16.msra.mxu0 0
  %993 = vmatpush.bf16.msra.mxu0 0
  %994 = vmatpush.bf16.msra.mxu0 0
  %995 = vmatpush.bf16.msra.mxu0 0
  %996 = vmatpush.bf16.msra.mxu0 %v270
  %997 = vmatpush.bf16.msra.mxu0 %v269
  %998 = vmatmul.bf16.gmra.mxu0 %v884
  %v999 = vpop.f32.mrf.mxu0
  %v1000 = vadd.f32 %v957, %v999
  %v1001 = vpop.f32.mrf.mxu0
  %v1002 = vadd.f32 %v959, %v1001
  %1003 = vmatmul.bf16.gmra.mxu0 %v887
  %v1004 = vpop.f32.mrf.mxu0
  %v1005 = vadd.f32 %v962, %v1004
  %v1006 = vpop.f32.mrf.mxu0
  %v1007 = vadd.f32 %v964, %v1006
  %1008 = vmatmul.bf16.gmra.mxu0 %v890
  %v1009 = vpop.f32.mrf.mxu0
  %v1010 = vadd.f32 %v967, %v1009
  %v1011 = vpop.f32.mrf.mxu0
  %v1012 = vadd.f32 %v969, %v1011
  %1013 = vmatmul.bf16.gmra.mxu0 %v893
  %v1014 = vpop.f32.mrf.mxu0
  %v1015 = vadd.f32 %v972, %v1014
  %v1016 = vpop.f32.mrf.mxu0
  %v1017 = vadd.f32 %v974, %v1016
  %1018 = vmatmul.bf16.gmra.mxu0 %v896
  %v1019 = vpop.f32.mrf.mxu0
  %v1020 = vadd.f32 %v977, %v1019
  %v1021 = vpop.f32.mrf.mxu0
  %v1022 = vadd.f32 %v979, %v1021
  %1023 = vmatmul.bf16.gmra.mxu0 %v899
  %v1024 = vpop.f32.mrf.mxu0
  %v1025 = vadd.f32 %v982, %v1024
  %v1026 = vpop.f32.mrf.mxu0
  %v1027 = vadd.f32 %v984, %v1026
  %1028 = vmatmul.bf16.gmra.mxu0 %v902
  %v1029 = vpop.f32.mrf.mxu0
  %v1030 = vadd.f32 %v987, %v1029
  %v1031 = vpop.f32.mrf.mxu0
  %1032 = vdwg.mxu0
  %v1033 = vmax.f32 %v1000, 0.0
  %v1034 = vmax.f32 %v1002, 0.0
  %v1035 = vmax.f32 %v1005, 0.0
  %v1036 = vmax.f32 %v1007, 0.0
  %v1037 = vmax.f32 %v1010, 0.0
  %v1038 = vmax.f32 %v1012, 0.0
  %v1039 = vmax.f32 %v1015, 0.0
  %v1040 = vmax.f32 %v1017, 0.0
  %v1041 = vmax.f32 %v1020, 0.0
  %v1042 = vmax.f32 %v1022, 0.0
  %v1043 = vmax.f32 %v1025, 0.0
  %v1044 = vmax.f32 %v1027, 0.0
  %v1045 = vmax.f32 %v1030, 0.0
  %s1046 = scalar_lea.vmem %s0, 468
  %v1047 = vld [vmem:[%s1046] sm:$0xff]
  %v1048 = vld [vmem:[%s1046 + $0x8] sm:$0xf]
  %v1049 = vld [vmem:[%s1046 + $0xc] sm:$0xff]
  %v1050 = vld [vmem:[%s1046 + $0x14] sm:$0xf]
  %v1051 = vld [vmem:[%s1046 + $0x18] sm:$0xff]
  %v1052 = vld [vmem:[%s1046 + $0x20] sm:$0xf]
  %v1053 = vld [vmem:[%s1046 + $0x24] sm:$0xff]
  %v1054 = vld [vmem:[%s1046 + $0x2c] sm:$0xf]
  %v1055 = vld [vmem:[%s1046 + $0x30] sm:$0xff]
  %v1056 = vld [vmem:[%s1046 + $0x38] sm:$0xf]
  %v1057 = vld [vmem:[%s1046 + $0x3c] sm:$0xff]
  %v1058 = vld [vmem:[%s1046 + $0x44] sm:$0xf]
  %v1059 = vld [vmem:[%s1046 + $0x48] sm:$0xff]
  %v1060 = vld [vmem:[%s1046 + $0x50] sm:$0xf]
  %v1061 = vld [vmem:[%s1046 + $0x54] sm:$0xff]
  %v1062 = vld [vmem:[%s1046 + $0x5c] sm:$0xf]
  %v1063 = vld [vmem:[%s1046 + $0x60] sm:$0xff]
  %v1064 = vld [vmem:[%s1046 + $0x68] sm:$0xf]
  %v1065 = vld [vmem:[%s1046 + $0x6c] sm:$0xff]
  %v1066 = vld [vmem:[%s1046 + $0x74] sm:$0xf]
  %v1067 = vld [vmem:[%s1046 + $0x78] sm:$0xff]
  %v1068 = vld [vmem:[%s1046 + $0x80] sm:$0xf]
  %v1069 = vld [vmem:[%s1046 + $0x84] sm:$0xff]
  %v1070 = vld [vmem:[%s1046 + $0x8c] sm:$0xf]
  %v1071 = vld [vmem:[%s1046 + $0x90] sm:$0x11]
  %v1072 = vld [vmem:[%s1046 + $0x98] sm:$0x1]
  %v1099 = vunpack.c.l.b16 %v1047
  %v1100 = vunpack.c.h.b16 %v1047
  %v1101 = vunpack.c.l.b16 %v1048
  %v1102 = vunpack.c.l.b16 %v1049
  %v1103 = vunpack.c.h.b16 %v1049
  %v1104 = vunpack.c.l.b16 %v1050
  %v1105 = vunpack.c.l.b16 %v1051
  %v1106 = vunpack.c.h.b16 %v1051
  %v1107 = vunpack.c.l.b16 %v1052
  %v1108 = vunpack.c.l.b16 %v1053
  %v1109 = vunpack.c.h.b16 %v1053
  %v1110 = vunpack.c.l.b16 %v1054
  %v1111 = vunpack.c.l.b16 %v1055
  %v1112 = vunpack.c.h.b16 %v1055
  %v1113 = vunpack.c.l.b16 %v1056
  %v1114 = vunpack.c.l.b16 %v1057
  %v1115 = vunpack.c.h.b16 %v1057
  %v1116 = vunpack.c.l.b16 %v1058
  %v1117 = vunpack.c.l.b16 %v1059
  %v1118 = vunpack.c.h.b16 %v1059
  %v1119 = vunpack.c.l.b16 %v1060
  %v1120 = vunpack.c.l.b16 %v1061
  %v1121 = vunpack.c.h.b16 %v1061
  %v1122 = vunpack.c.l.b16 %v1062
  %v1123 = vunpack.c.l.b16 %v1063
  %v1124 = vunpack.c.h.b16 %v1063
  %v1125 = vunpack.c.l.b16 %v1064
  %v1126 = vunpack.c.l.b16 %v1065
  %v1127 = vunpack.c.h.b16 %v1065
  %v1128 = vunpack.c.l.b16 %v1066
  %v1129 = vunpack.c.l.b16 %v1067
  %v1130 = vunpack.c.h.b16 %v1067
  %v1131 = vunpack.c.l.b16 %v1068
  %v1132 = vunpack.c.l.b16 %v1069
  %v1133 = vunpack.c.h.b16 %v1069
  %v1134 = vunpack.c.l.b16 %v1070
  %v1135 = vunpack.c.l.b16 %v1071
  %v1136 = vunpack.c.h.b16 %v1071
  %v1137 = vunpack.c.l.b16 %v1072
  %v1138 = vpack.c.b16 %v1102, %v1099
  %v1139 = vpack.c.b16 %v1103, %v1100
  %v1140 = vpack.c.b16 %v1104, %v1101
  %v1141 = vpack.c.b16 %v1108, %v1105
  %v1142 = vpack.c.b16 %v1109, %v1106
  %v1143 = vpack.c.b16 %v1110, %v1107
  %v1144 = vpack.c.b16 %v1114, %v1111
  %v1145 = vpack.c.b16 %v1115, %v1112
  %v1146 = vpack.c.b16 %v1116, %v1113
  %v1147 = vpack.c.b16 %v1120, %v1117
  %v1148 = vpack.c.b16 %v1121, %v1118
  %v1149 = vpack.c.b16 %v1122, %v1119
  %v1150 = vpack.c.b16 %v1126, %v1123
  %v1151 = vpack.c.b16 %v1127, %v1124
  %v1152 = vpack.c.b16 %v1128, %v1125
  %v1153 = vpack.c.b16 %v1132, %v1129
  %v1154 = vpack.c.b16 %v1133, %v1130
  %v1155 = vpack.c.b16 %v1134, %v1131
  %v1156 = vpack.c.b16 %v1135, %v1135
  %v1157 = vpack.c.b16 %v1136, %v1136
  %v1158 = vpack.c.b16 %v1137, %v1137
  %v1174 = vsel %vm289, %v1140, 0
  %v1177 = vsel %vm289, %v1143, 0
  %v1180 = vsel %vm289, %v1146, 0
  %v1183 = vsel %vm289, %v1149, 0
  %v1186 = vsel %vm289, %v1152, 0
  %v1189 = vsel %vm289, %v1155, 0
  %v1192 = vsel %vm289, %v1158, 0
  %1194 = vmatpush.bf16.msra.mxu0 %v260
  %1195 = vmatpush.bf16.msra.mxu0 %v259
  %1196 = vmatpush.bf16.msra.mxu0 %v258
  %1197 = vmatpush.bf16.msra.mxu0 %v257
  %1198 = vmatpush.bf16.msra.mxu0 %v256
  %1199 = vmatpush.bf16.msra.mxu0 %v255
  %1200 = vmatpush.bf16.msra.mxu0 %v254
  %1201 = vmatpush.bf16.msra.mxu0 %v253
  %1202 = vmatmul.bf16.gmra.mxu0 %v1138
  %v1203 = vpop.f32.mrf.mxu0
  %v1204 = vadd.f32 %v79, %v1203
  %v1205 = vpop.f32.mrf.mxu0
  %v1206 = vadd.f32 %v79, %v1205
  %1207 = vmatmul.bf16.gmra.mxu0 %v1141
  %v1208 = vpop.f32.mrf.mxu0
  %v1209 = vadd.f32 %v79, %v1208
  %v1210 = vpop.f32.mrf.mxu0
  %v1211 = vadd.f32 %v79, %v1210
  %1212 = vmatmul.bf16.gmra.mxu0 %v1144
  %v1213 = vpop.f32.mrf.mxu0
  %v1214 = vadd.f32 %v79, %v1213
  %v1215 = vpop.f32.mrf.mxu0
  %v1216 = vadd.f32 %v79, %v1215
  %1217 = vmatmul.bf16.gmra.mxu0 %v1147
  %v1218 = vpop.f32.mrf.mxu0
  %v1219 = vadd.f32 %v79, %v1218
  %v1220 = vpop.f32.mrf.mxu0
  %v1221 = vadd.f32 %v79, %v1220
  %1222 = vmatmul.bf16.gmra.mxu0 %v1150
  %v1223 = vpop.f32.mrf.mxu0
  %v1224 = vadd.f32 %v79, %v1223
  %v1225 = vpop.f32.mrf.mxu0
  %v1226 = vadd.f32 %v79, %v1225
  %1227 = vmatmul.bf16.gmra.mxu0 %v1153
  %v1228 = vpop.f32.mrf.mxu0
  %v1229 = vadd.f32 %v79, %v1228
  %v1230 = vpop.f32.mrf.mxu0
  %v1231 = vadd.f32 %v79, %v1230
  %1232 = vmatmul.bf16.gmra.mxu0 %v1156
  %v1233 = vpop.f32.mrf.mxu0
  %v1234 = vadd.f32 %v79, %v1233
  %v1235 = vpop.f32.mrf.mxu0
  %1236 = vdwg.mxu0
  %1237 = vmatpush.bf16.msra.mxu0 %v268
  %1238 = vmatpush.bf16.msra.mxu0 %v267
  %1239 = vmatpush.bf16.msra.mxu0 %v266
  %1240 = vmatpush.bf16.msra.mxu0 %v265
  %1241 = vmatpush.bf16.msra.mxu0 %v264
  %1242 = vmatpush.bf16.msra.mxu0 %v263
  %1243 = vmatpush.bf16.msra.mxu0 %v262
  %1244 = vmatpush.bf16.msra.mxu0 %v261
  %1245 = vmatmul.bf16.gmra.mxu0 %v1139
  %v1246 = vpop.f32.mrf.mxu0
  %v1247 = vadd.f32 %v1204, %v1246
  %v1248 = vpop.f32.mrf.mxu0
  %v1249 = vadd.f32 %v1206, %v1248
  %1250 = vmatmul.bf16.gmra.mxu0 %v1142
  %v1251 = vpop.f32.mrf.mxu0
  %v1252 = vadd.f32 %v1209, %v1251
  %v1253 = vpop.f32.mrf.mxu0
  %v1254 = vadd.f32 %v1211, %v1253
  %1255 = vmatmul.bf16.gmra.mxu0 %v1145
  %v1256 = vpop.f32.mrf.mxu0
  %v1257 = vadd.f32 %v1214, %v1256
  %v1258 = vpop.f32.mrf.mxu0
  %v1259 = vadd.f32 %v1216, %v1258
  %1260 = vmatmul.bf16.gmra.mxu0 %v1148
  %v1261 = vpop.f32.mrf.mxu0
  %v1262 = vadd.f32 %v1219, %v1261
  %v1263 = vpop.f32.mrf.mxu0
  %v1264 = vadd.f32 %v1221, %v1263
  %1265 = vmatmul.bf16.gmra.mxu0 %v1151
  %v1266 = vpop.f32.mrf.mxu0
  %v1267 = vadd.f32 %v1224, %v1266
  %v1268 = vpop.f32.mrf.mxu0
  %v1269 = vadd.f32 %v1226, %v1268
  %1270 = vmatmul.bf16.gmra.mxu0 %v1154
  %v1271 = vpop.f32.mrf.mxu0
  %v1272 = vadd.f32 %v1229, %v1271
  %v1273 = vpop.f32.mrf.mxu0
  %v1274 = vadd.f32 %v1231, %v1273
  %1275 = vmatmul.bf16.gmra.mxu0 %v1157
  %v1276 = vpop.f32.mrf.mxu0
  %v1277 = vadd.f32 %v1234, %v1276
  %v1278 = vpop.f32.mrf.mxu0
  %1279 = vdwg.mxu0
  %1280 = vmatpush.bf16.msra.mxu0 0
  %1281 = vmatpush.bf16.msra.mxu0 0
  %1282 = vmatpush.bf16.msra.mxu0 0
  %1283 = vmatpush.bf16.msra.mxu0 0
  %1284 = vmatpush.bf16.msra.mxu0 0
  %1285 = vmatpush.bf16.msra.mxu0 0
  %1286 = vmatpush.bf16.msra.mxu0 %v270
  %1287 = vmatpush.bf16.msra.mxu0 %v269
  %1288 = vmatmul.bf16.gmra.mxu0 %v1174
  %v1289 = vpop.f32.mrf.mxu0
  %v1290 = vadd.f32 %v1247, %v1289
  %v1291 = vpop.f32.mrf.mxu0
  %v1292 = vadd.f32 %v1249, %v1291
  %1293 = vmatmul.bf16.gmra.mxu0 %v1177
  %v1294 = vpop.f32.mrf.mxu0
  %v1295 = vadd.f32 %v1252, %v1294
  %v1296 = vpop.f32.mrf.mxu0
  %v1297 = vadd.f32 %v1254, %v1296
  %1298 = vmatmul.bf16.gmra.mxu0 %v1180
  %v1299 = vpop.f32.mrf.mxu0
  %v1300 = vadd.f32 %v1257, %v1299
  %v1301 = vpop.f32.mrf.mxu0
  %v1302 = vadd.f32 %v1259, %v1301
  %1303 = vmatmul.bf16.gmra.mxu0 %v1183
  %v1304 = vpop.f32.mrf.mxu0
  %v1305 = vadd.f32 %v1262, %v1304
  %v1306 = vpop.f32.mrf.mxu0
  %v1307 = vadd.f32 %v1264, %v1306
  %1308 = vmatmul.bf16.gmra.mxu0 %v1186
  %v1309 = vpop.f32.mrf.mxu0
  %v1310 = vadd.f32 %v1267, %v1309
  %v1311 = vpop.f32.mrf.mxu0
  %v1312 = vadd.f32 %v1269, %v1311
  %1313 = vmatmul.bf16.gmra.mxu0 %v1189
  %v1314 = vpop.f32.mrf.mxu0
  %v1315 = vadd.f32 %v1272, %v1314
  %v1316 = vpop.f32.mrf.mxu0
  %v1317 = vadd.f32 %v1274, %v1316
  %1318 = vmatmul.bf16.gmra.mxu0 %v1192
  %v1319 = vpop.f32.mrf.mxu0
  %v1320 = vadd.f32 %v1277, %v1319
  %v1321 = vpop.f32.mrf.mxu0
  %1322 = vdwg.mxu0
  %v1323 = vmax.f32 %v1290, 0.0
  %v1324 = vmax.f32 %v1292, 0.0
  %v1325 = vmax.f32 %v1295, 0.0
  %v1326 = vmax.f32 %v1297, 0.0
  %v1327 = vmax.f32 %v1300, 0.0
  %v1328 = vmax.f32 %v1302, 0.0
  %v1329 = vmax.f32 %v1305, 0.0
  %v1330 = vmax.f32 %v1307, 0.0
  %v1331 = vmax.f32 %v1310, 0.0
  %v1332 = vmax.f32 %v1312, 0.0
  %v1333 = vmax.f32 %v1315, 0.0
  %v1334 = vmax.f32 %v1317, 0.0
  %v1335 = vmax.f32 %v1320, 0.0
  %v1336 = vmax.f32 %v1033, %v1323
  %v1337 = vmax.f32 %v1034, %v1324
  %v1338 = vmax.f32 %v1035, %v1325
  %v1339 = vmax.f32 %v1036, %v1326
  %v1340 = vmax.f32 %v1037, %v1327
  %v1341 = vmax.f32 %v1038, %v1328
  %v1342 = vmax.f32 %v1039, %v1329
  %v1343 = vmax.f32 %v1040, %v1330
  %v1344 = vmax.f32 %v1041, %v1331
  %v1345 = vmax.f32 %v1042, %v1332
  %v1346 = vmax.f32 %v1043, %v1333
  %v1347 = vmax.f32 %v1044, %v1334
  %v1348 = vmax.f32 %v1045, %v1335
  %v1349 = vmax.f32 %v743, %v1336
  %v1350 = vmax.f32 %v744, %v1337
  %v1351 = vmax.f32 %v745, %v1338
  %v1352 = vmax.f32 %v746, %v1339
  %v1353 = vmax.f32 %v747, %v1340
  %v1354 = vmax.f32 %v748, %v1341
  %v1355 = vmax.f32 %v749, %v1342
  %v1356 = vmax.f32 %v750, %v1343
  %v1357 = vmax.f32 %v751, %v1344
  %v1358 = vmax.f32 %v752, %v1345
  %v1359 = vmax.f32 %v753, %v1346
  %v1360 = vmax.f32 %v754, %v1347
  %v1361 = vmax.f32 %v755, %v1348
  %v1362 = vpack.c.bf16 %v1349, %v1349
  %v1363 = vpack.c.bf16 %v1350, %v1350
  %v1364 = vpack.c.bf16 %v1351, %v1351
  %v1365 = vpack.c.bf16 %v1352, %v1352
  %v1366 = vpack.c.bf16 %v1353, %v1353
  %v1367 = vpack.c.bf16 %v1354, %v1354
  %v1368 = vpack.c.bf16 %v1355, %v1355
  %v1369 = vpack.c.bf16 %v1356, %v1356
  %v1370 = vpack.c.bf16 %v1357, %v1357
  %v1371 = vpack.c.bf16 %v1358, %v1358
  %v1372 = vpack.c.bf16 %v1359, %v1359
  %v1373 = vpack.c.bf16 %v1360, %v1360
  %v1374 = vpack.c.bf16 %v1361, %v1361
  %vm1375 = vcmask 519168
  %1376 = vst.msk [vmem:[%s3] sm:$0xf] %vm1375, %v1362
  %1377 = vst.msk [vmem:[%s3 + $0x4] sm:$0xf] %vm1375, %v1363
  %1378 = vst.msk [vmem:[%s3 + $0x8] sm:$0xf] %vm1375, %v1364
  %1379 = vst.msk [vmem:[%s3 + $0xc] sm:$0xf] %vm1375, %v1365
  %1380 = vst.msk [vmem:[%s3 + $0x10] sm:$0xf] %vm1375, %v1366
  %1381 = vst.msk [vmem:[%s3 + $0x14] sm:$0xf] %vm1375, %v1367
  %1382 = vst.msk [vmem:[%s3 + $0x18] sm:$0xf] %vm1375, %v1368
  %1383 = vst.msk [vmem:[%s3 + $0x1c] sm:$0xf] %vm1375, %v1369
  %1384 = vst.msk [vmem:[%s3 + $0x20] sm:$0xf] %vm1375, %v1370
  %1385 = vst.msk [vmem:[%s3 + $0x24] sm:$0xf] %vm1375, %v1371
  %1386 = vst.msk [vmem:[%s3 + $0x28] sm:$0xf] %vm1375, %v1372
  %1387 = vst.msk [vmem:[%s3 + $0x2c] sm:$0xf] %vm1375, %v1373
  %vm1388 = vcmask 516096
  %1389 = vst.msk [vmem:[%s3 + $0x30] sm:$0x1] %vm1388, %v1374
  // Predicated region
  $region14: #{simple_cnn_forward.4} parent=0 // pred_check
    _
  $region15: #{simple_cnn_forward.4} parent=0 // pred_check_branch
    %1391 = sbr.rel (0) target = $region17
  $region16: #{simple_cnn_forward.4} parent=0 // pred_region
    _
  $region17: #{simple_cnn_forward.4} parent=0 // pred_fallthru
    _
  // Predicated region
  $region18: #{simple_cnn_forward.4} parent=0 // pred_check
    _
  $region19: #{simple_cnn_forward.4} parent=0 // pred_check_branch
    %1393 = sbr.rel (0) target = $region21
  $region20: #{simple_cnn_forward.4} parent=0 // pred_region
    _
  $region21: #{simple_cnn_forward.4} parent=0 // pred_fallthru
    _

// kernel: simple_cnn_forward.5
$region0: #{simple_cnn_forward.5}
  #allocation0 [shape = 'u32[]', space=smem, size = 0x4, offset = 0x4, fixed_abs, tag = 'smem constant byte address 0x4 - core index']
  #allocation1 [shape = 'u32[72,128]{1,0:T(1,128)}', space=vmem, size = 0x9000, scoped, tag = 'internal scratch']
  %s0 = inlined_call_operand.vmem [shape: bf16[2,3136], index: 0, kind: input, shape index: {}]
  %s1 = inlined_call_operand.vmem [shape: bf16[3136,128], index: 1, kind: input, shape index: {}]
  %s2 = inlined_call_operand.vmem [shape: f32[1,128], index: 2, kind: input, shape index: {}]
  %s3 = inlined_call_operand.vmem [shape: bf16[128,128], index: 3, kind: input, shape index: {}]
  %s4 = inlined_call_operand.vmem [shape: f32[1,128], index: 4, kind: input, shape index: {}]
  %s5 = inlined_call_operand.hbm [shape: f32[2,128], index: 5, kind: output, shape index: {}]
  %s6 = sld [smem:[#allocation0]]
  $region30: #{simple_cnn_forward.5} parent=0
    _
  %s8 = ssub.s32 1, %s6
  %s9 = scalar_select 0, %s8, %s6
  $region1: #{simple_cnn_forward.5} parent=0
    #allocation2 [shape = 'u8[1024]{0}', space=vmem, size = 0x400, scoped, tag = 'output window, operand 0, single buffered']
    #allocation3 [shape = 's32[1]{0}', space=sflag, size = 0x4, scoped, tag = 'scoped memory for simple_cnn_forward.5']
    %10 = vsyncpa [#allocation3], 0
    // Predicated region
    $region2: #{simple_cnn_forward.5} parent=1 // pred_check
      _
    $region3: #{simple_cnn_forward.5} parent=1 // pred_check_branch
      %12 = sbr.rel (0) target = $region5
    $region4: #{simple_cnn_forward.5} parent=1 // pred_region
      _
    $region5: #{simple_cnn_forward.5} parent=1 // pred_fallthru
      _
    // Predicated region
    $region6: #{simple_cnn_forward.5} parent=1 // pred_check
      _
    $region7: #{simple_cnn_forward.5} parent=1 // pred_check_branch
      %14 = sbr.rel (0) target = $region9
    $region8: #{simple_cnn_forward.5} parent=1 // pred_region
      _
    $region9: #{simple_cnn_forward.5} parent=1 // pred_fallthru
      _
    // Predicated region
    $region10: #{simple_cnn_forward.5} parent=1 // pred_check
      _
    $region11: #{simple_cnn_forward.5} parent=1 // pred_check_branch
      %16 = sbr.rel (0) target = $region13
    $region12: #{simple_cnn_forward.5} parent=1 // pred_region
      _
    $region13: #{simple_cnn_forward.5} parent=1 // pred_fallthru
      _
    // Predicated region
    $region14: #{simple_cnn_forward.5} parent=1 // pred_check
      _
    $region15: #{simple_cnn_forward.5} parent=1 // pred_check_branch
      %18 = sbr.rel (0) target = $region17
    $region16: #{simple_cnn_forward.5} parent=1 // pred_region
      _
    $region17: #{simple_cnn_forward.5} parent=1 // pred_fallthru
      _
    // Predicated region
    $region18: #{simple_cnn_forward.5} parent=1 // pred_check
      _
    $region19: #{simple_cnn_forward.5} parent=1 // pred_check_branch
      %20 = sbr.rel (0) target = $region21
    $region20: #{simple_cnn_forward.5} parent=1 // pred_region
      _
    $region21: #{simple_cnn_forward.5} parent=1 // pred_fallthru
      _
    %v22 = vld [vmem:[%s0] sm:$0xff]
    %v23 = vld [vmem:[%s0 + $0x8] sm:$0xff]
    %v24 = vld [vmem:[%s0 + $0x10] sm:$0xff]
    %v25 = vld [vmem:[%s0 + $0x18] sm:$0x1]
    %v26 = vld [vmem:[%s1] sm:$0xf]
    %v27 = vld [vmem:[%s1 + $0x4] sm:$0xf]
    %v28 = vld [vmem:[%s1 + $0x8] sm:$0xf]
    %v29 = vld [vmem:[%s1 + $0xc] sm:$0xf]
    %v30 = vld [vmem:[%s1 + $0x10] sm:$0xf]
    %v31 = vld [vmem:[%s1 + $0x14] sm:$0xf]
    %v32 = vld [vmem:[%s1 + $0x18] sm:$0xf]
    %v33 = vld [vmem:[%s1 + $0x1c] sm:$0xf]
    %v34 = vld [vmem:[%s1 + $0x20] sm:$0xf]
    %v35 = vld [vmem:[%s1 + $0x24] sm:$0xf]
    %v36 = vld [vmem:[%s1 + $0x28] sm:$0xf]
    %v37 = vld [vmem:[%s1 + $0x2c] sm:$0xf]
    %v38 = vld [vmem:[%s1 + $0x30] sm:$0xf]
    %v39 = vld [vmem:[%s1 + $0x34] sm:$0xf]
    %v40 = vld [vmem:[%s1 + $0x38] sm:$0xf]
    %v41 = vld [vmem:[%s1 + $0x3c] sm:$0xf]
    %v42 = vld [vmem:[%s1 + $0x40] sm:$0xf]
    %v43 = vld [vmem:[%s1 + $0x44] sm:$0xf]
    %v44 = vld [vmem:[%s1 + $0x48] sm:$0xf]
    %v45 = vld [vmem:[%s1 + $0x4c] sm:$0xf]
    %v46 = vld [vmem:[%s1 + $0x50] sm:$0xf]
    %v47 = vld [vmem:[%s1 + $0x54] sm:$0xf]
    %v48 = vld [vmem:[%s1 + $0x58] sm:$0xf]
    %v49 = vld [vmem:[%s1 + $0x5c] sm:$0xf]
    %v50 = vld [vmem:[%s1 + $0x60] sm:$0xf]
    %v51 = vld [vmem:[%s1 + $0x64] sm:$0xf]
    %v52 = vld [vmem:[%s1 + $0x68] sm:$0xf]
    %v53 = vld [vmem:[%s1 + $0x6c] sm:$0xf]
    %v54 = vld [vmem:[%s1 + $0x70] sm:$0xf]
    %v55 = vld [vmem:[%s1 + $0x74] sm:$0xf]
    %v56 = vld [vmem:[%s1 + $0x78] sm:$0xf]
    %v57 = vld [vmem:[%s1 + $0x7c] sm:$0xf]
    %v58 = vld [vmem:[%s1 + $0x80] sm:$0xf]
    %v59 = vld [vmem:[%s1 + $0x84] sm:$0xf]
    %v60 = vld [vmem:[%s1 + $0x88] sm:$0xf]
    %v61 = vld [vmem:[%s1 + $0x8c] sm:$0xf]
    %v62 = vld [vmem:[%s1 + $0x90] sm:$0xf]
    %v63 = vld [vmem:[%s1 + $0x94] sm:$0xf]
    %v64 = vld [vmem:[%s1 + $0x98] sm:$0xf]
    %v65 = vld [vmem:[%s1 + $0x9c] sm:$0xf]
    %v66 = vld [vmem:[%s1 + $0xa0] sm:$0xf]
    %v67 = vld [vmem:[%s1 + $0xa4] sm:$0xf]
    %v68 = vld [vmem:[%s1 + $0xa8] sm:$0xf]
    %v69 = vld [vmem:[%s1 + $0xac] sm:$0xf]
    %v70 = vld [vmem:[%s1 + $0xb0] sm:$0xf]
    %v71 = vld [vmem:[%s1 + $0xb4] sm:$0xf]
    %v72 = vld [vmem:[%s1 + $0xb8] sm:$0xf]
    %v73 = vld [vmem:[%s1 + $0xbc] sm:$0xf]
    %v74 = vld [vmem:[%s1 + $0xc0] sm:$0xf]
    %v75 = vld [vmem:[%s1 + $0xc4] sm:$0xf]
    %v76 = vld [vmem:[%s1 + $0xc8] sm:$0xf]
    %v77 = vld [vmem:[%s1 + $0xcc] sm:$0xf]
    %v78 = vld [vmem:[%s1 + $0xd0] sm:$0xf]
    %v79 = vld [vmem:[%s1 + $0xd4] sm:$0xf]
    %v80 = vld [vmem:[%s1 + $0xd8] sm:$0xf]
    %v81 = vld [vmem:[%s1 + $0xdc] sm:$0xf]
    %v82 = vld [vmem:[%s1 + $0xe0] sm:$0xf]
    %v83 = vld [vmem:[%s1 + $0xe4] sm:$0xf]
    %v84 = vld [vmem:[%s1 + $0xe8] sm:$0xf]
    %v85 = vld [vmem:[%s1 + $0xec] sm:$0xf]
    %v86 = vld [vmem:[%s1 + $0xf0] sm:$0xf]
    %v87 = vld [vmem:[%s1 + $0xf4] sm:$0xf]
    %v88 = vld [vmem:[%s1 + $0xf8] sm:$0xf]
    %v89 = vld [vmem:[%s1 + $0xfc] sm:$0xf]
    %v90 = vld [vmem:[%s1 + $0x100] sm:$0xf]
    %v91 = vld [vmem:[%s1 + $0x104] sm:$0xf]
    %v92 = vld [vmem:[%s1 + $0x108] sm:$0xf]
    %v93 = vld [vmem:[%s1 + $0x10c] sm:$0xf]
    %v94 = vld [vmem:[%s1 + $0x110] sm:$0xf]
    %v95 = vld [vmem:[%s1 + $0x114] sm:$0xf]
    %v96 = vld [vmem:[%s1 + $0x118] sm:$0xf]
    %v97 = vld [vmem:[%s1 + $0x11c] sm:$0xf]
    %v98 = vld [vmem:[%s1 + $0x120] sm:$0xf]
    %v99 = vld [vmem:[%s1 + $0x124] sm:$0xf]
    %v100 = vld [vmem:[%s1 + $0x128] sm:$0xf]
    %v101 = vld [vmem:[%s1 + $0x12c] sm:$0xf]
    %v102 = vld [vmem:[%s1 + $0x130] sm:$0xf]
    %v103 = vld [vmem:[%s1 + $0x134] sm:$0xf]
    %v104 = vld [vmem:[%s1 + $0x138] sm:$0xf]
    %v105 = vld [vmem:[%s1 + $0x13c] sm:$0xf]
    %v106 = vld [vmem:[%s1 + $0x140] sm:$0xf]
    %v107 = vld [vmem:[%s1 + $0x144] sm:$0xf]
    %v108 = vld [vmem:[%s1 + $0x148] sm:$0xf]
    %v109 = vld [vmem:[%s1 + $0x14c] sm:$0xf]
    %v110 = vld [vmem:[%s1 + $0x150] sm:$0xf]
    %v111 = vld [vmem:[%s1 + $0x154] sm:$0xf]
    %v112 = vld [vmem:[%s1 + $0x158] sm:$0xf]
    %v113 = vld [vmem:[%s1 + $0x15c] sm:$0xf]
    %v114 = vld [vmem:[%s1 + $0x160] sm:$0xf]
    %v115 = vld [vmem:[%s1 + $0x164] sm:$0xf]
    %v116 = vld [vmem:[%s1 + $0x168] sm:$0xf]
    %v117 = vld [vmem:[%s1 + $0x16c] sm:$0xf]
    %v118 = vld [vmem:[%s1 + $0x170] sm:$0xf]
    %v119 = vld [vmem:[%s1 + $0x174] sm:$0xf]
    %v120 = vld [vmem:[%s1 + $0x178] sm:$0xf]
    %v121 = vld [vmem:[%s1 + $0x17c] sm:$0xf]
    %v122 = vld [vmem:[%s1 + $0x180] sm:$0xf]
    %v123 = vld [vmem:[%s1 + $0x184] sm:$0xf]
    %v124 = vld [vmem:[%s1 + $0x188] sm:$0xf]
    %v125 = vld [vmem:[%s1 + $0x18c] sm:$0xf]
    %v126 = vld [vmem:[%s1 + $0x190] sm:$0xf]
    %v127 = vld [vmem:[%s1 + $0x194] sm:$0xf]
    %v128 = vld [vmem:[%s1 + $0x198] sm:$0xf]
    %v129 = vld [vmem:[%s1 + $0x19c] sm:$0xf]
    %v130 = vld [vmem:[%s1 + $0x1a0] sm:$0xf]
    %v131 = vld [vmem:[%s1 + $0x1a4] sm:$0xf]
    %v132 = vld [vmem:[%s1 + $0x1a8] sm:$0xf]
    %v133 = vld [vmem:[%s1 + $0x1ac] sm:$0xf]
    %v134 = vld [vmem:[%s1 + $0x1b0] sm:$0xf]
    %v135 = vld [vmem:[%s1 + $0x1b4] sm:$0xf]
    %v136 = vld [vmem:[%s1 + $0x1b8] sm:$0xf]
    %v137 = vld [vmem:[%s1 + $0x1bc] sm:$0xf]
    %v138 = vld [vmem:[%s1 + $0x1c0] sm:$0xf]
    %v139 = vld [vmem:[%s1 + $0x1c4] sm:$0xf]
    %v140 = vld [vmem:[%s1 + $0x1c8] sm:$0xf]
    %v141 = vld [vmem:[%s1 + $0x1cc] sm:$0xf]
    %v142 = vld [vmem:[%s1 + $0x1d0] sm:$0xf]
    %v143 = vld [vmem:[%s1 + $0x1d4] sm:$0xf]
    %v144 = vld [vmem:[%s1 + $0x1d8] sm:$0xf]
    %v145 = vld [vmem:[%s1 + $0x1dc] sm:$0xf]
    %v146 = vld [vmem:[%s1 + $0x1e0] sm:$0xf]
    %v147 = vld [vmem:[%s1 + $0x1e4] sm:$0xf]
    %v148 = vld [vmem:[%s1 + $0x1e8] sm:$0xf]
    %v149 = vld [vmem:[%s1 + $0x1ec] sm:$0xf]
    %v150 = vld [vmem:[%s1 + $0x1f0] sm:$0xf]
    %v151 = vld [vmem:[%s1 + $0x1f4] sm:$0xf]
    %v152 = vld [vmem:[%s1 + $0x1f8] sm:$0xf]
    %v153 = vld [vmem:[%s1 + $0x1fc] sm:$0xf]
    %v154 = vld [vmem:[%s1 + $0x200] sm:$0xf]
    %v155 = vld [vmem:[%s1 + $0x204] sm:$0xf]
    %v156 = vld [vmem:[%s1 + $0x208] sm:$0xf]
    %v157 = vld [vmem:[%s1 + $0x20c] sm:$0xf]
    %v158 = vld [vmem:[%s1 + $0x210] sm:$0xf]
    %v159 = vld [vmem:[%s1 + $0x214] sm:$0xf]
    %v160 = vld [vmem:[%s1 + $0x218] sm:$0xf]
    %v161 = vld [vmem:[%s1 + $0x21c] sm:$0xf]
    %v162 = vld [vmem:[%s1 + $0x220] sm:$0xf]
    %v163 = vld [vmem:[%s1 + $0x224] sm:$0xf]
    %v164 = vld [vmem:[%s1 + $0x228] sm:$0xf]
    %v165 = vld [vmem:[%s1 + $0x22c] sm:$0xf]
    %v166 = vld [vmem:[%s1 + $0x230] sm:$0xf]
    %v167 = vld [vmem:[%s1 + $0x234] sm:$0xf]
    %v168 = vld [vmem:[%s1 + $0x238] sm:$0xf]
    %v169 = vld [vmem:[%s1 + $0x23c] sm:$0xf]
    %v170 = vld [vmem:[%s1 + $0x240] sm:$0xf]
    %v171 = vld [vmem:[%s1 + $0x244] sm:$0xf]
    %v172 = vld [vmem:[%s1 + $0x248] sm:$0xf]
    %v173 = vld [vmem:[%s1 + $0x24c] sm:$0xf]
    %v174 = vld [vmem:[%s1 + $0x250] sm:$0xf]
    %v175 = vld [vmem:[%s1 + $0x254] sm:$0xf]
    %v176 = vld [vmem:[%s1 + $0x258] sm:$0xf]
    %v177 = vld [vmem:[%s1 + $0x25c] sm:$0xf]
    %v178 = vld [vmem:[%s1 + $0x260] sm:$0xf]
    %v179 = vld [vmem:[%s1 + $0x264] sm:$0xf]
    %v180 = vld [vmem:[%s1 + $0x268] sm:$0xf]
    %v181 = vld [vmem:[%s1 + $0x26c] sm:$0xf]
    %v182 = vld [vmem:[%s1 + $0x270] sm:$0xf]
    %v183 = vld [vmem:[%s1 + $0x274] sm:$0xf]
    %v184 = vld [vmem:[%s1 + $0x278] sm:$0xf]
    %v185 = vld [vmem:[%s1 + $0x27c] sm:$0xf]
    %v186 = vld [vmem:[%s1 + $0x280] sm:$0xf]
    %v187 = vld [vmem:[%s1 + $0x284] sm:$0xf]
    %v188 = vld [vmem:[%s1 + $0x288] sm:$0xf]
    %v189 = vld [vmem:[%s1 + $0x28c] sm:$0xf]
    %v190 = vld [vmem:[%s1 + $0x290] sm:$0xf]
    %v191 = vld [vmem:[%s1 + $0x294] sm:$0xf]
    %v192 = vld [vmem:[%s1 + $0x298] sm:$0xf]
    %v193 = vld [vmem:[%s1 + $0x29c] sm:$0xf]
    %v194 = vld [vmem:[%s1 + $0x2a0] sm:$0xf]
    %v195 = vld [vmem:[%s1 + $0x2a4] sm:$0xf]
    %v196 = vld [vmem:[%s1 + $0x2a8] sm:$0xf]
    %v197 = vld [vmem:[%s1 + $0x2ac] sm:$0xf]
    %v198 = vld [vmem:[%s1 + $0x2b0] sm:$0xf]
    %v199 = vld [vmem:[%s1 + $0x2b4] sm:$0xf]
    %v200 = vld [vmem:[%s1 + $0x2b8] sm:$0xf]
    %v201 = vld [vmem:[%s1 + $0x2bc] sm:$0xf]
    %v202 = vld [vmem:[%s1 + $0x2c0] sm:$0xf]
    %v203 = vld [vmem:[%s1 + $0x2c4] sm:$0xf]
    %v204 = vld [vmem:[%s1 + $0x2c8] sm:$0xf]
    %v205 = vld [vmem:[%s1 + $0x2cc] sm:$0xf]
    %v206 = vld [vmem:[%s1 + $0x2d0] sm:$0xf]
    %v207 = vld [vmem:[%s1 + $0x2d4] sm:$0xf]
    %v208 = vld [vmem:[%s1 + $0x2d8] sm:$0xf]
    %v209 = vld [vmem:[%s1 + $0x2dc] sm:$0xf]
    %v210 = vld [vmem:[%s1 + $0x2e0] sm:$0xf]
    %v211 = vld [vmem:[%s1 + $0x2e4] sm:$0xf]
    %v212 = vld [vmem:[%s1 + $0x2e8] sm:$0xf]
    %v213 = vld [vmem:[%s1 + $0x2ec] sm:$0xf]
    %v214 = vld [vmem:[%s1 + $0x2f0] sm:$0xf]
    %v215 = vld [vmem:[%s1 + $0x2f4] sm:$0xf]
    %v216 = vld [vmem:[%s1 + $0x2f8] sm:$0xf]
    %v217 = vld [vmem:[%s1 + $0x2fc] sm:$0xf]
    %v218 = vld [vmem:[%s1 + $0x300] sm:$0xf]
    %v219 = vld [vmem:[%s1 + $0x304] sm:$0xf]
    %v220 = vld [vmem:[%s1 + $0x308] sm:$0xf]
    %v221 = vld [vmem:[%s1 + $0x30c] sm:$0xf]
    %v222 = vld [vmem:[%s1 + $0x310] sm:$0xf]
    %v223 = vld [vmem:[%s1 + $0x314] sm:$0xf]
    %v224 = vld [vmem:[%s1 + $0x318] sm:$0xf]
    %v225 = vld [vmem:[%s1 + $0x31c] sm:$0xf]
    %v226 = vld [vmem:[%s1 + $0x320] sm:$0xf]
    %v227 = vld [vmem:[%s1 + $0x324] sm:$0xf]
    %v228 = vld [vmem:[%s1 + $0x328] sm:$0xf]
    %v229 = vld [vmem:[%s1 + $0x32c] sm:$0xf]
    %v230 = vld [vmem:[%s1 + $0x330] sm:$0xf]
    %v231 = vld [vmem:[%s1 + $0x334] sm:$0xf]
    %v232 = vld [vmem:[%s1 + $0x338] sm:$0xf]
    %v233 = vld [vmem:[%s1 + $0x33c] sm:$0xf]
    %v234 = vld [vmem:[%s1 + $0x340] sm:$0xf]
    %v235 = vld [vmem:[%s1 + $0x344] sm:$0xf]
    %v236 = vld [vmem:[%s1 + $0x348] sm:$0xf]
    %v237 = vld [vmem:[%s1 + $0x34c] sm:$0xf]
    %v238 = vld [vmem:[%s1 + $0x350] sm:$0xf]
    %v239 = vld [vmem:[%s1 + $0x354] sm:$0xf]
    %v240 = vld [vmem:[%s1 + $0x358] sm:$0xf]
    %v241 = vld [vmem:[%s1 + $0x35c] sm:$0xf]
    %v242 = vld [vmem:[%s1 + $0x360] sm:$0xf]
    %v243 = vld [vmem:[%s1 + $0x364] sm:$0xf]
    %v244 = vld [vmem:[%s1 + $0x368] sm:$0xf]
    %v245 = vld [vmem:[%s1 + $0x36c] sm:$0xf]
    %v246 = vld [vmem:[%s1 + $0x370] sm:$0xf]
    %v247 = vld [vmem:[%s1 + $0x374] sm:$0xf]
    %v248 = vld [vmem:[%s1 + $0x378] sm:$0xf]
    %v249 = vld [vmem:[%s1 + $0x37c] sm:$0xf]
    %v250 = vld [vmem:[%s1 + $0x380] sm:$0xf]
    %v251 = vld [vmem:[%s1 + $0x384] sm:$0xf]
    %v252 = vld [vmem:[%s1 + $0x388] sm:$0xf]
    %v253 = vld [vmem:[%s1 + $0x38c] sm:$0xf]
    %v254 = vld [vmem:[%s1 + $0x390] sm:$0xf]
    %v255 = vld [vmem:[%s1 + $0x394] sm:$0xf]
    %v256 = vld [vmem:[%s1 + $0x398] sm:$0xf]
    %v257 = vld [vmem:[%s1 + $0x39c] sm:$0xf]
    %v258 = vld [vmem:[%s1 + $0x3a0] sm:$0xf]
    %v259 = vld [vmem:[%s1 + $0x3a4] sm:$0xf]
    %v260 = vld [vmem:[%s1 + $0x3a8] sm:$0xf]
    %v261 = vld [vmem:[%s1 + $0x3ac] sm:$0xf]
    %v262 = vld [vmem:[%s1 + $0x3b0] sm:$0xf]
    %v263 = vld [vmem:[%s1 + $0x3b4] sm:$0xf]
    %v264 = vld [vmem:[%s1 + $0x3b8] sm:$0xf]
    %v265 = vld [vmem:[%s1 + $0x3bc] sm:$0xf]
    %v266 = vld [vmem:[%s1 + $0x3c0] sm:$0xf]
    %v267 = vld [vmem:[%s1 + $0x3c4] sm:$0xf]
    %v268 = vld [vmem:[%s1 + $0x3c8] sm:$0xf]
    %v269 = vld [vmem:[%s1 + $0x3cc] sm:$0xf]
    %v270 = vld [vmem:[%s1 + $0x3d0] sm:$0xf]
    %v271 = vld [vmem:[%s1 + $0x3d4] sm:$0xf]
    %v272 = vld [vmem:[%s1 + $0x3d8] sm:$0xf]
    %v273 = vld [vmem:[%s1 + $0x3dc] sm:$0xf]
    %v274 = vld [vmem:[%s1 + $0x3e0] sm:$0xf]
    %v275 = vld [vmem:[%s1 + $0x3e4] sm:$0xf]
    %v276 = vld [vmem:[%s1 + $0x3e8] sm:$0xf]
    %v277 = vld [vmem:[%s1 + $0x3ec] sm:$0xf]
    %v278 = vld [vmem:[%s1 + $0x3f0] sm:$0xf]
    %v279 = vld [vmem:[%s1 + $0x3f4] sm:$0xf]
    %v280 = vld [vmem:[%s1 + $0x3f8] sm:$0xf]
    %v281 = vld [vmem:[%s1 + $0x3fc] sm:$0xf]
    %v282 = vld [vmem:[%s1 + $0x400] sm:$0xf]
    %v283 = vld [vmem:[%s1 + $0x404] sm:$0xf]
    %v284 = vld [vmem:[%s1 + $0x408] sm:$0xf]
    %v285 = vld [vmem:[%s1 + $0x40c] sm:$0xf]
    %v286 = vld [vmem:[%s1 + $0x410] sm:$0xf]
    %v287 = vld [vmem:[%s1 + $0x414] sm:$0xf]
    %v288 = vld [vmem:[%s1 + $0x418] sm:$0xf]
    %v289 = vld [vmem:[%s1 + $0x41c] sm:$0xf]
    %v290 = vld [vmem:[%s1 + $0x420] sm:$0xf]
    %v291 = vld [vmem:[%s1 + $0x424] sm:$0xf]
    %v292 = vld [vmem:[%s1 + $0x428] sm:$0xf]
    %v293 = vld [vmem:[%s1 + $0x42c] sm:$0xf]
    %v294 = vld [vmem:[%s1 + $0x430] sm:$0xf]
    %v295 = vld [vmem:[%s1 + $0x434] sm:$0xf]
    %v296 = vld [vmem:[%s1 + $0x438] sm:$0xf]
    %v297 = vld [vmem:[%s1 + $0x43c] sm:$0xf]
    %v298 = vld [vmem:[%s1 + $0x440] sm:$0xf]
    %v299 = vld [vmem:[%s1 + $0x444] sm:$0xf]
    %v300 = vld [vmem:[%s1 + $0x448] sm:$0xf]
    %v301 = vld [vmem:[%s1 + $0x44c] sm:$0xf]
    %v302 = vld [vmem:[%s1 + $0x450] sm:$0xf]
    %v303 = vld [vmem:[%s1 + $0x454] sm:$0xf]
    %v304 = vld [vmem:[%s1 + $0x458] sm:$0xf]
    %v305 = vld [vmem:[%s1 + $0x45c] sm:$0xf]
    %v306 = vld [vmem:[%s1 + $0x460] sm:$0xf]
    %v307 = vld [vmem:[%s1 + $0x464] sm:$0xf]
    %v308 = vld [vmem:[%s1 + $0x468] sm:$0xf]
    %v309 = vld [vmem:[%s1 + $0x46c] sm:$0xf]
    %v310 = vld [vmem:[%s1 + $0x470] sm:$0xf]
    %v311 = vld [vmem:[%s1 + $0x474] sm:$0xf]
    %v312 = vld [vmem:[%s1 + $0x478] sm:$0xf]
    %v313 = vld [vmem:[%s1 + $0x47c] sm:$0xf]
    %v314 = vld [vmem:[%s1 + $0x480] sm:$0xf]
    %v315 = vld [vmem:[%s1 + $0x484] sm:$0xf]
    %v316 = vld [vmem:[%s1 + $0x488] sm:$0xf]
    %v317 = vld [vmem:[%s1 + $0x48c] sm:$0xf]
    %v318 = vld [vmem:[%s1 + $0x490] sm:$0xf]
    %v319 = vld [vmem:[%s1 + $0x494] sm:$0xf]
    %v320 = vld [vmem:[%s1 + $0x498] sm:$0xf]
    %v321 = vld [vmem:[%s1 + $0x49c] sm:$0xf]
    %v322 = vld [vmem:[%s1 + $0x4a0] sm:$0xf]
    %v323 = vld [vmem:[%s1 + $0x4a4] sm:$0xf]
    %v324 = vld [vmem:[%s1 + $0x4a8] sm:$0xf]
    %v325 = vld [vmem:[%s1 + $0x4ac] sm:$0xf]
    %v326 = vld [vmem:[%s1 + $0x4b0] sm:$0xf]
    %v327 = vld [vmem:[%s1 + $0x4b4] sm:$0xf]
    %v328 = vld [vmem:[%s1 + $0x4b8] sm:$0xf]
    %v329 = vld [vmem:[%s1 + $0x4bc] sm:$0xf]
    %v330 = vld [vmem:[%s1 + $0x4c0] sm:$0xf]
    %v331 = vld [vmem:[%s1 + $0x4c4] sm:$0xf]
    %v332 = vld [vmem:[%s1 + $0x4c8] sm:$0xf]
    %v333 = vld [vmem:[%s1 + $0x4cc] sm:$0xf]
    %v334 = vld [vmem:[%s1 + $0x4d0] sm:$0xf]
    %v335 = vld [vmem:[%s1 + $0x4d4] sm:$0xf]
    %v336 = vld [vmem:[%s1 + $0x4d8] sm:$0xf]
    %v337 = vld [vmem:[%s1 + $0x4dc] sm:$0xf]
    %v338 = vld [vmem:[%s1 + $0x4e0] sm:$0xf]
    %v339 = vld [vmem:[%s1 + $0x4e4] sm:$0xf]
    %v340 = vld [vmem:[%s1 + $0x4e8] sm:$0xf]
    %v341 = vld [vmem:[%s1 + $0x4ec] sm:$0xf]
    %v342 = vld [vmem:[%s1 + $0x4f0] sm:$0xf]
    %v343 = vld [vmem:[%s1 + $0x4f4] sm:$0xf]
    %v344 = vld [vmem:[%s1 + $0x4f8] sm:$0xf]
    %v345 = vld [vmem:[%s1 + $0x4fc] sm:$0xf]
    %v346 = vld [vmem:[%s1 + $0x500] sm:$0xf]
    %v347 = vld [vmem:[%s1 + $0x504] sm:$0xf]
    %v348 = vld [vmem:[%s1 + $0x508] sm:$0xf]
    %v349 = vld [vmem:[%s1 + $0x50c] sm:$0xf]
    %v350 = vld [vmem:[%s1 + $0x510] sm:$0xf]
    %v351 = vld [vmem:[%s1 + $0x514] sm:$0xf]
    %v352 = vld [vmem:[%s1 + $0x518] sm:$0xf]
    %v353 = vld [vmem:[%s1 + $0x51c] sm:$0xf]
    %v354 = vld [vmem:[%s1 + $0x520] sm:$0xf]
    %v355 = vld [vmem:[%s1 + $0x524] sm:$0xf]
    %v356 = vld [vmem:[%s1 + $0x528] sm:$0xf]
    %v357 = vld [vmem:[%s1 + $0x52c] sm:$0xf]
    %v358 = vld [vmem:[%s1 + $0x530] sm:$0xf]
    %v359 = vld [vmem:[%s1 + $0x534] sm:$0xf]
    %v360 = vld [vmem:[%s1 + $0x538] sm:$0xf]
    %v361 = vld [vmem:[%s1 + $0x53c] sm:$0xf]
    %v362 = vld [vmem:[%s1 + $0x540] sm:$0xf]
    %v363 = vld [vmem:[%s1 + $0x544] sm:$0xf]
    %v364 = vld [vmem:[%s1 + $0x548] sm:$0xf]
    %v365 = vld [vmem:[%s1 + $0x54c] sm:$0xf]
    %v366 = vld [vmem:[%s1 + $0x550] sm:$0xf]
    %v367 = vld [vmem:[%s1 + $0x554] sm:$0xf]
    %v368 = vld [vmem:[%s1 + $0x558] sm:$0xf]
    %v369 = vld [vmem:[%s1 + $0x55c] sm:$0xf]
    %v370 = vld [vmem:[%s1 + $0x560] sm:$0xf]
    %v371 = vld [vmem:[%s1 + $0x564] sm:$0xf]
    %v372 = vld [vmem:[%s1 + $0x568] sm:$0xf]
    %v373 = vld [vmem:[%s1 + $0x56c] sm:$0xf]
    %v374 = vld [vmem:[%s1 + $0x570] sm:$0xf]
    %v375 = vld [vmem:[%s1 + $0x574] sm:$0xf]
    %v376 = vld [vmem:[%s1 + $0x578] sm:$0xf]
    %v377 = vld [vmem:[%s1 + $0x57c] sm:$0xf]
    %v378 = vld [vmem:[%s1 + $0x580] sm:$0xf]
    %v379 = vld [vmem:[%s1 + $0x584] sm:$0xf]
    %v380 = vld [vmem:[%s1 + $0x588] sm:$0xf]
    %v381 = vld [vmem:[%s1 + $0x58c] sm:$0xf]
    %v382 = vld [vmem:[%s1 + $0x590] sm:$0xf]
    %v383 = vld [vmem:[%s1 + $0x594] sm:$0xf]
    %v384 = vld [vmem:[%s1 + $0x598] sm:$0xf]
    %v385 = vld [vmem:[%s1 + $0x59c] sm:$0xf]
    %v386 = vld [vmem:[%s1 + $0x5a0] sm:$0xf]
    %v387 = vld [vmem:[%s1 + $0x5a4] sm:$0xf]
    %v388 = vld [vmem:[%s1 + $0x5a8] sm:$0xf]
    %v389 = vld [vmem:[%s1 + $0x5ac] sm:$0xf]
    %v390 = vld [vmem:[%s1 + $0x5b0] sm:$0xf]
    %v391 = vld [vmem:[%s1 + $0x5b4] sm:$0xf]
    %v392 = vld [vmem:[%s1 + $0x5b8] sm:$0xf]
    %v393 = vld [vmem:[%s1 + $0x5bc] sm:$0xf]
    %v394 = vld [vmem:[%s1 + $0x5c0] sm:$0xf]
    %v395 = vld [vmem:[%s1 + $0x5c4] sm:$0xf]
    %v396 = vld [vmem:[%s1 + $0x5c8] sm:$0xf]
    %v397 = vld [vmem:[%s1 + $0x5cc] sm:$0xf]
    %v398 = vld [vmem:[%s1 + $0x5d0] sm:$0xf]
    %v399 = vld [vmem:[%s1 + $0x5d4] sm:$0xf]
    %v400 = vld [vmem:[%s1 + $0x5d8] sm:$0xf]
    %v401 = vld [vmem:[%s1 + $0x5dc] sm:$0xf]
    %v402 = vld [vmem:[%s1 + $0x5e0] sm:$0xf]
    %v403 = vld [vmem:[%s1 + $0x5e4] sm:$0xf]
    %v404 = vld [vmem:[%s1 + $0x5e8] sm:$0xf]
    %v405 = vld [vmem:[%s1 + $0x5ec] sm:$0xf]
    %v406 = vld [vmem:[%s1 + $0x5f0] sm:$0xf]
    %v407 = vld [vmem:[%s1 + $0x5f4] sm:$0xf]
    %v408 = vld [vmem:[%s1 + $0x5f8] sm:$0xf]
    %v409 = vld [vmem:[%s1 + $0x5fc] sm:$0xf]
    %v410 = vld [vmem:[%s1 + $0x600] sm:$0xf]
    %v411 = vld [vmem:[%s1 + $0x604] sm:$0xf]
    %v412 = vld [vmem:[%s1 + $0x608] sm:$0xf]
    %v413 = vld [vmem:[%s1 + $0x60c] sm:$0xf]
    %v414 = vld [vmem:[%s1 + $0x610] sm:$0xf]
    %v415 = vld [vmem:[%s1 + $0x614] sm:$0xf]
    %v416 = vld [vmem:[%s1 + $0x618] sm:$0xf]
    %v417 = vld [vmem:[%s1 + $0x61c] sm:$0xf]
    %v418 = vld [vmem:[%s2] sm:$0x1]
    %v420 = vperm.slane %v418, 0
    %423 = vst [vmem:[#allocation1] ss:$9 sm:$0xff] %v22
    %v424 = vld [vmem:[#allocation1] sm:$0xff]
    %v425 = vld [vmem:[#allocation1 + $0x9] sm:$0xff]
    %v426 = vld [vmem:[#allocation1 + $0x12] sm:$0xff]
    %v427 = vld [vmem:[#allocation1 + $0x1b] sm:$0xff]
    %v428 = vld [vmem:[#allocation1 + $0x24] sm:$0xff]
    %v429 = vld [vmem:[#allocation1 + $0x2d] sm:$0xff]
    %v430 = vld [vmem:[#allocation1 + $0x36] sm:$0xff]
    %v431 = vld [vmem:[#allocation1 + $0x3f] sm:$0xff]
    %433 = vst [vmem:[#allocation1] ss:$9 sm:$0xff] %v23
    %v434 = vld [vmem:[#allocation1] sm:$0xff]
    %v435 = vld [vmem:[#allocation1 + $0x9] sm:$0xff]
    %v436 = vld [vmem:[#allocation1 + $0x12] sm:$0xff]
    %v437 = vld [vmem:[#allocation1 + $0x1b] sm:$0xff]
    %v438 = vld [vmem:[#allocation1 + $0x24] sm:$0xff]
    %v439 = vld [vmem:[#allocation1 + $0x2d] sm:$0xff]
    %v440 = vld [vmem:[#allocation1 + $0x36] sm:$0xff]
    %v441 = vld [vmem:[#allocation1 + $0x3f] sm:$0xff]
    %443 = vst [vmem:[#allocation1] ss:$9 sm:$0xff] %v24
    %v444 = vld [vmem:[#allocation1] sm:$0xff]
    %v445 = vld [vmem:[#allocation1 + $0x9] sm:$0xff]
    %v446 = vld [vmem:[#allocation1 + $0x12] sm:$0xff]
    %v447 = vld [vmem:[#allocation1 + $0x1b] sm:$0xff]
    %v448 = vld [vmem:[#allocation1 + $0x24] sm:$0xff]
    %v449 = vld [vmem:[#allocation1 + $0x2d] sm:$0xff]
    %v450 = vld [vmem:[#allocation1 + $0x36] sm:$0xff]
    %v451 = vld [vmem:[#allocation1 + $0x3f] sm:$0xff]
    %453 = vst [vmem:[#allocation1] ss:$9 sm:$0xff] %v25
    %v454 = vld [vmem:[#allocation1] sm:$0xff]
    %v871 = vunpack.c.l.b16 %v26
    %v872 = vunpack.c.l.b16 %v27
    %v873 = vunpack.c.l.b16 %v28
    %v874 = vunpack.c.l.b16 %v29
    %v875 = vunpack.c.l.b16 %v30
    %v876 = vunpack.c.l.b16 %v31
    %v877 = vunpack.c.l.b16 %v32
    %v878 = vunpack.c.l.b16 %v33
    %v879 = vunpack.c.l.b16 %v34
    %v880 = vunpack.c.l.b16 %v35
    %v881 = vunpack.c.l.b16 %v36
    %v882 = vunpack.c.l.b16 %v37
    %v883 = vunpack.c.l.b16 %v38
    %v884 = vunpack.c.l.b16 %v39
    %v885 = vunpack.c.l.b16 %v40
    %v886 = vunpack.c.l.b16 %v41
    %v887 = vunpack.c.l.b16 %v42
    %v888 = vunpack.c.l.b16 %v43
    %v889 = vunpack.c.l.b16 %v44
    %v890 = vunpack.c.l.b16 %v45
    %v891 = vunpack.c.l.b16 %v46
    %v892 = vunpack.c.l.b16 %v47
    %v893 = vunpack.c.l.b16 %v48
    %v894 = vunpack.c.l.b16 %v49
    %v895 = vunpack.c.l.b16 %v50
    %v896 = vunpack.c.l.b16 %v51
    %v897 = vunpack.c.l.b16 %v52
    %v898 = vunpack.c.l.b16 %v53
    %v899 = vunpack.c.l.b16 %v54
    %v900 = vunpack.c.l.b16 %v55
    %v901 = vunpack.c.l.b16 %v56
    %v902 = vunpack.c.l.b16 %v57
    %v903 = vunpack.c.l.b16 %v58
    %v904 = vunpack.c.l.b16 %v59
    %v905 = vunpack.c.l.b16 %v60
    %v906 = vunpack.c.l.b16 %v61
    %v907 = vunpack.c.l.b16 %v62
    %v908 = vunpack.c.l.b16 %v63
    %v909 = vunpack.c.l.b16 %v64
    %v910 = vunpack.c.l.b16 %v65
    %v911 = vunpack.c.l.b16 %v66
    %v912 = vunpack.c.l.b16 %v67
    %v913 = vunpack.c.l.b16 %v68
    %v914 = vunpack.c.l.b16 %v69
    %v915 = vunpack.c.l.b16 %v70
    %v916 = vunpack.c.l.b16 %v71
    %v917 = vunpack.c.l.b16 %v72
    %v918 = vunpack.c.l.b16 %v73
    %v919 = vunpack.c.l.b16 %v74
    %v920 = vunpack.c.l.b16 %v75
    %v921 = vunpack.c.l.b16 %v76
    %v922 = vunpack.c.l.b16 %v77
    %v923 = vunpack.c.l.b16 %v78
    %v924 = vunpack.c.l.b16 %v79
    %v925 = vunpack.c.l.b16 %v80
    %v926 = vunpack.c.l.b16 %v81
    %v927 = vunpack.c.l.b16 %v82
    %v928 = vunpack.c.l.b16 %v83
    %v929 = vunpack.c.l.b16 %v84
    %v930 = vunpack.c.l.b16 %v85
    %v931 = vunpack.c.l.b16 %v86
    %v932 = vunpack.c.l.b16 %v87
    %v933 = vunpack.c.l.b16 %v88
    %v934 = vunpack.c.l.b16 %v89
    %v935 = vunpack.c.l.b16 %v90
    %v936 = vunpack.c.l.b16 %v91
    %v937 = vunpack.c.l.b16 %v92
    %v938 = vunpack.c.l.b16 %v93
    %v939 = vunpack.c.l.b16 %v94
    %v940 = vunpack.c.l.b16 %v95
    %v941 = vunpack.c.l.b16 %v96
    %v942 = vunpack.c.l.b16 %v97
    %v943 = vunpack.c.l.b16 %v98
    %v944 = vunpack.c.l.b16 %v99
    %v945 = vunpack.c.l.b16 %v100
    %v946 = vunpack.c.l.b16 %v101
    %v947 = vunpack.c.l.b16 %v102
    %v948 = vunpack.c.l.b16 %v103
    %v949 = vunpack.c.l.b16 %v104
    %v950 = vunpack.c.l.b16 %v105
    %v951 = vunpack.c.l.b16 %v106
    %v952 = vunpack.c.l.b16 %v107
    %v953 = vunpack.c.l.b16 %v108
    %v954 = vunpack.c.l.b16 %v109
    %v955 = vunpack.c.l.b16 %v110
    %v956 = vunpack.c.l.b16 %v111
    %v957 = vunpack.c.l.b16 %v112
    %v958 = vunpack.c.l.b16 %v113
    %v959 = vunpack.c.l.b16 %v114
    %v960 = vunpack.c.l.b16 %v115
    %v961 = vunpack.c.l.b16 %v116
    %v962 = vunpack.c.l.b16 %v117
    %v963 = vunpack.c.l.b16 %v118
    %v964 = vunpack.c.l.b16 %v119
    %v965 = vunpack.c.l.b16 %v120
    %v966 = vunpack.c.l.b16 %v121
    %v967 = vunpack.c.l.b16 %v122
    %v968 = vunpack.c.l.b16 %v123
    %v969 = vunpack.c.l.b16 %v124
    %v970 = vunpack.c.l.b16 %v125
    %v971 = vunpack.c.l.b16 %v126
    %v972 = vunpack.c.l.b16 %v127
    %v973 = vunpack.c.l.b16 %v128
    %v974 = vunpack.c.l.b16 %v129
    %v975 = vunpack.c.l.b16 %v130
    %v976 = vunpack.c.l.b16 %v131
    %v977 = vunpack.c.l.b16 %v132
    %v978 = vunpack.c.l.b16 %v133
    %v979 = vunpack.c.l.b16 %v134
    %v980 = vunpack.c.l.b16 %v135
    %v981 = vunpack.c.l.b16 %v136
    %v982 = vunpack.c.l.b16 %v137
    %v983 = vunpack.c.l.b16 %v138
    %v984 = vunpack.c.l.b16 %v139
    %v985 = vunpack.c.l.b16 %v140
    %v986 = vunpack.c.l.b16 %v141
    %v987 = vunpack.c.l.b16 %v142
    %v988 = vunpack.c.l.b16 %v143
    %v989 = vunpack.c.l.b16 %v144
    %v990 = vunpack.c.l.b16 %v145
    %v991 = vunpack.c.l.b16 %v146
    %v992 = vunpack.c.l.b16 %v147
    %v993 = vunpack.c.l.b16 %v148
    %v994 = vunpack.c.l.b16 %v149
    %v995 = vunpack.c.l.b16 %v150
    %v996 = vunpack.c.l.b16 %v151
    %v997 = vunpack.c.l.b16 %v152
    %v998 = vunpack.c.l.b16 %v153
    %v999 = vunpack.c.l.b16 %v154
    %v1000 = vunpack.c.l.b16 %v155
    %v1001 = vunpack.c.l.b16 %v156
    %v1002 = vunpack.c.l.b16 %v157
    %v1003 = vunpack.c.l.b16 %v158
    %v1004 = vunpack.c.l.b16 %v159
    %v1005 = vunpack.c.l.b16 %v160
    %v1006 = vunpack.c.l.b16 %v161
    %v1007 = vunpack.c.l.b16 %v162
    %v1008 = vunpack.c.l.b16 %v163
    %v1009 = vunpack.c.l.b16 %v164
    %v1010 = vunpack.c.l.b16 %v165
    %v1011 = vunpack.c.l.b16 %v166
    %v1012 = vunpack.c.l.b16 %v167
    %v1013 = vunpack.c.l.b16 %v168
    %v1014 = vunpack.c.l.b16 %v169
    %v1015 = vunpack.c.l.b16 %v170
    %v1016 = vunpack.c.l.b16 %v171
    %v1017 = vunpack.c.l.b16 %v172
    %v1018 = vunpack.c.l.b16 %v173
    %v1019 = vunpack.c.l.b16 %v174
    %v1020 = vunpack.c.l.b16 %v175
    %v1021 = vunpack.c.l.b16 %v176
    %v1022 = vunpack.c.l.b16 %v177
    %v1023 = vunpack.c.l.b16 %v178
    %v1024 = vunpack.c.l.b16 %v179
    %v1025 = vunpack.c.l.b16 %v180
    %v1026 = vunpack.c.l.b16 %v181
    %v1027 = vunpack.c.l.b16 %v182
    %v1028 = vunpack.c.l.b16 %v183
    %v1029 = vunpack.c.l.b16 %v184
    %v1030 = vunpack.c.l.b16 %v185
    %v1031 = vunpack.c.l.b16 %v186
    %v1032 = vunpack.c.l.b16 %v187
    %v1033 = vunpack.c.l.b16 %v188
    %v1034 = vunpack.c.l.b16 %v189
    %v1035 = vunpack.c.l.b16 %v190
    %v1036 = vunpack.c.l.b16 %v191
    %v1037 = vunpack.c.l.b16 %v192
    %v1038 = vunpack.c.l.b16 %v193
    %v1039 = vunpack.c.l.b16 %v194
    %v1040 = vunpack.c.l.b16 %v195
    %v1041 = vunpack.c.l.b16 %v196
    %v1042 = vunpack.c.l.b16 %v197
    %v1043 = vunpack.c.l.b16 %v198
    %v1044 = vunpack.c.l.b16 %v199
    %v1045 = vunpack.c.l.b16 %v200
    %v1046 = vunpack.c.l.b16 %v201
    %v1047 = vunpack.c.l.b16 %v202
    %v1048 = vunpack.c.l.b16 %v203
    %v1049 = vunpack.c.l.b16 %v204
    %v1050 = vunpack.c.l.b16 %v205
    %v1051 = vunpack.c.l.b16 %v206
    %v1052 = vunpack.c.l.b16 %v207
    %v1053 = vunpack.c.l.b16 %v208
    %v1054 = vunpack.c.l.b16 %v209
    %v1055 = vunpack.c.l.b16 %v210
    %v1056 = vunpack.c.l.b16 %v211
    %v1057 = vunpack.c.l.b16 %v212
    %v1058 = vunpack.c.l.b16 %v213
    %v1059 = vunpack.c.l.b16 %v214
    %v1060 = vunpack.c.l.b16 %v215
    %v1061 = vunpack.c.l.b16 %v216
    %v1062 = vunpack.c.l.b16 %v217
    %v1063 = vunpack.c.l.b16 %v218
    %v1064 = vunpack.c.l.b16 %v219
    %v1065 = vunpack.c.l.b16 %v220
    %v1066 = vunpack.c.l.b16 %v221
    %v1067 = vunpack.c.l.b16 %v222
    %v1068 = vunpack.c.l.b16 %v223
    %v1069 = vunpack.c.l.b16 %v224
    %v1070 = vunpack.c.l.b16 %v225
    %v1071 = vunpack.c.l.b16 %v226
    %v1072 = vunpack.c.l.b16 %v227
    %v1073 = vunpack.c.l.b16 %v228
    %v1074 = vunpack.c.l.b16 %v229
    %v1075 = vunpack.c.l.b16 %v230
    %v1076 = vunpack.c.l.b16 %v231
    %v1077 = vunpack.c.l.b16 %v232
    %v1078 = vunpack.c.l.b16 %v233
    %v1079 = vunpack.c.l.b16 %v234
    %v1080 = vunpack.c.l.b16 %v235
    %v1081 = vunpack.c.l.b16 %v236
    %v1082 = vunpack.c.l.b16 %v237
    %v1083 = vunpack.c.l.b16 %v238
    %v1084 = vunpack.c.l.b16 %v239
    %v1085 = vunpack.c.l.b16 %v240
    %v1086 = vunpack.c.l.b16 %v241
    %v1087 = vunpack.c.l.b16 %v242
    %v1088 = vunpack.c.l.b16 %v243
    %v1089 = vunpack.c.l.b16 %v244
    %v1090 = vunpack.c.l.b16 %v245
    %v1091 = vunpack.c.l.b16 %v246
    %v1092 = vunpack.c.l.b16 %v247
    %v1093 = vunpack.c.l.b16 %v248
    %v1094 = vunpack.c.l.b16 %v249
    %v1095 = vunpack.c.l.b16 %v250
    %v1096 = vunpack.c.l.b16 %v251
    %v1097 = vunpack.c.l.b16 %v252
    %v1098 = vunpack.c.l.b16 %v253
    %v1099 = vunpack.c.l.b16 %v254
    %v1100 = vunpack.c.l.b16 %v255
    %v1101 = vunpack.c.l.b16 %v256
    %v1102 = vunpack.c.l.b16 %v257
    %v1103 = vunpack.c.l.b16 %v258
    %v1104 = vunpack.c.l.b16 %v259
    %v1105 = vunpack.c.l.b16 %v260
    %v1106 = vunpack.c.l.b16 %v261
    %v1107 = vunpack.c.l.b16 %v262
    %v1108 = vunpack.c.l.b16 %v263
    %v1109 = vunpack.c.l.b16 %v264
    %v1110 = vunpack.c.l.b16 %v265
    %v1111 = vunpack.c.l.b16 %v266
    %v1112 = vunpack.c.l.b16 %v267
    %v1113 = vunpack.c.l.b16 %v268
    %v1114 = vunpack.c.l.b16 %v269
    %v1115 = vunpack.c.l.b16 %v270
    %v1116 = vunpack.c.l.b16 %v271
    %v1117 = vunpack.c.l.b16 %v272
    %v1118 = vunpack.c.l.b16 %v273
    %v1119 = vunpack.c.l.b16 %v274
    %v1120 = vunpack.c.l.b16 %v275
    %v1121 = vunpack.c.l.b16 %v276
    %v1122 = vunpack.c.l.b16 %v277
    %v1123 = vunpack.c.l.b16 %v278
    %v1124 = vunpack.c.l.b16 %v279
    %v1125 = vunpack.c.l.b16 %v280
    %v1126 = vunpack.c.l.b16 %v281
    %v1127 = vunpack.c.l.b16 %v282
    %v1128 = vunpack.c.l.b16 %v283
    %v1129 = vunpack.c.l.b16 %v284
    %v1130 = vunpack.c.l.b16 %v285
    %v1131 = vunpack.c.l.b16 %v286
    %v1132 = vunpack.c.l.b16 %v287
    %v1133 = vunpack.c.l.b16 %v288
    %v1134 = vunpack.c.l.b16 %v289
    %v1135 = vunpack.c.l.b16 %v290
    %v1136 = vunpack.c.l.b16 %v291
    %v1137 = vunpack.c.l.b16 %v292
    %v1138 = vunpack.c.l.b16 %v293
    %v1139 = vunpack.c.l.b16 %v294
    %v1140 = vunpack.c.l.b16 %v295
    %v1141 = vunpack.c.l.b16 %v296
    %v1142 = vunpack.c.l.b16 %v297
    %v1143 = vunpack.c.l.b16 %v298
    %v1144 = vunpack.c.l.b16 %v299
    %v1145 = vunpack.c.l.b16 %v300
    %v1146 = vunpack.c.l.b16 %v301
    %v1147 = vunpack.c.l.b16 %v302
    %v1148 = vunpack.c.l.b16 %v303
    %v1149 = vunpack.c.l.b16 %v304
    %v1150 = vunpack.c.l.b16 %v305
    %v1151 = vunpack.c.l.b16 %v306
    %v1152 = vunpack.c.l.b16 %v307
    %v1153 = vunpack.c.l.b16 %v308
    %v1154 = vunpack.c.l.b16 %v309
    %v1155 = vunpack.c.l.b16 %v310
    %v1156 = vunpack.c.l.b16 %v311
    %v1157 = vunpack.c.l.b16 %v312
    %v1158 = vunpack.c.l.b16 %v313
    %v1159 = vunpack.c.l.b16 %v314
    %v1160 = vunpack.c.l.b16 %v315
    %v1161 = vunpack.c.l.b16 %v316
    %v1162 = vunpack.c.l.b16 %v317
    %v1163 = vunpack.c.l.b16 %v318
    %v1164 = vunpack.c.l.b16 %v319
    %v1165 = vunpack.c.l.b16 %v320
    %v1166 = vunpack.c.l.b16 %v321
    %v1167 = vunpack.c.l.b16 %v322
    %v1168 = vunpack.c.l.b16 %v323
    %v1169 = vunpack.c.l.b16 %v324
    %v1170 = vunpack.c.l.b16 %v325
    %v1171 = vunpack.c.l.b16 %v326
    %v1172 = vunpack.c.l.b16 %v327
    %v1173 = vunpack.c.l.b16 %v328
    %v1174 = vunpack.c.l.b16 %v329
    %v1175 = vunpack.c.l.b16 %v330
    %v1176 = vunpack.c.l.b16 %v331
    %v1177 = vunpack.c.l.b16 %v332
    %v1178 = vunpack.c.l.b16 %v333
    %v1179 = vunpack.c.l.b16 %v334
    %v1180 = vunpack.c.l.b16 %v335
    %v1181 = vunpack.c.l.b16 %v336
    %v1182 = vunpack.c.l.b16 %v337
    %v1183 = vunpack.c.l.b16 %v338
    %v1184 = vunpack.c.l.b16 %v339
    %v1185 = vunpack.c.l.b16 %v340
    %v1186 = vunpack.c.l.b16 %v341
    %v1187 = vunpack.c.l.b16 %v342
    %v1188 = vunpack.c.l.b16 %v343
    %v1189 = vunpack.c.l.b16 %v344
    %v1190 = vunpack.c.l.b16 %v345
    %v1191 = vunpack.c.l.b16 %v346
    %v1192 = vunpack.c.l.b16 %v347
    %v1193 = vunpack.c.l.b16 %v348
    %v1194 = vunpack.c.l.b16 %v349
    %v1195 = vunpack.c.l.b16 %v350
    %v1196 = vunpack.c.l.b16 %v351
    %v1197 = vunpack.c.l.b16 %v352
    %v1198 = vunpack.c.l.b16 %v353
    %v1199 = vunpack.c.l.b16 %v354
    %v1200 = vunpack.c.l.b16 %v355
    %v1201 = vunpack.c.l.b16 %v356
    %v1202 = vunpack.c.l.b16 %v357
    %v1203 = vunpack.c.l.b16 %v358
    %v1204 = vunpack.c.l.b16 %v359
    %v1205 = vunpack.c.l.b16 %v360
    %v1206 = vunpack.c.l.b16 %v361
    %v1207 = vunpack.c.l.b16 %v362
    %v1208 = vunpack.c.l.b16 %v363
    %v1209 = vunpack.c.l.b16 %v364
    %v1210 = vunpack.c.l.b16 %v365
    %v1211 = vunpack.c.l.b16 %v366
    %v1212 = vunpack.c.l.b16 %v367
    %v1213 = vunpack.c.l.b16 %v368
    %v1214 = vunpack.c.l.b16 %v369
    %v1215 = vunpack.c.l.b16 %v370
    %v1216 = vunpack.c.l.b16 %v371
    %v1217 = vunpack.c.l.b16 %v372
    %v1218 = vunpack.c.l.b16 %v373
    %v1219 = vunpack.c.l.b16 %v374
    %v1220 = vunpack.c.l.b16 %v375
    %v1221 = vunpack.c.l.b16 %v376
    %v1222 = vunpack.c.l.b16 %v377
    %v1223 = vunpack.c.l.b16 %v378
    %v1224 = vunpack.c.l.b16 %v379
    %v1225 = vunpack.c.l.b16 %v380
    %v1226 = vunpack.c.l.b16 %v381
    %v1227 = vunpack.c.l.b16 %v382
    %v1228 = vunpack.c.l.b16 %v383
    %v1229 = vunpack.c.l.b16 %v384
    %v1230 = vunpack.c.l.b16 %v385
    %v1231 = vunpack.c.l.b16 %v386
    %v1232 = vunpack.c.l.b16 %v387
    %v1233 = vunpack.c.l.b16 %v388
    %v1234 = vunpack.c.l.b16 %v389
    %v1235 = vunpack.c.l.b16 %v390
    %v1236 = vunpack.c.l.b16 %v391
    %v1237 = vunpack.c.l.b16 %v392
    %v1238 = vunpack.c.l.b16 %v393
    %v1239 = vunpack.c.l.b16 %v394
    %v1240 = vunpack.c.l.b16 %v395
    %v1241 = vunpack.c.l.b16 %v396
    %v1242 = vunpack.c.l.b16 %v397
    %v1243 = vunpack.c.l.b16 %v398
    %v1244 = vunpack.c.l.b16 %v399
    %v1245 = vunpack.c.l.b16 %v400
    %v1246 = vunpack.c.l.b16 %v401
    %v1247 = vunpack.c.l.b16 %v402
    %v1248 = vunpack.c.l.b16 %v403
    %v1249 = vunpack.c.l.b16 %v404
    %v1250 = vunpack.c.l.b16 %v405
    %v1251 = vunpack.c.l.b16 %v406
    %v1252 = vunpack.c.l.b16 %v407
    %v1253 = vunpack.c.l.b16 %v408
    %v1254 = vunpack.c.l.b16 %v409
    %v1255 = vunpack.c.l.b16 %v410
    %v1256 = vunpack.c.l.b16 %v411
    %v1257 = vunpack.c.l.b16 %v412
    %v1258 = vunpack.c.l.b16 %v413
    %v1259 = vunpack.c.l.b16 %v414
    %v1260 = vunpack.c.l.b16 %v415
    %v1261 = vunpack.c.l.b16 %v416
    %v1262 = vunpack.c.l.b16 %v417
    %v1263 = vpack.c.b16 %v872, %v871
    %v1264 = vpack.c.b16 %v874, %v873
    %v1265 = vpack.c.b16 %v876, %v875
    %v1266 = vpack.c.b16 %v878, %v877
    %v1267 = vpack.c.b16 %v880, %v879
    %v1268 = vpack.c.b16 %v882, %v881
    %v1269 = vpack.c.b16 %v884, %v883
    %v1270 = vpack.c.b16 %v886, %v885
    %v1271 = vpack.c.b16 %v888, %v887
    %v1272 = vpack.c.b16 %v890, %v889
    %v1273 = vpack.c.b16 %v892, %v891
    %v1274 = vpack.c.b16 %v894, %v893
    %v1275 = vpack.c.b16 %v896, %v895
    %v1276 = vpack.c.b16 %v898, %v897
    %v1277 = vpack.c.b16 %v900, %v899
    %v1278 = vpack.c.b16 %v902, %v901
    %v1279 = vpack.c.b16 %v904, %v903
    %v1280 = vpack.c.b16 %v906, %v905
    %v1281 = vpack.c.b16 %v908, %v907
    %v1282 = vpack.c.b16 %v910, %v909
    %v1283 = vpack.c.b16 %v912, %v911
    %v1284 = vpack.c.b16 %v914, %v913
    %v1285 = vpack.c.b16 %v916, %v915
    %v1286 = vpack.c.b16 %v918, %v917
    %v1287 = vpack.c.b16 %v920, %v919
    %v1288 = vpack.c.b16 %v922, %v921
    %v1289 = vpack.c.b16 %v924, %v923
    %v1290 = vpack.c.b16 %v926, %v925
    %v1291 = vpack.c.b16 %v928, %v927
    %v1292 = vpack.c.b16 %v930, %v929
    %v1293 = vpack.c.b16 %v932, %v931
    %v1294 = vpack.c.b16 %v934, %v933
    %v1295 = vpack.c.b16 %v936, %v935
    %v1296 = vpack.c.b16 %v938, %v937
    %v1297 = vpack.c.b16 %v940, %v939
    %v1298 = vpack.c.b16 %v942, %v941
    %v1299 = vpack.c.b16 %v944, %v943
    %v1300 = vpack.c.b16 %v946, %v945
    %v1301 = vpack.c.b16 %v948, %v947
    %v1302 = vpack.c.b16 %v950, %v949
    %v1303 = vpack.c.b16 %v952, %v951
    %v1304 = vpack.c.b16 %v954, %v953
    %v1305 = vpack.c.b16 %v956, %v955
    %v1306 = vpack.c.b16 %v958, %v957
    %v1307 = vpack.c.b16 %v960, %v959
    %v1308 = vpack.c.b16 %v962, %v961
    %v1309 = vpack.c.b16 %v964, %v963
    %v1310 = vpack.c.b16 %v966, %v965
    %v1311 = vpack.c.b16 %v968, %v967
    %v1312 = vpack.c.b16 %v970, %v969
    %v1313 = vpack.c.b16 %v972, %v971
    %v1314 = vpack.c.b16 %v974, %v973
    %v1315 = vpack.c.b16 %v976, %v975
    %v1316 = vpack.c.b16 %v978, %v977
    %v1317 = vpack.c.b16 %v980, %v979
    %v1318 = vpack.c.b16 %v982, %v981
    %v1319 = vpack.c.b16 %v984, %v983
    %v1320 = vpack.c.b16 %v986, %v985
    %v1321 = vpack.c.b16 %v988, %v987
    %v1322 = vpack.c.b16 %v990, %v989
    %v1323 = vpack.c.b16 %v992, %v991
    %v1324 = vpack.c.b16 %v994, %v993
    %v1325 = vpack.c.b16 %v996, %v995
    %v1326 = vpack.c.b16 %v998, %v997
    %v1327 = vpack.c.b16 %v1000, %v999
    %v1328 = vpack.c.b16 %v1002, %v1001
    %v1329 = vpack.c.b16 %v1004, %v1003
    %v1330 = vpack.c.b16 %v1006, %v1005
    %v1331 = vpack.c.b16 %v1008, %v1007
    %v1332 = vpack.c.b16 %v1010, %v1009
    %v1333 = vpack.c.b16 %v1012, %v1011
    %v1334 = vpack.c.b16 %v1014, %v1013
    %v1335 = vpack.c.b16 %v1016, %v1015
    %v1336 = vpack.c.b16 %v1018, %v1017
    %v1337 = vpack.c.b16 %v1020, %v1019
    %v1338 = vpack.c.b16 %v1022, %v1021
    %v1339 = vpack.c.b16 %v1024, %v1023
    %v1340 = vpack.c.b16 %v1026, %v1025
    %v1341 = vpack.c.b16 %v1028, %v1027
    %v1342 = vpack.c.b16 %v1030, %v1029
    %v1343 = vpack.c.b16 %v1032, %v1031
    %v1344 = vpack.c.b16 %v1034, %v1033
    %v1345 = vpack.c.b16 %v1036, %v1035
    %v1346 = vpack.c.b16 %v1038, %v1037
    %v1347 = vpack.c.b16 %v1040, %v1039
    %v1348 = vpack.c.b16 %v1042, %v1041
    %v1349 = vpack.c.b16 %v1044, %v1043
    %v1350 = vpack.c.b16 %v1046, %v1045
    %v1351 = vpack.c.b16 %v1048, %v1047
    %v1352 = vpack.c.b16 %v1050, %v1049
    %v1353 = vpack.c.b16 %v1052, %v1051
    %v1354 = vpack.c.b16 %v1054, %v1053
    %v1355 = vpack.c.b16 %v1056, %v1055
    %v1356 = vpack.c.b16 %v1058, %v1057
    %v1357 = vpack.c.b16 %v1060, %v1059
    %v1358 = vpack.c.b16 %v1062, %v1061
    %v1359 = vpack.c.b16 %v1064, %v1063
    %v1360 = vpack.c.b16 %v1066, %v1065
    %v1361 = vpack.c.b16 %v1068, %v1067
    %v1362 = vpack.c.b16 %v1070, %v1069
    %v1363 = vpack.c.b16 %v1072, %v1071
    %v1364 = vpack.c.b16 %v1074, %v1073
    %v1365 = vpack.c.b16 %v1076, %v1075
    %v1366 = vpack.c.b16 %v1078, %v1077
    %v1367 = vpack.c.b16 %v1080, %v1079
    %v1368 = vpack.c.b16 %v1082, %v1081
    %v1369 = vpack.c.b16 %v1084, %v1083
    %v1370 = vpack.c.b16 %v1086, %v1085
    %v1371 = vpack.c.b16 %v1088, %v1087
    %v1372 = vpack.c.b16 %v1090, %v1089
    %v1373 = vpack.c.b16 %v1092, %v1091
    %v1374 = vpack.c.b16 %v1094, %v1093
    %v1375 = vpack.c.b16 %v1096, %v1095
    %v1376 = vpack.c.b16 %v1098, %v1097
    %v1377 = vpack.c.b16 %v1100, %v1099
    %v1378 = vpack.c.b16 %v1102, %v1101
    %v1379 = vpack.c.b16 %v1104, %v1103
    %v1380 = vpack.c.b16 %v1106, %v1105
    %v1381 = vpack.c.b16 %v1108, %v1107
    %v1382 = vpack.c.b16 %v1110, %v1109
    %v1383 = vpack.c.b16 %v1112, %v1111
    %v1384 = vpack.c.b16 %v1114, %v1113
    %v1385 = vpack.c.b16 %v1116, %v1115
    %v1386 = vpack.c.b16 %v1118, %v1117
    %v1387 = vpack.c.b16 %v1120, %v1119
    %v1388 = vpack.c.b16 %v1122, %v1121
    %v1389 = vpack.c.b16 %v1124, %v1123
    %v1390 = vpack.c.b16 %v1126, %v1125
    %v1391 = vpack.c.b16 %v1128, %v1127
    %v1392 = vpack.c.b16 %v1130, %v1129
    %v1393 = vpack.c.b16 %v1132, %v1131
    %v1394 = vpack.c.b16 %v1134, %v1133
    %v1395 = vpack.c.b16 %v1136, %v1135
    %v1396 = vpack.c.b16 %v1138, %v1137
    %v1397 = vpack.c.b16 %v1140, %v1139
    %v1398 = vpack.c.b16 %v1142, %v1141
    %v1399 = vpack.c.b16 %v1144, %v1143
    %v1400 = vpack.c.b16 %v1146, %v1145
    %v1401 = vpack.c.b16 %v1148, %v1147
    %v1402 = vpack.c.b16 %v1150, %v1149
    %v1403 = vpack.c.b16 %v1152, %v1151
    %v1404 = vpack.c.b16 %v1154, %v1153
    %v1405 = vpack.c.b16 %v1156, %v1155
    %v1406 = vpack.c.b16 %v1158, %v1157
    %v1407 = vpack.c.b16 %v1160, %v1159
    %v1408 = vpack.c.b16 %v1162, %v1161
    %v1409 = vpack.c.b16 %v1164, %v1163
    %v1410 = vpack.c.b16 %v1166, %v1165
    %v1411 = vpack.c.b16 %v1168, %v1167
    %v1412 = vpack.c.b16 %v1170, %v1169
    %v1413 = vpack.c.b16 %v1172, %v1171
    %v1414 = vpack.c.b16 %v1174, %v1173
    %v1415 = vpack.c.b16 %v1176, %v1175
    %v1416 = vpack.c.b16 %v1178, %v1177
    %v1417 = vpack.c.b16 %v1180, %v1179
    %v1418 = vpack.c.b16 %v1182, %v1181
    %v1419 = vpack.c.b16 %v1184, %v1183
    %v1420 = vpack.c.b16 %v1186, %v1185
    %v1421 = vpack.c.b16 %v1188, %v1187
    %v1422 = vpack.c.b16 %v1190, %v1189
    %v1423 = vpack.c.b16 %v1192, %v1191
    %v1424 = vpack.c.b16 %v1194, %v1193
    %v1425 = vpack.c.b16 %v1196, %v1195
    %v1426 = vpack.c.b16 %v1198, %v1197
    %v1427 = vpack.c.b16 %v1200, %v1199
    %v1428 = vpack.c.b16 %v1202, %v1201
    %v1429 = vpack.c.b16 %v1204, %v1203
    %v1430 = vpack.c.b16 %v1206, %v1205
    %v1431 = vpack.c.b16 %v1208, %v1207
    %v1432 = vpack.c.b16 %v1210, %v1209
    %v1433 = vpack.c.b16 %v1212, %v1211
    %v1434 = vpack.c.b16 %v1214, %v1213
    %v1435 = vpack.c.b16 %v1216, %v1215
    %v1436 = vpack.c.b16 %v1218, %v1217
    %v1437 = vpack.c.b16 %v1220, %v1219
    %v1438 = vpack.c.b16 %v1222, %v1221
    %v1439 = vpack.c.b16 %v1224, %v1223
    %v1440 = vpack.c.b16 %v1226, %v1225
    %v1441 = vpack.c.b16 %v1228, %v1227
    %v1442 = vpack.c.b16 %v1230, %v1229
    %v1443 = vpack.c.b16 %v1232, %v1231
    %v1444 = vpack.c.b16 %v1234, %v1233
    %v1445 = vpack.c.b16 %v1236, %v1235
    %v1446 = vpack.c.b16 %v1238, %v1237
    %v1447 = vpack.c.b16 %v1240, %v1239
    %v1448 = vpack.c.b16 %v1242, %v1241
    %v1449 = vpack.c.b16 %v1244, %v1243
    %v1450 = vpack.c.b16 %v1246, %v1245
    %v1451 = vpack.c.b16 %v1248, %v1247
    %v1452 = vpack.c.b16 %v1250, %v1249
    %v1453 = vpack.c.b16 %v1252, %v1251
    %v1454 = vpack.c.b16 %v1254, %v1253
    %v1455 = vpack.c.b16 %v1256, %v1255
    %v1456 = vpack.c.b16 %v1258, %v1257
    %v1457 = vpack.c.b16 %v1260, %v1259
    %v1458 = vpack.c.b16 %v1262, %v1261
    %vm1655 = vcmask 523264
    %v1656 = vsel %vm1655, %v454, 0
    %1658 = vmatpush.bf16.msra.mxu0 %v1270
    %1659 = vmatpush.bf16.msra.mxu0 %v1269
    %1660 = vmatpush.bf16.msra.mxu0 %v1268
    %1661 = vmatpush.bf16.msra.mxu0 %v1267
    %1662 = vmatpush.bf16.msra.mxu0 %v1266
    %1663 = vmatpush.bf16.msra.mxu0 %v1265
    %1664 = vmatpush.bf16.msra.mxu0 %v1264
    %1665 = vmatpush.bf16.msra.mxu0 %v1263
    %1666 = vmatmul.bf16.gmra.mxu0 %v424
    %v1667 = vpop.f32.mrf.mxu0
    %v1668 = vadd.f32 %v420, %v1667
    %v1669 = vpop.f32.mrf.mxu0
    %1670 = vdwg.mxu0
    %1671 = vmatpush.bf16.msra.mxu0 %v1278
    %1672 = vmatpush.bf16.msra.mxu0 %v1277
    %1673 = vmatpush.bf16.msra.mxu0 %v1276
    %1674 = vmatpush.bf16.msra.mxu0 %v1275
    %1675 = vmatpush.bf16.msra.mxu0 %v1274
    %1676 = vmatpush.bf16.msra.mxu0 %v1273
    %1677 = vmatpush.bf16.msra.mxu0 %v1272
    %1678 = vmatpush.bf16.msra.mxu0 %v1271
    %1679 = vmatmul.bf16.gmra.mxu0 %v425
    %v1680 = vpop.f32.mrf.mxu0
    %v1681 = vadd.f32 %v1668, %v1680
    %v1682 = vpop.f32.mrf.mxu0
    %1683 = vdwg.mxu0
    %1684 = vmatpush.bf16.msra.mxu0 %v1286
    %1685 = vmatpush.bf16.msra.mxu0 %v1285
    %1686 = vmatpush.bf16.msra.mxu0 %v1284
    %1687 = vmatpush.bf16.msra.mxu0 %v1283
    %1688 = vmatpush.bf16.msra.mxu0 %v1282
    %1689 = vmatpush.bf16.msra.mxu0 %v1281
    %1690 = vmatpush.bf16.msra.mxu0 %v1280
    %1691 = vmatpush.bf16.msra.mxu0 %v1279
    %1692 = vmatmul.bf16.gmra.mxu0 %v426
    %v1693 = vpop.f32.mrf.mxu0
    %v1694 = vadd.f32 %v1681, %v1693
    %v1695 = vpop.f32.mrf.mxu0
    %1696 = vdwg.mxu0
    %1697 = vmatpush.bf16.msra.mxu0 %v1294
    %1698 = vmatpush.bf16.msra.mxu0 %v1293
    %1699 = vmatpush.bf16.msra.mxu0 %v1292
    %1700 = vmatpush.bf16.msra.mxu0 %v1291
    %1701 = vmatpush.bf16.msra.mxu0 %v1290
    %1702 = vmatpush.bf16.msra.mxu0 %v1289
    %1703 = vmatpush.bf16.msra.mxu0 %v1288
    %1704 = vmatpush.bf16.msra.mxu0 %v1287
    %1705 = vmatmul.bf16.gmra.mxu0 %v427
    %v1706 = vpop.f32.mrf.mxu0
    %v1707 = vadd.f32 %v1694, %v1706
    %v1708 = vpop.f32.mrf.mxu0
    %1709 = vdwg.mxu0
    %1710 = vmatpush.bf16.msra.mxu0 %v1302
    %1711 = vmatpush.bf16.msra.mxu0 %v1301
    %1712 = vmatpush.bf16.msra.mxu0 %v1300
    %1713 = vmatpush.bf16.msra.mxu0 %v1299
    %1714 = vmatpush.bf16.msra.mxu0 %v1298
    %1715 = vmatpush.bf16.msra.mxu0 %v1297
    %1716 = vmatpush.bf16.msra.mxu0 %v1296
    %1717 = vmatpush.bf16.msra.mxu0 %v1295
    %1718 = vmatmul.bf16.gmra.mxu0 %v428
    %v1719 = vpop.f32.mrf.mxu0
    %v1720 = vadd.f32 %v1707, %v1719
    %v1721 = vpop.f32.mrf.mxu0
    %1722 = vdwg.mxu0
    %1723 = vmatpush.bf16.msra.mxu0 %v1310
    %1724 = vmatpush.bf16.msra.mxu0 %v1309
    %1725 = vmatpush.bf16.msra.mxu0 %v1308
    %1726 = vmatpush.bf16.msra.mxu0 %v1307
    %1727 = vmatpush.bf16.msra.mxu0 %v1306
    %1728 = vmatpush.bf16.msra.mxu0 %v1305
    %1729 = vmatpush.bf16.msra.mxu0 %v1304
    %1730 = vmatpush.bf16.msra.mxu0 %v1303
    %1731 = vmatmul.bf16.gmra.mxu0 %v429
    %v1732 = vpop.f32.mrf.mxu0
    %v1733 = vadd.f32 %v1720, %v1732
    %v1734 = vpop.f32.mrf.mxu0
    %1735 = vdwg.mxu0
    %1736 = vmatpush.bf16.msra.mxu0 %v1318
    %1737 = vmatpush.bf16.msra.mxu0 %v1317
    %1738 = vmatpush.bf16.msra.mxu0 %v1316
    %1739 = vmatpush.bf16.msra.mxu0 %v1315
    %1740 = vmatpush.bf16.msra.mxu0 %v1314
    %1741 = vmatpush.bf16.msra.mxu0 %v1313
    %1742 = vmatpush.bf16.msra.mxu0 %v1312
    %1743 = vmatpush.bf16.msra.mxu0 %v1311
    %1744 = vmatmul.bf16.gmra.mxu0 %v430
    %v1745 = vpop.f32.mrf.mxu0
    %v1746 = vadd.f32 %v1733, %v1745
    %v1747 = vpop.f32.mrf.mxu0
    %1748 = vdwg.mxu0
    %1749 = vmatpush.bf16.msra.mxu0 %v1326
    %1750 = vmatpush.bf16.msra.mxu0 %v1325
    %1751 = vmatpush.bf16.msra.mxu0 %v1324
    %1752 = vmatpush.bf16.msra.mxu0 %v1323
    %1753 = vmatpush.bf16.msra.mxu0 %v1322
    %1754 = vmatpush.bf16.msra.mxu0 %v1321
    %1755 = vmatpush.bf16.msra.mxu0 %v1320
    %1756 = vmatpush.bf16.msra.mxu0 %v1319
    %1757 = vmatmul.bf16.gmra.mxu0 %v431
    %v1758 = vpop.f32.mrf.mxu0
    %v1759 = vadd.f32 %v1746, %v1758
    %v1760 = vpop.f32.mrf.mxu0
    %1761 = vdwg.mxu0
    %1762 = vmatpush.bf16.msra.mxu0 %v1334
    %1763 = vmatpush.bf16.msra.mxu0 %v1333
    %1764 = vmatpush.bf16.msra.mxu0 %v1332
    %1765 = vmatpush.bf16.msra.mxu0 %v1331
    %1766 = vmatpush.bf16.msra.mxu0 %v1330
    %1767 = vmatpush.bf16.msra.mxu0 %v1329
    %1768 = vmatpush.bf16.msra.mxu0 %v1328
    %1769 = vmatpush.bf16.msra.mxu0 %v1327
    %1770 = vmatmul.bf16.gmra.mxu0 %v434
    %v1771 = vpop.f32.mrf.mxu0
    %v1772 = vadd.f32 %v1759, %v1771
    %v1773 = vpop.f32.mrf.mxu0
    %1774 = vdwg.mxu0
    %1775 = vmatpush.bf16.msra.mxu0 %v1342
    %1776 = vmatpush.bf16.msra.mxu0 %v1341
    %1777 = vmatpush.bf16.msra.mxu0 %v1340
    %1778 = vmatpush.bf16.msra.mxu0 %v1339
    %1779 = vmatpush.bf16.msra.mxu0 %v1338
    %1780 = vmatpush.bf16.msra.mxu0 %v1337
    %1781 = vmatpush.bf16.msra.mxu0 %v1336
    %1782 = vmatpush.bf16.msra.mxu0 %v1335
    %1783 = vmatmul.bf16.gmra.mxu0 %v435
    %v1784 = vpop.f32.mrf.mxu0
    %v1785 = vadd.f32 %v1772, %v1784
    %v1786 = vpop.f32.mrf.mxu0
    %1787 = vdwg.mxu0
    %1788 = vmatpush.bf16.msra.mxu0 %v1350
    %1789 = vmatpush.bf16.msra.mxu0 %v1349
    %1790 = vmatpush.bf16.msra.mxu0 %v1348
    %1791 = vmatpush.bf16.msra.mxu0 %v1347
    %1792 = vmatpush.bf16.msra.mxu0 %v1346
    %1793 = vmatpush.bf16.msra.mxu0 %v1345
    %1794 = vmatpush.bf16.msra.mxu0 %v1344
    %1795 = vmatpush.bf16.msra.mxu0 %v1343
    %1796 = vmatmul.bf16.gmra.mxu0 %v436
    %v1797 = vpop.f32.mrf.mxu0
    %v1798 = vadd.f32 %v1785, %v1797
    %v1799 = vpop.f32.mrf.mxu0
    %1800 = vdwg.mxu0
    %1801 = vmatpush.bf16.msra.mxu0 %v1358
    %1802 = vmatpush.bf16.msra.mxu0 %v1357
    %1803 = vmatpush.bf16.msra.mxu0 %v1356
    %1804 = vmatpush.bf16.msra.mxu0 %v1355
    %1805 = vmatpush.bf16.msra.mxu0 %v1354
    %1806 = vmatpush.bf16.msra.mxu0 %v1353
    %1807 = vmatpush.bf16.msra.mxu0 %v1352
    %1808 = vmatpush.bf16.msra.mxu0 %v1351
    %1809 = vmatmul.bf16.gmra.mxu0 %v437
    %v1810 = vpop.f32.mrf.mxu0
    %v1811 = vadd.f32 %v1798, %v1810
    %v1812 = vpop.f32.mrf.mxu0
    %1813 = vdwg.mxu0
    %1814 = vmatpush.bf16.msra.mxu0 %v1366
    %1815 = vmatpush.bf16.msra.mxu0 %v1365
    %1816 = vmatpush.bf16.msra.mxu0 %v1364
    %1817 = vmatpush.bf16.msra.mxu0 %v1363
    %1818 = vmatpush.bf16.msra.mxu0 %v1362
    %1819 = vmatpush.bf16.msra.mxu0 %v1361
    %1820 = vmatpush.bf16.msra.mxu0 %v1360
    %1821 = vmatpush.bf16.msra.mxu0 %v1359
    %1822 = vmatmul.bf16.gmra.mxu0 %v438
    %v1823 = vpop.f32.mrf.mxu0
    %v1824 = vadd.f32 %v1811, %v1823
    %v1825 = vpop.f32.mrf.mxu0
    %1826 = vdwg.mxu0
    %1827 = vmatpush.bf16.msra.mxu0 %v1374
    %1828 = vmatpush.bf16.msra.mxu0 %v1373
    %1829 = vmatpush.bf16.msra.mxu0 %v1372
    %1830 = vmatpush.bf16.msra.mxu0 %v1371
    %1831 = vmatpush.bf16.msra.mxu0 %v1370
    %1832 = vmatpush.bf16.msra.mxu0 %v1369
    %1833 = vmatpush.bf16.msra.mxu0 %v1368
    %1834 = vmatpush.bf16.msra.mxu0 %v1367
    %1835 = vmatmul.bf16.gmra.mxu0 %v439
    %v1836 = vpop.f32.mrf.mxu0
    %v1837 = vadd.f32 %v1824, %v1836
    %v1838 = vpop.f32.mrf.mxu0
    %1839 = vdwg.mxu0
    %1840 = vmatpush.bf16.msra.mxu0 %v1382
    %1841 = vmatpush.bf16.msra.mxu0 %v1381
    %1842 = vmatpush.bf16.msra.mxu0 %v1380
    %1843 = vmatpush.bf16.msra.mxu0 %v1379
    %1844 = vmatpush.bf16.msra.mxu0 %v1378
    %1845 = vmatpush.bf16.msra.mxu0 %v1377
    %1846 = vmatpush.bf16.msra.mxu0 %v1376
    %1847 = vmatpush.bf16.msra.mxu0 %v1375
    %1848 = vmatmul.bf16.gmra.mxu0 %v440
    %v1849 = vpop.f32.mrf.mxu0
    %v1850 = vadd.f32 %v1837, %v1849
    %v1851 = vpop.f32.mrf.mxu0
    %1852 = vdwg.mxu0
    %1853 = vmatpush.bf16.msra.mxu0 %v1390
    %1854 = vmatpush.bf16.msra.mxu0 %v1389
    %1855 = vmatpush.bf16.msra.mxu0 %v1388
    %1856 = vmatpush.bf16.msra.mxu0 %v1387
    %1857 = vmatpush.bf16.msra.mxu0 %v1386
    %1858 = vmatpush.bf16.msra.mxu0 %v1385
    %1859 = vmatpush.bf16.msra.mxu0 %v1384
    %1860 = vmatpush.bf16.msra.mxu0 %v1383
    %1861 = vmatmul.bf16.gmra.mxu0 %v441
    %v1862 = vpop.f32.mrf.mxu0
    %v1863 = vadd.f32 %v1850, %v1862
    %v1864 = vpop.f32.mrf.mxu0
    %1865 = vdwg.mxu0
    %1866 = vmatpush.bf16.msra.mxu0 %v1398
    %1867 = vmatpush.bf16.msra.mxu0 %v1397
    %1868 = vmatpush.bf16.msra.mxu0 %v1396
    %1869 = vmatpush.bf16.msra.mxu0 %v1395
    %1870 = vmatpush.bf16.msra.mxu0 %v1394
    %1871 = vmatpush.bf16.msra.mxu0 %v1393
    %1872 = vmatpush.bf16.msra.mxu0 %v1392
    %1873 = vmatpush.bf16.msra.mxu0 %v1391
    %1874 = vmatmul.bf16.gmra.mxu0 %v444
    %v1875 = vpop.f32.mrf.mxu0
    %v1876 = vadd.f32 %v1863, %v1875
    %v1877 = vpop.f32.mrf.mxu0
    %1878 = vdwg.mxu0
    %1879 = vmatpush.bf16.msra.mxu0 %v1406
    %1880 = vmatpush.bf16.msra.mxu0 %v1405
    %1881 = vmatpush.bf16.msra.mxu0 %v1404
    %1882 = vmatpush.bf16.msra.mxu0 %v1403
    %1883 = vmatpush.bf16.msra.mxu0 %v1402
    %1884 = vmatpush.bf16.msra.mxu0 %v1401
    %1885 = vmatpush.bf16.msra.mxu0 %v1400
    %1886 = vmatpush.bf16.msra.mxu0 %v1399
    %1887 = vmatmul.bf16.gmra.mxu0 %v445
    %v1888 = vpop.f32.mrf.mxu0
    %v1889 = vadd.f32 %v1876, %v1888
    %v1890 = vpop.f32.mrf.mxu0
    %1891 = vdwg.mxu0
    %1892 = vmatpush.bf16.msra.mxu0 %v1414
    %1893 = vmatpush.bf16.msra.mxu0 %v1413
    %1894 = vmatpush.bf16.msra.mxu0 %v1412
    %1895 = vmatpush.bf16.msra.mxu0 %v1411
    %1896 = vmatpush.bf16.msra.mxu0 %v1410
    %1897 = vmatpush.bf16.msra.mxu0 %v1409
    %1898 = vmatpush.bf16.msra.mxu0 %v1408
    %1899 = vmatpush.bf16.msra.mxu0 %v1407
    %1900 = vmatmul.bf16.gmra.mxu0 %v446
    %v1901 = vpop.f32.mrf.mxu0
    %v1902 = vadd.f32 %v1889, %v1901
    %v1903 = vpop.f32.mrf.mxu0
    %1904 = vdwg.mxu0
    %1905 = vmatpush.bf16.msra.mxu0 %v1422
    %1906 = vmatpush.bf16.msra.mxu0 %v1421
    %1907 = vmatpush.bf16.msra.mxu0 %v1420
    %1908 = vmatpush.bf16.msra.mxu0 %v1419
    %1909 = vmatpush.bf16.msra.mxu0 %v1418
    %1910 = vmatpush.bf16.msra.mxu0 %v1417
    %1911 = vmatpush.bf16.msra.mxu0 %v1416
    %1912 = vmatpush.bf16.msra.mxu0 %v1415
    %1913 = vmatmul.bf16.gmra.mxu0 %v447
    %v1914 = vpop.f32.mrf.mxu0
    %v1915 = vadd.f32 %v1902, %v1914
    %v1916 = vpop.f32.mrf.mxu0
    %1917 = vdwg.mxu0
    %1918 = vmatpush.bf16.msra.mxu0 %v1430
    %1919 = vmatpush.bf16.msra.mxu0 %v1429
    %1920 = vmatpush.bf16.msra.mxu0 %v1428
    %1921 = vmatpush.bf16.msra.mxu0 %v1427
    %1922 = vmatpush.bf16.msra.mxu0 %v1426
    %1923 = vmatpush.bf16.msra.mxu0 %v1425
    %1924 = vmatpush.bf16.msra.mxu0 %v1424
    %1925 = vmatpush.bf16.msra.mxu0 %v1423
    %1926 = vmatmul.bf16.gmra.mxu0 %v448
    %v1927 = vpop.f32.mrf.mxu0
    %v1928 = vadd.f32 %v1915, %v1927
    %v1929 = vpop.f32.mrf.mxu0
    %1930 = vdwg.mxu0
    %1931 = vmatpush.bf16.msra.mxu0 %v1438
    %1932 = vmatpush.bf16.msra.mxu0 %v1437
    %1933 = vmatpush.bf16.msra.mxu0 %v1436
    %1934 = vmatpush.bf16.msra.mxu0 %v1435
    %1935 = vmatpush.bf16.msra.mxu0 %v1434
    %1936 = vmatpush.bf16.msra.mxu0 %v1433
    %1937 = vmatpush.bf16.msra.mxu0 %v1432
    %1938 = vmatpush.bf16.msra.mxu0 %v1431
    %1939 = vmatmul.bf16.gmra.mxu0 %v449
    %v1940 = vpop.f32.mrf.mxu0
    %v1941 = vadd.f32 %v1928, %v1940
    %v1942 = vpop.f32.mrf.mxu0
    %1943 = vdwg.mxu0
    %1944 = vmatpush.bf16.msra.mxu0 %v1446
    %1945 = vmatpush.bf16.msra.mxu0 %v1445
    %1946 = vmatpush.bf16.msra.mxu0 %v1444
    %1947 = vmatpush.bf16.msra.mxu0 %v1443
    %1948 = vmatpush.bf16.msra.mxu0 %v1442
    %1949 = vmatpush.bf16.msra.mxu0 %v1441
    %1950 = vmatpush.bf16.msra.mxu0 %v1440
    %1951 = vmatpush.bf16.msra.mxu0 %v1439
    %1952 = vmatmul.bf16.gmra.mxu0 %v450
    %v1953 = vpop.f32.mrf.mxu0
    %v1954 = vadd.f32 %v1941, %v1953
    %v1955 = vpop.f32.mrf.mxu0
    %1956 = vdwg.mxu0
    %1957 = vmatpush.bf16.msra.mxu0 %v1454
    %1958 = vmatpush.bf16.msra.mxu0 %v1453
    %1959 = vmatpush.bf16.msra.mxu0 %v1452
    %1960 = vmatpush.bf16.msra.mxu0 %v1451
    %1961 = vmatpush.bf16.msra.mxu0 %v1450
    %1962 = vmatpush.bf16.msra.mxu0 %v1449
    %1963 = vmatpush.bf16.msra.mxu0 %v1448
    %1964 = vmatpush.bf16.msra.mxu0 %v1447
    %1965 = vmatmul.bf16.gmra.mxu0 %v451
    %v1966 = vpop.f32.mrf.mxu0
    %v1967 = vadd.f32 %v1954, %v1966
    %v1968 = vpop.f32.mrf.mxu0
    %1969 = vdwg.mxu0
    %1970 = vmatpush.bf16.msra.mxu0 0
    %1971 = vmatpush.bf16.msra.mxu0 0
    %1972 = vmatpush.bf16.msra.mxu0 0
    %1973 = vmatpush.bf16.msra.mxu0 0
    %1974 = vmatpush.bf16.msra.mxu0 %v1458
    %1975 = vmatpush.bf16.msra.mxu0 %v1457
    %1976 = vmatpush.bf16.msra.mxu0 %v1456
    %1977 = vmatpush.bf16.msra.mxu0 %v1455
    %1978 = vmatmul.bf16.gmra.mxu0 %v1656
    %v1979 = vpop.f32.mrf.mxu0
    %v1980 = vadd.f32 %v1967, %v1979
    %v1981 = vpop.f32.mrf.mxu0
    %1982 = vdwg.mxu0
    %v1983 = vmax.f32 %v1980, 0.0
    %v1984 = vpack.c.bf16 %v1983, %v1983
    %v1985 = vld [vmem:[%s3] sm:$0xf]
    %v1986 = vld [vmem:[%s3 + $0x4] sm:$0xf]
    %v1987 = vld [vmem:[%s3 + $0x8] sm:$0xf]
    %v1988 = vld [vmem:[%s3 + $0xc] sm:$0xf]
    %v1989 = vld [vmem:[%s3 + $0x10] sm:$0xf]
    %v1990 = vld [vmem:[%s3 + $0x14] sm:$0xf]
    %v1991 = vld [vmem:[%s3 + $0x18] sm:$0xf]
    %v1992 = vld [vmem:[%s3 + $0x1c] sm:$0xf]
    %v1993 = vld [vmem:[%s3 + $0x20] sm:$0xf]
    %v1994 = vld [vmem:[%s3 + $0x24] sm:$0xf]
    %v1995 = vld [vmem:[%s3 + $0x28] sm:$0xf]
    %v1996 = vld [vmem:[%s3 + $0x2c] sm:$0xf]
    %v1997 = vld [vmem:[%s3 + $0x30] sm:$0xf]
    %v1998 = vld [vmem:[%s3 + $0x34] sm:$0xf]
    %v1999 = vld [vmem:[%s3 + $0x38] sm:$0xf]
    %v2000 = vld [vmem:[%s3 + $0x3c] sm:$0xf]
    %v2001 = vld [vmem:[%s4] sm:$0x1]
    %v2003 = vperm.slane %v2001, 0
    %v2021 = vunpack.c.l.b16 %v1985
    %v2022 = vunpack.c.l.b16 %v1986
    %v2023 = vunpack.c.l.b16 %v1987
    %v2024 = vunpack.c.l.b16 %v1988
    %v2025 = vunpack.c.l.b16 %v1989
    %v2026 = vunpack.c.l.b16 %v1990
    %v2027 = vunpack.c.l.b16 %v1991
    %v2028 = vunpack.c.l.b16 %v1992
    %v2029 = vunpack.c.l.b16 %v1993
    %v2030 = vunpack.c.l.b16 %v1994
    %v2031 = vunpack.c.l.b16 %v1995
    %v2032 = vunpack.c.l.b16 %v1996
    %v2033 = vunpack.c.l.b16 %v1997
    %v2034 = vunpack.c.l.b16 %v1998
    %v2035 = vunpack.c.l.b16 %v1999
    %v2036 = vunpack.c.l.b16 %v2000
    %v2037 = vpack.c.b16 %v2022, %v2021
    %v2038 = vpack.c.b16 %v2024, %v2023
    %v2039 = vpack.c.b16 %v2026, %v2025
    %v2040 = vpack.c.b16 %v2028, %v2027
    %v2041 = vpack.c.b16 %v2030, %v2029
    %v2042 = vpack.c.b16 %v2032, %v2031
    %v2043 = vpack.c.b16 %v2034, %v2033
    %v2044 = vpack.c.b16 %v2036, %v2035
    %2053 = vmatpush.bf16.msra.mxu0 %v2044
    %2054 = vmatpush.bf16.msra.mxu0 %v2043
    %2055 = vmatpush.bf16.msra.mxu0 %v2042
    %2056 = vmatpush.bf16.msra.mxu0 %v2041
    %2057 = vmatpush.bf16.msra.mxu0 %v2040
    %2058 = vmatpush.bf16.msra.mxu0 %v2039
    %2059 = vmatpush.bf16.msra.mxu0 %v2038
    %2060 = vmatpush.bf16.msra.mxu0 %v2037
    %2061 = vmatmul.bf16.gmra.mxu0 %v1984
    %v2062 = vpop.f32.mrf.mxu0
    %v2063 = vadd.f32 %v2003, %v2062
    %v2064 = vpop.f32.mrf.mxu0
    %2065 = vdwg.mxu0
    %2066 = vst [vmem:[#allocation2] sm:$0x3] %v2063
    // Predicated region
    $region22: #{simple_cnn_forward.5} parent=1 // pred_check
      _
    $region23: #{simple_cnn_forward.5} parent=1 // pred_check_branch
      %2068 = sbr.rel (0) target = $region25
    $region24: #{simple_cnn_forward.5} parent=1 // pred_region
      %2070 = vsyncadd [#allocation3], 0
      %s2072 = sshll.u32 [#allocation2], 4
      %s2073 = int_to_ptr.vmem [resolvable:$true] %s2072
      %s2074 = sshll.u32 %s5, 4
      %s2075 = int_to_ptr.hbm [resolvable:$true] %s2074
      %2077 = dma.vmem_to_hbm [thread:$0]  %s2073, 32, %s2075, [#allocation3]
    $region25: #{simple_cnn_forward.5} parent=1 // pred_fallthru
      _
    // Predicated region
    $region26: #{simple_cnn_forward.5} parent=1 // pred_check
      _
    $region27: #{simple_cnn_forward.5} parent=1 // pred_check_branch
      %2079 = sbr.rel (0) target = $region29
    $region28: #{simple_cnn_forward.5} parent=1 // pred_region
      %2081 = dma.done [#allocation3], 32
    $region29: #{simple_cnn_forward.5} parent=1 // pred_fallthru
      _
    %2082 = vsyncpa [#allocation3], 1

</llo_original>
